<compile_context>
chip_gen: v7x
topology: tpu7x:2x2x1
jax: 0.10.0
libtpu: 0.0.40
codegen_flags: <defaults>
</compile_context>

<pallas_src>
import math
import functools

import jax
import jax.numpy as jnp
import numpy as np
from jax.experimental import pallas as pl
from jax.experimental.pallas import tpu as pltpu


# ----------------------------- activations ---------------------------------

def _log1p_poly_coeffs(deg: int = 9):
    """Near-minimax polynomial for log1p(u), u in [0,1], as a poly in t=2u-1.

    Chebyshev-node interpolation (host-side, float64); max error ~1e-8, far
    below the f32 noise floor of the surrounding computation.
    Returned highest-power-first for Horner evaluation.
    """
    k = np.arange(deg + 1)
    t = np.cos((2 * k + 1) * np.pi / (2 * (deg + 1)))   # Chebyshev nodes in (-1,1)
    u = 0.5 * (t + 1.0)                                  # mapped to (0,1)
    c = np.polyfit(t, np.log1p(u), deg)                  # highest power first
    return tuple(float(v) for v in c)


def act_factory(act, **kargs):
    """Exact (PyTorch-semantics) activation — used by the pure-JAX reference."""
    if act == 'leakyrelu':
        slope = kargs.get('negative_slope', 0.01)
        return lambda x: jnp.where(x >= 0, x, slope * x)
    elif act == 'relu':
        return lambda x: jnp.maximum(x, 0.0)
    elif act == 'softplus':
        beta = float(kargs.get('beta', 1.0))
        threshold = float(kargs.get('threshold', 20.0))
        inv_beta = 1.0 / beta

        def softplus(x):
            bx = beta * x
            return jnp.where(bx > threshold, x,
                             jnp.log1p(jnp.exp(jnp.minimum(bx, threshold))) * inv_beta)

        return softplus
    else:
        raise Exception('error act type:' + act)


def act_factory_kernel(act, **kargs):
    """Kernel activation.  softplus uses a single EUP exp + VPU polynomial."""
    if act in ('leakyrelu', 'relu'):
        return act_factory(act, **kargs)
    elif act == 'softplus':
        beta = float(kargs.get('beta', 1.0))
        threshold = float(kargs.get('threshold', 20.0))
        inv_beta = 1.0 / beta
        coeffs = _log1p_poly_coeffs(9)

        def softplus(x):
            bx = beta * x
            u = jnp.exp(-jnp.abs(bx))          # the ONLY EUP transcendental
            t = 2.0 * u - 1.0                  # poly variable in [-1, 1]
            p = coeffs[0]
            for c in coeffs[1:]:               # Horner on the (idle) VPU
                p = p * t + c
            sp = (jnp.maximum(bx, 0.0) + p) * inv_beta
            # PyTorch semantics: exactly linear above the threshold.
            return jnp.where(bx > threshold, x, sp)

        return softplus
    else:
        raise Exception('error act type:' + act)


# ------------------------------- kernel -------------------------------------

def _geo_skip_cmlp_kernel(x_ref, *refs,
                          lnum, skipc_layer_idx, acts, param_counts):
    """Transposed layout: x_ref is (in_dim, tile_n); out_ref is (out_dim, tile_n).

    refs = (flattened per-layer params ..., out_ref).
    Ordinary layer params: (W (out_ch, in_ch), b (out_ch, 1)).
    Skip layer params:     (W_z (out_ch, prev_o_chs), W_x (out_ch, in_dim),
                            b (out_ch, 1)).
    """
    out_ref = refs[-1]
    p_refs = refs[:-1]

    z = x_ref[...].astype(jnp.float32)               # (in_dim, tile_n), lane-dense
    idx = 0
    for i in range(lnum):
        n = param_counts[i]
        layer = p_refs[idx:idx + n]
        idx += n
        if skipc_layer_idx != -1 and i == skipc_layer_idx:
            w_z = layer[0][...].astype(jnp.float32)   # (out_ch, prev_o_chs)
            w_x = layer[1][...].astype(jnp.float32)   # (out_ch, in_dim)
            b = layer[2][...].astype(jnp.float32)     # (out_ch, 1)
            # Re-read x0 here instead of keeping it live since layer 0
            # (shrinks the vreg live set; the load is a couple of vregs).
            x0 = x_ref[...].astype(jnp.float32)
            # W @ cat([z, x0], 0)  ==  W_z @ z + W_x @ x0   (pre-split weights)
            y = (jnp.dot(w_z, z, preferred_element_type=jnp.float32)
                 + jnp.dot(w_x, x0, preferred_element_type=jnp.float32)
                 + b)
        else:
            w = layer[0][...].astype(jnp.float32)     # (out_ch, in_ch)
            b = layer[1][...].astype(jnp.float32)     # (out_ch, 1)
            y = jnp.dot(w, z, preferred_element_type=jnp.float32) + b
        act = acts[i]
        z = act(y) if act is not None else y          # f32 activations (all gens)

    out_ref[...] = z.astype(out_ref.dtype)            # lane-dense (out_dim, tile_n)


# ------------------------------- module -------------------------------------

class GeoSkipCMLP:
    def __init__(self, in_dim, coord_dim, out_dim, hidden_dim, lnum, act_type,
                 act_params, skipc_layer_idx, last_linear, use_wn, radius_init,
                 std, key):
        # TODO(synk): weight_norm (use_wn=True) path not implemented.
        assert not use_wn, "weight_norm not used in this synthetic config"
        self.in_dim = in_dim
        self.out_dim = out_dim
        self.lnum = lnum
        self.skipc_layer_idx = skipc_layer_idx
        self.last_linear = last_linear
        self.act_ref = act_factory(act_type, **act_params)          # exact
        self.act_kernel = act_factory_kernel(act_type, **act_params)  # 1-EUP
        self._fwd_cache = {}

        # layer_params[i] is (W, b) or, for the skip layer, (W_z, W_x, b).
        # Weights kept in PyTorch (out_ch, in_ch) order; biases (out_ch, 1).
        self.layer_params = []
        self.prev_o_chs = None

        keys = jax.random.split(key, lnum)
        for i in range(lnum):
            isfirst = i == 0
            islast = i == lnum - 1
            if isfirst:
                in_ch, out_ch = in_dim, hidden_dim
            elif islast:
                in_ch, out_ch = hidden_dim, out_dim
            else:
                in_ch, out_ch = hidden_dim, hidden_dim
            if skipc_layer_idx != -1 and i == skipc_layer_idx - 1:
                out_ch = hidden_dim - in_dim
                assert out_ch > 0
                self.prev_o_chs = out_ch

            if isfirst:
                w = jax.random.normal(keys[i], (out_ch, in_ch), jnp.float32) \
                    * (math.sqrt(2.0) / math.sqrt(out_ch))
                w = w.at[:, coord_dim:].set(0.0)
                b = jnp.zeros((out_ch,), jnp.float32)
            elif i == skipc_layer_idx and skipc_layer_idx != -1:
                w = jax.random.normal(keys[i], (out_ch, in_ch), jnp.float32) \
                    * (math.sqrt(2.0) / math.sqrt(out_ch))
                assert self.prev_o_chs is not None
                w = w.at[:, self.prev_o_chs + coord_dim:].set(0.0)
                b = jnp.zeros((out_ch,), jnp.float32)
            elif islast:
                w = (math.sqrt(math.pi) / math.sqrt(in_ch)) \
                    + std * jax.random.normal(keys[i], (out_ch, in_ch), jnp.float32)
                b = jnp.full((out_ch,), -radius_init, jnp.float32)
            else:
                w = jax.random.normal(keys[i], (out_ch, in_ch), jnp.float32) \
                    * (math.sqrt(2.0) / math.sqrt(out_ch))
                b = jnp.zeros((out_ch,), jnp.float32)

            b2 = jnp.asarray(b)[:, None]                       # (out_ch, 1)
            if skipc_layer_idx != -1 and i == skipc_layer_idx:
                # Pre-split the skip weight: tile-aligned operands, no in-kernel
                # slice at the unaligned sublane offset prev_o_chs.
                w_z = jnp.asarray(w[:, :self.prev_o_chs])      # (out_ch, prev_o_chs)
                w_x = jnp.asarray(w[:, self.prev_o_chs:])      # (out_ch, in_dim)
                self.layer_params.append((w_z, w_x, b2))
            else:
                self.layer_params.append((jnp.asarray(w), b2))

    # ------------------------- Pallas forward -------------------------------
    def _build_forward(self, N, tile_n, dtype, x_transposed):
        in_dim, out_dim, lnum = self.in_dim, self.out_dim, self.lnum

        acts = tuple(
            None if (self.last_linear and i == lnum - 1) else self.act_kernel
            for i in range(lnum)
        )
        param_counts = tuple(len(p) for p in self.layer_params)

        kernel = functools.partial(
            _geo_skip_cmlp_kernel,
            lnum=lnum,
            skipc_layer_idx=self.skipc_layer_idx,
            acts=acts,
            param_counts=param_counts,
        )

        # Points on the lane axis; all (tiny) weights/biases resident per step.
        in_specs = [pl.BlockSpec((in_dim, tile_n), lambda i: (0, i))]
        for params in self.layer_params:
            for p in params:
                in_specs.append(pl.BlockSpec(p.shape, lambda i: (0, 0)))

        pc = pl.pallas_call(
            kernel,
            out_shape=jax.ShapeDtypeStruct((out_dim, N), dtype),
            grid_spec=pltpu.PrefetchScalarGridSpec(
                num_scalar_prefetch=0,
                grid=(N // tile_n,),
                in_specs=in_specs,
                out_specs=pl.BlockSpec((out_dim, tile_n), lambda i: (0, i)),
            ),
            compiler_params=pltpu.CompilerParams(
                dimension_semantics=("parallel",),     # shards over v7x's 2 TCs
                vmem_limit_bytes=32 * 1024 * 1024,     # fits all generations
            ),
        )

        def forward(x, *flat_params):
            xT = x if x_transposed else x.T            # (in_dim, N); 64 KB R+W
            outT = pc(xT, *flat_params)                # lane-dense (out_dim, N)
            if out_dim == 1:
                return outT.reshape(N, 1)              # row-major bitcast, no copy
            return outT.T                              # tiny (N*out_dim elements)

        return jax.jit(forward)

    def __call__(self, x, *, tile_n=512, x_transposed=False):
        if x_transposed:
            in_dim, N = x.shape
        else:
            N, in_dim = x.shape
        assert in_dim == self.in_dim
        tile_n = min(tile_n, N)
        assert tile_n % 128 == 0, "tile_n must be a multiple of 128"
        # TODO(synk): pad / mask the last tile for ragged N in production.
        assert N % tile_n == 0, "N must be a multiple of tile_n for this demo"

        key = (N, tile_n, jnp.dtype(x.dtype), bool(x_transposed))
        if key not in self._fwd_cache:
            self._fwd_cache[key] = self._build_forward(N, tile_n, x.dtype,
                                                       x_transposed)
        flat = [p for params in self.layer_params for p in params]
        return self._fwd_cache[key](x, *flat)

    # --------------------------- pure-JAX ref --------------------------------
    def reference(self, x):
        x0 = x.astype(jnp.float32)
        z = x0
        for i in range(self.lnum):
            params = self.layer_params[i]
            if self.skipc_layer_idx != -1 and i == self.skipc_layer_idx:
                w_z, w_x, b = params
                w = jnp.concatenate([w_z, w_x], axis=1)
                z = jnp.concatenate([z, x0], axis=-1)
            else:
                w, b = params
            z = z @ w.T + b[:, 0]
            if not (self.last_linear and i == self.lnum - 1):
                z = self.act_ref(z)               # exact softplus (PyTorch semantics)
        return z.astype(x.dtype)


# --------------------------------- main --------------------------------------

if __name__ == "__main__":
    key = jax.random.PRNGKey(0)
    k_param, k_x = jax.random.split(key)

    in_dim, coord_dim, out_dim, hidden_dim = 4, 3, 1, 32
    lnum, skipc_layer_idx = 4, 2

    model = GeoSkipCMLP(
        in_dim=in_dim, coord_dim=coord_dim, out_dim=out_dim,
        hidden_dim=hidden_dim, lnum=lnum,
        act_type='softplus', act_params={'beta': 100.0},
        skipc_layer_idx=skipc_layer_idx, last_linear=True, use_wn=False,
        radius_init=0.5, std=1e-4, key=k_param,
    )

    N = 4096                      # grid of 8 at tile_n=512 -> 4 steps per TC on v7x
    x = jax.random.normal(k_x, (N, in_dim), jnp.float32)

    out = model(x, tile_n=512)
    out = jax.block_until_ready(out)

    ref = model.reference(x)
    np.testing.assert_allclose(np.asarray(out), np.asarray(ref),
                               rtol=1e-5, atol=1e-5)
    assert out.shape == (N, out_dim)
    print("KERNEL_OK")
</pallas_src>

<mosaic_0001>
module attributes {stable_mosaic.version = 11 : i64} {
  func.func @_geo_skip_cmlp_kernel(%arg0: i32, %arg1: memref<4x512xf32, #tpu.memory_space<vmem>>, %arg2: memref<32x4xf32, #tpu.memory_space<vmem>>, %arg3: memref<32x1xf32, #tpu.memory_space<vmem>>, %arg4: memref<28x32xf32, #tpu.memory_space<vmem>>, %arg5: memref<28x1xf32, #tpu.memory_space<vmem>>, %arg6: memref<32x28xf32, #tpu.memory_space<vmem>>, %arg7: memref<32x4xf32, #tpu.memory_space<vmem>>, %arg8: memref<32x1xf32, #tpu.memory_space<vmem>>, %arg9: memref<1x32xf32, #tpu.memory_space<vmem>>, %arg10: memref<1x1xf32, #tpu.memory_space<vmem>>, %arg11: memref<1x512xf32, #tpu.memory_space<vmem>>) attributes {dimension_semantics = [#tpu.dimension_semantics<parallel>], iteration_bounds = array<i64: 8>, scalar_prefetch = 0 : i64, scratch_operands = 0 : i64, tpu.core_type = #tpu.core_type<tc>, window_params = [{transform_indices = @transform_0, window_bounds = array<i64: 4, 512>}, {pipeline_mode = #tpu.pipeline_mode<synchronous>, transform_indices = @transform_1, window_bounds = array<i64: 32, 4>}, {pipeline_mode = #tpu.pipeline_mode<synchronous>, transform_indices = @transform_2, window_bounds = array<i64: 32, 1>}, {pipeline_mode = #tpu.pipeline_mode<synchronous>, transform_indices = @transform_3, window_bounds = array<i64: 28, 32>}, {pipeline_mode = #tpu.pipeline_mode<synchronous>, transform_indices = @transform_4, window_bounds = array<i64: 28, 1>}, {pipeline_mode = #tpu.pipeline_mode<synchronous>, transform_indices = @transform_5, window_bounds = array<i64: 32, 28>}, {pipeline_mode = #tpu.pipeline_mode<synchronous>, transform_indices = @transform_6, window_bounds = array<i64: 32, 4>}, {pipeline_mode = #tpu.pipeline_mode<synchronous>, transform_indices = @transform_7, window_bounds = array<i64: 32, 1>}, {pipeline_mode = #tpu.pipeline_mode<synchronous>, transform_indices = @transform_8, window_bounds = array<i64: 1, 32>}, {pipeline_mode = #tpu.pipeline_mode<synchronous>, transform_indices = @transform_9, window_bounds = array<i64: 1, 1>}, {transform_indices = @transform_10, window_bounds = array<i64: 1, 512>}]} {
    %c0 = arith.constant 0 : index
    %c0_0 = arith.constant 0 : index
    %0 = vector.load %arg1[%c0, %c0_0] : memref<4x512xf32, #tpu.memory_space<vmem>>, vector<4x512xf32>
    %c0_1 = arith.constant 0 : index
    %c0_2 = arith.constant 0 : index
    %1 = vector.load %arg2[%c0_1, %c0_2] : memref<32x4xf32, #tpu.memory_space<vmem>>, vector<32x4xf32>
    %c0_3 = arith.constant 0 : index
    %c0_4 = arith.constant 0 : index
    %2 = vector.load %arg3[%c0_3, %c0_4] : memref<32x1xf32, #tpu.memory_space<vmem>>, vector<32x1xf32>
    %cst = arith.constant dense<0.000000e+00> : vector<32x512xf32>
    %3 = tpu.matmul %1, %0, %cst {dimension_numbers = #tpu.dot_dimension_numbers<[1], [0], [0], [1], [0, 0, 1, 1], [], []>} : vector<32x4xf32>, vector<4x512xf32>, vector<32x512xf32> -> vector<32x512xf32>
    %4 = vector.broadcast %2 : vector<32x1xf32> to vector<32x512xf32>
    %5 = arith.addf %3, %4 : vector<32x512xf32>
    %cst_5 = arith.constant 1.000000e+02 : f32
    %6 = vector.broadcast %cst_5 : f32 to vector<32x512xf32>
    %7 = arith.mulf %6, %5 : vector<32x512xf32>
    %8 = math.absf %7 : vector<32x512xf32>
    %cst_6 = arith.constant 0.000000e+00 : f32
    %9 = vector.broadcast %cst_6 : f32 to vector<32x512xf32>
    %10 = arith.subf %9, %8 : vector<32x512xf32>
    %11 = math.exp %10 : vector<32x512xf32>
    %cst_7 = arith.constant 2.000000e+00 : f32
    %12 = vector.broadcast %cst_7 : f32 to vector<32x512xf32>
    %13 = arith.mulf %12, %11 : vector<32x512xf32>
    %cst_8 = arith.constant 1.000000e+00 : f32
    %14 = vector.broadcast %cst_8 : f32 to vector<32x512xf32>
    %15 = arith.subf %13, %14 : vector<32x512xf32>
    %cst_9 = arith.constant 7.15281658E-6 : f32
    %16 = vector.broadcast %cst_9 : f32 to vector<32x512xf32>
    %17 = arith.mulf %16, %15 : vector<32x512xf32>
    %cst_10 = arith.constant -2.40153022E-5 : f32
    %18 = vector.broadcast %cst_10 : f32 to vector<32x512xf32>
    %19 = arith.addf %17, %18 : vector<32x512xf32>
    %20 = arith.mulf %19, %15 : vector<32x512xf32>
    %cst_11 = arith.constant 6.39349746E-5 : f32
    %21 = vector.broadcast %cst_11 : f32 to vector<32x512xf32>
    %22 = arith.addf %20, %21 : vector<32x512xf32>
    %23 = arith.mulf %22, %15 : vector<32x512xf32>
    %cst_12 = arith.constant -2.24064264E-4 : f32
    %24 = vector.broadcast %cst_12 : f32 to vector<32x512xf32>
    %25 = arith.addf %23, %24 : vector<32x512xf32>
    %26 = arith.mulf %25, %15 : vector<32x512xf32>
    %cst_13 = arith.constant 8.23551323E-4 : f32
    %27 = vector.broadcast %cst_13 : f32 to vector<32x512xf32>
    %28 = arith.addf %26, %27 : vector<32x512xf32>
    %29 = arith.mulf %28, %15 : vector<32x512xf32>
    %cst_14 = arith.constant -0.00308808382 : f32
    %30 = vector.broadcast %cst_14 : f32 to vector<32x512xf32>
    %31 = arith.addf %29, %30 : vector<32x512xf32>
    %32 = arith.mulf %31, %15 : vector<32x512xf32>
    %cst_15 = arith.constant 0.0123456148 : f32
    %33 = vector.broadcast %cst_15 : f32 to vector<32x512xf32>
    %34 = arith.addf %32, %33 : vector<32x512xf32>
    %35 = arith.mulf %34, %15 : vector<32x512xf32>
    %cst_16 = arith.constant -0.0555553436 : f32
    %36 = vector.broadcast %cst_16 : f32 to vector<32x512xf32>
    %37 = arith.addf %35, %36 : vector<32x512xf32>
    %38 = arith.mulf %37, %15 : vector<32x512xf32>
    %cst_17 = arith.constant 0.333333343 : f32
    %39 = vector.broadcast %cst_17 : f32 to vector<32x512xf32>
    %40 = arith.addf %38, %39 : vector<32x512xf32>
    %41 = arith.mulf %40, %15 : vector<32x512xf32>
    %cst_18 = arith.constant 0.405465096 : f32
    %42 = vector.broadcast %cst_18 : f32 to vector<32x512xf32>
    %43 = arith.addf %41, %42 : vector<32x512xf32>
    %cst_19 = arith.constant 0.000000e+00 : f32
    %44 = vector.broadcast %cst_19 : f32 to vector<32x512xf32>
    %45 = arith.maximumf %7, %44 : vector<32x512xf32>
    %46 = arith.addf %45, %43 : vector<32x512xf32>
    %cst_20 = arith.constant 0.00999999977 : f32
    %47 = vector.broadcast %cst_20 : f32 to vector<32x512xf32>
    %48 = arith.mulf %46, %47 : vector<32x512xf32>
    %cst_21 = arith.constant 2.000000e+01 : f32
    %49 = vector.broadcast %cst_21 : f32 to vector<32x512xf32>
    %50 = arith.cmpf ogt, %7, %49 : vector<32x512xf32>
    %51 = arith.select %50, %5, %48 : vector<32x512xi1>, vector<32x512xf32>
    %c0_22 = arith.constant 0 : index
    %c0_23 = arith.constant 0 : index
    %52 = vector.load %arg4[%c0_22, %c0_23] : memref<28x32xf32, #tpu.memory_space<vmem>>, vector<28x32xf32>
    %c0_24 = arith.constant 0 : index
    %c0_25 = arith.constant 0 : index
    %53 = vector.load %arg5[%c0_24, %c0_25] : memref<28x1xf32, #tpu.memory_space<vmem>>, vector<28x1xf32>
    %cst_26 = arith.constant dense<0.000000e+00> : vector<28x512xf32>
    %54 = tpu.matmul %52, %51, %cst_26 {dimension_numbers = #tpu.dot_dimension_numbers<[1], [0], [0], [1], [0, 0, 1, 1], [], []>} : vector<28x32xf32>, vector<32x512xf32>, vector<28x512xf32> -> vector<28x512xf32>
    %55 = vector.broadcast %53 : vector<28x1xf32> to vector<28x512xf32>
    %56 = arith.addf %54, %55 : vector<28x512xf32>
    %cst_27 = arith.constant 1.000000e+02 : f32
    %57 = vector.broadcast %cst_27 : f32 to vector<28x512xf32>
    %58 = arith.mulf %57, %56 : vector<28x512xf32>
    %59 = math.absf %58 : vector<28x512xf32>
    %cst_28 = arith.constant 0.000000e+00 : f32
    %60 = vector.broadcast %cst_28 : f32 to vector<28x512xf32>
    %61 = arith.subf %60, %59 : vector<28x512xf32>
    %62 = math.exp %61 : vector<28x512xf32>
    %cst_29 = arith.constant 2.000000e+00 : f32
    %63 = vector.broadcast %cst_29 : f32 to vector<28x512xf32>
    %64 = arith.mulf %63, %62 : vector<28x512xf32>
    %cst_30 = arith.constant 1.000000e+00 : f32
    %65 = vector.broadcast %cst_30 : f32 to vector<28x512xf32>
    %66 = arith.subf %64, %65 : vector<28x512xf32>
    %cst_31 = arith.constant 7.15281658E-6 : f32
    %67 = vector.broadcast %cst_31 : f32 to vector<28x512xf32>
    %68 = arith.mulf %67, %66 : vector<28x512xf32>
    %cst_32 = arith.constant -2.40153022E-5 : f32
    %69 = vector.broadcast %cst_32 : f32 to vector<28x512xf32>
    %70 = arith.addf %68, %69 : vector<28x512xf32>
    %71 = arith.mulf %70, %66 : vector<28x512xf32>
    %cst_33 = arith.constant 6.39349746E-5 : f32
    %72 = vector.broadcast %cst_33 : f32 to vector<28x512xf32>
    %73 = arith.addf %71, %72 : vector<28x512xf32>
    %74 = arith.mulf %73, %66 : vector<28x512xf32>
    %cst_34 = arith.constant -2.24064264E-4 : f32
    %75 = vector.broadcast %cst_34 : f32 to vector<28x512xf32>
    %76 = arith.addf %74, %75 : vector<28x512xf32>
    %77 = arith.mulf %76, %66 : vector<28x512xf32>
    %cst_35 = arith.constant 8.23551323E-4 : f32
    %78 = vector.broadcast %cst_35 : f32 to vector<28x512xf32>
    %79 = arith.addf %77, %78 : vector<28x512xf32>
    %80 = arith.mulf %79, %66 : vector<28x512xf32>
    %cst_36 = arith.constant -0.00308808382 : f32
    %81 = vector.broadcast %cst_36 : f32 to vector<28x512xf32>
    %82 = arith.addf %80, %81 : vector<28x512xf32>
    %83 = arith.mulf %82, %66 : vector<28x512xf32>
    %cst_37 = arith.constant 0.0123456148 : f32
    %84 = vector.broadcast %cst_37 : f32 to vector<28x512xf32>
    %85 = arith.addf %83, %84 : vector<28x512xf32>
    %86 = arith.mulf %85, %66 : vector<28x512xf32>
    %cst_38 = arith.constant -0.0555553436 : f32
    %87 = vector.broadcast %cst_38 : f32 to vector<28x512xf32>
    %88 = arith.addf %86, %87 : vector<28x512xf32>
    %89 = arith.mulf %88, %66 : vector<28x512xf32>
    %cst_39 = arith.constant 0.333333343 : f32
    %90 = vector.broadcast %cst_39 : f32 to vector<28x512xf32>
    %91 = arith.addf %89, %90 : vector<28x512xf32>
    %92 = arith.mulf %91, %66 : vector<28x512xf32>
    %cst_40 = arith.constant 0.405465096 : f32
    %93 = vector.broadcast %cst_40 : f32 to vector<28x512xf32>
    %94 = arith.addf %92, %93 : vector<28x512xf32>
    %cst_41 = arith.constant 0.000000e+00 : f32
    %95 = vector.broadcast %cst_41 : f32 to vector<28x512xf32>
    %96 = arith.maximumf %58, %95 : vector<28x512xf32>
    %97 = arith.addf %96, %94 : vector<28x512xf32>
    %cst_42 = arith.constant 0.00999999977 : f32
    %98 = vector.broadcast %cst_42 : f32 to vector<28x512xf32>
    %99 = arith.mulf %97, %98 : vector<28x512xf32>
    %cst_43 = arith.constant 2.000000e+01 : f32
    %100 = vector.broadcast %cst_43 : f32 to vector<28x512xf32>
    %101 = arith.cmpf ogt, %58, %100 : vector<28x512xf32>
    %102 = arith.select %101, %56, %99 : vector<28x512xi1>, vector<28x512xf32>
    %c0_44 = arith.constant 0 : index
    %c0_45 = arith.constant 0 : index
    %103 = vector.load %arg6[%c0_44, %c0_45] : memref<32x28xf32, #tpu.memory_space<vmem>>, vector<32x28xf32>
    %c0_46 = arith.constant 0 : index
    %c0_47 = arith.constant 0 : index
    %104 = vector.load %arg7[%c0_46, %c0_47] : memref<32x4xf32, #tpu.memory_space<vmem>>, vector<32x4xf32>
    %c0_48 = arith.constant 0 : index
    %c0_49 = arith.constant 0 : index
    %105 = vector.load %arg8[%c0_48, %c0_49] : memref<32x1xf32, #tpu.memory_space<vmem>>, vector<32x1xf32>
    %c0_50 = arith.constant 0 : index
    %c0_51 = arith.constant 0 : index
    %106 = vector.load %arg1[%c0_50, %c0_51] : memref<4x512xf32, #tpu.memory_space<vmem>>, vector<4x512xf32>
    %cst_52 = arith.constant dense<0.000000e+00> : vector<32x512xf32>
    %107 = tpu.matmul %103, %102, %cst_52 {dimension_numbers = #tpu.dot_dimension_numbers<[1], [0], [0], [1], [0, 0, 1, 1], [], []>} : vector<32x28xf32>, vector<28x512xf32>, vector<32x512xf32> -> vector<32x512xf32>
    %cst_53 = arith.constant dense<0.000000e+00> : vector<32x512xf32>
    %108 = tpu.matmul %104, %106, %cst_53 {dimension_numbers = #tpu.dot_dimension_numbers<[1], [0], [0], [1], [0, 0, 1, 1], [], []>} : vector<32x4xf32>, vector<4x512xf32>, vector<32x512xf32> -> vector<32x512xf32>
    %109 = arith.addf %107, %108 : vector<32x512xf32>
    %110 = vector.broadcast %105 : vector<32x1xf32> to vector<32x512xf32>
    %111 = arith.addf %109, %110 : vector<32x512xf32>
    %cst_54 = arith.constant 1.000000e+02 : f32
    %112 = vector.broadcast %cst_54 : f32 to vector<32x512xf32>
    %113 = arith.mulf %112, %111 : vector<32x512xf32>
    %114 = math.absf %113 : vector<32x512xf32>
    %cst_55 = arith.constant 0.000000e+00 : f32
    %115 = vector.broadcast %cst_55 : f32 to vector<32x512xf32>
    %116 = arith.subf %115, %114 : vector<32x512xf32>
    %117 = math.exp %116 : vector<32x512xf32>
    %cst_56 = arith.constant 2.000000e+00 : f32
    %118 = vector.broadcast %cst_56 : f32 to vector<32x512xf32>
    %119 = arith.mulf %118, %117 : vector<32x512xf32>
    %cst_57 = arith.constant 1.000000e+00 : f32
    %120 = vector.broadcast %cst_57 : f32 to vector<32x512xf32>
    %121 = arith.subf %119, %120 : vector<32x512xf32>
    %cst_58 = arith.constant 7.15281658E-6 : f32
    %122 = vector.broadcast %cst_58 : f32 to vector<32x512xf32>
    %123 = arith.mulf %122, %121 : vector<32x512xf32>
    %cst_59 = arith.constant -2.40153022E-5 : f32
    %124 = vector.broadcast %cst_59 : f32 to vector<32x512xf32>
    %125 = arith.addf %123, %124 : vector<32x512xf32>
    %126 = arith.mulf %125, %121 : vector<32x512xf32>
    %cst_60 = arith.constant 6.39349746E-5 : f32
    %127 = vector.broadcast %cst_60 : f32 to vector<32x512xf32>
    %128 = arith.addf %126, %127 : vector<32x512xf32>
    %129 = arith.mulf %128, %121 : vector<32x512xf32>
    %cst_61 = arith.constant -2.24064264E-4 : f32
    %130 = vector.broadcast %cst_61 : f32 to vector<32x512xf32>
    %131 = arith.addf %129, %130 : vector<32x512xf32>
    %132 = arith.mulf %131, %121 : vector<32x512xf32>
    %cst_62 = arith.constant 8.23551323E-4 : f32
    %133 = vector.broadcast %cst_62 : f32 to vector<32x512xf32>
    %134 = arith.addf %132, %133 : vector<32x512xf32>
    %135 = arith.mulf %134, %121 : vector<32x512xf32>
    %cst_63 = arith.constant -0.00308808382 : f32
    %136 = vector.broadcast %cst_63 : f32 to vector<32x512xf32>
    %137 = arith.addf %135, %136 : vector<32x512xf32>
    %138 = arith.mulf %137, %121 : vector<32x512xf32>
    %cst_64 = arith.constant 0.0123456148 : f32
    %139 = vector.broadcast %cst_64 : f32 to vector<32x512xf32>
    %140 = arith.addf %138, %139 : vector<32x512xf32>
    %141 = arith.mulf %140, %121 : vector<32x512xf32>
    %cst_65 = arith.constant -0.0555553436 : f32
    %142 = vector.broadcast %cst_65 : f32 to vector<32x512xf32>
    %143 = arith.addf %141, %142 : vector<32x512xf32>
    %144 = arith.mulf %143, %121 : vector<32x512xf32>
    %cst_66 = arith.constant 0.333333343 : f32
    %145 = vector.broadcast %cst_66 : f32 to vector<32x512xf32>
    %146 = arith.addf %144, %145 : vector<32x512xf32>
    %147 = arith.mulf %146, %121 : vector<32x512xf32>
    %cst_67 = arith.constant 0.405465096 : f32
    %148 = vector.broadcast %cst_67 : f32 to vector<32x512xf32>
    %149 = arith.addf %147, %148 : vector<32x512xf32>
    %cst_68 = arith.constant 0.000000e+00 : f32
    %150 = vector.broadcast %cst_68 : f32 to vector<32x512xf32>
    %151 = arith.maximumf %113, %150 : vector<32x512xf32>
    %152 = arith.addf %151, %149 : vector<32x512xf32>
    %cst_69 = arith.constant 0.00999999977 : f32
    %153 = vector.broadcast %cst_69 : f32 to vector<32x512xf32>
    %154 = arith.mulf %152, %153 : vector<32x512xf32>
    %cst_70 = arith.constant 2.000000e+01 : f32
    %155 = vector.broadcast %cst_70 : f32 to vector<32x512xf32>
    %156 = arith.cmpf ogt, %113, %155 : vector<32x512xf32>
    %157 = arith.select %156, %111, %154 : vector<32x512xi1>, vector<32x512xf32>
    %c0_71 = arith.constant 0 : index
    %c0_72 = arith.constant 0 : index
    %158 = vector.load %arg9[%c0_71, %c0_72] : memref<1x32xf32, #tpu.memory_space<vmem>>, vector<1x32xf32>
    %c0_73 = arith.constant 0 : index
    %c0_74 = arith.constant 0 : index
    %159 = vector.load %arg10[%c0_73, %c0_74] : memref<1x1xf32, #tpu.memory_space<vmem>>, vector<1x1xf32>
    %cst_75 = arith.constant dense<0.000000e+00> : vector<1x512xf32>
    %160 = tpu.matmul %158, %157, %cst_75 {dimension_numbers = #tpu.dot_dimension_numbers<[1], [0], [0], [1], [0, 0, 1, 1], [], []>} : vector<1x32xf32>, vector<32x512xf32>, vector<1x512xf32> -> vector<1x512xf32>
    %161 = vector.broadcast %159 : vector<1x1xf32> to vector<1x512xf32>
    %162 = arith.addf %160, %161 : vector<1x512xf32>
    %c0_76 = arith.constant 0 : index
    %c0_77 = arith.constant 0 : index
    %163 = vector.load %arg11[%c0_76, %c0_77] : memref<1x512xf32, #tpu.memory_space<vmem>>, vector<1x512xf32>
    tpu.vector_store %arg11[%c0_76, %c0_77], %162 {strides = array<i32>} : memref<1x512xf32, #tpu.memory_space<vmem>>, vector<1x512xf32>,
    return
  }
  func.func @transform_0(%arg0: i32) -> (i32, i32) {
    %c0_i32 = arith.constant 0 : i32
    %c0_i32_0 = arith.constant 0 : i32
    return %c0_i32, %arg0 : i32, i32
  }
  func.func @transform_1(%arg0: i32) -> (i32, i32) {
    %c0_i32 = arith.constant 0 : i32
    %c0_i32_0 = arith.constant 0 : i32
    %c0_i32_1 = arith.constant 0 : i32
    return %c0_i32, %c0_i32_0 : i32, i32
  }
  func.func @transform_2(%arg0: i32) -> (i32, i32) {
    %c0_i32 = arith.constant 0 : i32
    %c0_i32_0 = arith.constant 0 : i32
    %c0_i32_1 = arith.constant 0 : i32
    return %c0_i32, %c0_i32_0 : i32, i32
  }
  func.func @transform_3(%arg0: i32) -> (i32, i32) {
    %c0_i32 = arith.constant 0 : i32
    %c0_i32_0 = arith.constant 0 : i32
    %c0_i32_1 = arith.constant 0 : i32
    return %c0_i32, %c0_i32_0 : i32, i32
  }
  func.func @transform_4(%arg0: i32) -> (i32, i32) {
    %c0_i32 = arith.constant 0 : i32
    %c0_i32_0 = arith.constant 0 : i32
    %c0_i32_1 = arith.constant 0 : i32
    return %c0_i32, %c0_i32_0 : i32, i32
  }
  func.func @transform_5(%arg0: i32) -> (i32, i32) {
    %c0_i32 = arith.constant 0 : i32
    %c0_i32_0 = arith.constant 0 : i32
    %c0_i32_1 = arith.constant 0 : i32
    return %c0_i32, %c0_i32_0 : i32, i32
  }
  func.func @transform_6(%arg0: i32) -> (i32, i32) {
    %c0_i32 = arith.constant 0 : i32
    %c0_i32_0 = arith.constant 0 : i32
    %c0_i32_1 = arith.constant 0 : i32
    return %c0_i32, %c0_i32_0 : i32, i32
  }
  func.func @transform_7(%arg0: i32) -> (i32, i32) {
    %c0_i32 = arith.constant 0 : i32
    %c0_i32_0 = arith.constant 0 : i32
    %c0_i32_1 = arith.constant 0 : i32
    return %c0_i32, %c0_i32_0 : i32, i32
  }
  func.func @transform_8(%arg0: i32) -> (i32, i32) {
    %c0_i32 = arith.constant 0 : i32
    %c0_i32_0 = arith.constant 0 : i32
    %c0_i32_1 = arith.constant 0 : i32
    return %c0_i32, %c0_i32_0 : i32, i32
  }
  func.func @transform_9(%arg0: i32) -> (i32, i32) {
    %c0_i32 = arith.constant 0 : i32
    %c0_i32_0 = arith.constant 0 : i32
    %c0_i32_1 = arith.constant 0 : i32
    return %c0_i32, %c0_i32_0 : i32, i32
  }
  func.func @transform_10(%arg0: i32) -> (i32, i32) {
    %c0_i32 = arith.constant 0 : i32
    %c0_i32_0 = arith.constant 0 : i32
    return %c0_i32, %arg0 : i32, i32
  }
}

</mosaic_0001>

<llo_original>
// kernel: forward.1
$region0: #{forward.1}
  #allocation0 [shape = 'u32[]', space=smem, size = 0x4, offset = 0x4, fixed_abs, tag = 'smem constant byte address 0x4 - core index']
  #allocation1 [shape = 'u32[144,128]{1,0:T(1,128)}', space=vmem, size = 0x12000, scoped, tag = 'internal scratch']
  #allocation2 [shape = 'f32[1,1]{1,0:T(1,128)S(1)}', space=vmem, size = 0x200, scoped, tag = 'scoped memory for forward.1']
  %s0 = inlined_call_operand.vmem [shape: f32[4,4096], index: 0, kind: input, shape index: {}]
  %s1 = inlined_call_operand.vmem [shape: f32[32,4], index: 1, kind: input, shape index: {}]
  %s2 = inlined_call_operand.vmem [shape: f32[32,1], index: 2, kind: input, shape index: {}]
  %s3 = inlined_call_operand.vmem [shape: f32[28,32], index: 3, kind: input, shape index: {}]
  %s4 = inlined_call_operand.vmem [shape: f32[28,1], index: 4, kind: input, shape index: {}]
  %s5 = inlined_call_operand.vmem [shape: f32[32,28], index: 5, kind: input, shape index: {}]
  %s6 = inlined_call_operand.vmem [shape: f32[32,4], index: 6, kind: input, shape index: {}]
  %s7 = inlined_call_operand.vmem [shape: f32[32,1], index: 7, kind: input, shape index: {}]
  %s8 = inlined_call_operand.vmem [shape: f32[1,32], index: 8, kind: input, shape index: {}]
  %s9 = inlined_call_operand.<no memory space> [shape: f32[1,1], index: 9, kind: input, shape index: {}]
  %s10 = inlined_call_operand.hbm [shape: f32[1,4096], index: 10, kind: output, shape index: {}]
  %s11 = sld [smem:[#allocation0]]
  $region73: #{forward.1} parent=0
    _
  %s13 = ssub.s32 1, %s11
  %s14 = scalar_select 0, %s13, %s11
  %v15 = vstv %s9
  %16 = vst [vmem:[#allocation2] sm:$0x1] %v15
  $region1: #{forward.1} parent=0
    #allocation3 [shape = 'u8[4096]{0}', space=vmem, size = 0x1000, scoped, tag = 'output window, operand 0']
    #allocation4 [shape = 's32[2]{0}', space=sflag, size = 0x8, scoped, tag = 'scoped memory for forward.1']
    %17 = vsyncpa [#allocation4], 0
    %s18 = scalar_lea.sflag [#allocation4], 1
    %19 = vsyncpa %s18, 0
    loop: start=0, step=1, limit=10
    $region2: #{forward.1} parent=1 // loop_pre_header
      _
    $region3: #{forward.1} parent=1 // loop_header
      %s21 = sphi 0, %s25
      %p22 = scmp.ge.s32.totalorder %s21, 10
      %s31 = sphi 0, %s33
      %s34 = sphi 0, %s31
      %s35 = sphi 0, %s34
      %s51 = sphi 0, %s35
      %s55 = sphi 0, %s55
      %s57 = sphi 0, %s55
      %s58 = sphi 0, %s57
      %s72 = sphi 0, %s58
      %s76 = sphi 0, %s76
      %s78 = sphi 0, %s76
      %s79 = sphi 0, %s78
      %s93 = sphi 0, %s79
      %s97 = sphi 0, %s97
      %s99 = sphi 0, %s97
      %s100 = sphi 0, %s99
      %s114 = sphi 0, %s100
      %s118 = sphi 0, %s118
      %s120 = sphi 0, %s118
      %s121 = sphi 0, %s120
      %s135 = sphi 0, %s121
      %s139 = sphi 0, %s139
      %s141 = sphi 0, %s139
      %s142 = sphi 0, %s141
      %s156 = sphi 0, %s142
      %s160 = sphi 0, %s160
      %s162 = sphi 0, %s160
      %s163 = sphi 0, %s162
      %s177 = sphi 0, %s163
      %s181 = sphi 0, %s181
      %s183 = sphi 0, %s181
      %s184 = sphi 0, %s183
      %s198 = sphi 0, %s184
      %s202 = sphi 0, %s202
      %s204 = sphi 0, %s202
      %s205 = sphi 0, %s204
      %s219 = sphi 0, %s205
      %s223 = sphi 0, %s223
      %s225 = sphi 0, %s223
      %s226 = sphi 0, %s225
      %s240 = sphi 0, %s226
      %s246 = sphi 0, %s248
      %s249 = sphi 0, %s246
      %s250 = sphi 0, %s249
      %s266 = sphi 0, %s250
    $region4: #{forward.1} parent=1 // loop_header_branch
      %24 = sbr.rel (%p22) target = $region8
    $region5: #{forward.1} parent=1 // loop_body
      %s26 = ssub.s32 %s21, 1
      %s27 = ssub.s32 %s21, 2
      %s28 = sadd.s32 %s21, 1
      %s29 = ssub.s32 %s21, %s28
      %p30 = scmp.eq.s32.totalorder %s29, 0
      %s32 = sadd.s32 %s31, 1
      %s33 = scalar_select %p30, %s31, %s32
      %p36 = pneg %p30
      %p37 = scmp.eq.s32.totalorder %s21, 7
      %p38 = por %p36, %p37
      %p39 = scmp.ne.s32.totalorder %s31, %s34
      %p40 = scmp.eq.s32.totalorder %s21, 0
      %p41 = por %p39, %p40
      %p42 = scmp.ne.s32.totalorder %s31, %s34
      %p43 = scmp.eq.s32.totalorder %s26, 7
      %p44 = por %p42, %p43
      %p45 = scmp.ne.s32.totalorder %s34, %s35
      %p46 = scmp.eq.s32.totalorder %s26, 0
      %p47 = por %p45, %p46
      %p48 = scmp.ne.s32.totalorder %s34, %s35
      %p49 = scmp.eq.s32.totalorder %s27, 7
      %p50 = por %p48, %p49
      %p52 = scmp.ne.s32.totalorder %s35, %s51
      %p53 = scmp.eq.s32.totalorder %s27, 0
      %p54 = por %p52, %p53
      %s56 = sadd.s32 %s55, 1
      %p59 = scmp.eq.s32.totalorder %s21, 7
      %p60 = scmp.ne.s32.totalorder %s55, %s57
      %p61 = scmp.eq.s32.totalorder %s21, 0
      %p62 = por %p60, %p61
      %p63 = scmp.ne.s32.totalorder %s55, %s57
      %p64 = scmp.eq.s32.totalorder %s26, 7
      %p65 = por %p63, %p64
      %p66 = scmp.ne.s32.totalorder %s57, %s58
      %p67 = scmp.eq.s32.totalorder %s26, 0
      %p68 = por %p66, %p67
      %p69 = scmp.ne.s32.totalorder %s57, %s58
      %p70 = scmp.eq.s32.totalorder %s27, 7
      %p71 = por %p69, %p70
      %p73 = scmp.ne.s32.totalorder %s58, %s72
      %p74 = scmp.eq.s32.totalorder %s27, 0
      %p75 = por %p73, %p74
      %s77 = sadd.s32 %s76, 1
      %p80 = scmp.eq.s32.totalorder %s21, 7
      %p81 = scmp.ne.s32.totalorder %s76, %s78
      %p82 = scmp.eq.s32.totalorder %s21, 0
      %p83 = por %p81, %p82
      %p84 = scmp.ne.s32.totalorder %s76, %s78
      %p85 = scmp.eq.s32.totalorder %s26, 7
      %p86 = por %p84, %p85
      %p87 = scmp.ne.s32.totalorder %s78, %s79
      %p88 = scmp.eq.s32.totalorder %s26, 0
      %p89 = por %p87, %p88
      %p90 = scmp.ne.s32.totalorder %s78, %s79
      %p91 = scmp.eq.s32.totalorder %s27, 7
      %p92 = por %p90, %p91
      %p94 = scmp.ne.s32.totalorder %s79, %s93
      %p95 = scmp.eq.s32.totalorder %s27, 0
      %p96 = por %p94, %p95
      %s98 = sadd.s32 %s97, 1
      %p101 = scmp.eq.s32.totalorder %s21, 7
      %p102 = scmp.ne.s32.totalorder %s97, %s99
      %p103 = scmp.eq.s32.totalorder %s21, 0
      %p104 = por %p102, %p103
      %p105 = scmp.ne.s32.totalorder %s97, %s99
      %p106 = scmp.eq.s32.totalorder %s26, 7
      %p107 = por %p105, %p106
      %p108 = scmp.ne.s32.totalorder %s99, %s100
      %p109 = scmp.eq.s32.totalorder %s26, 0
      %p110 = por %p108, %p109
      %p111 = scmp.ne.s32.totalorder %s99, %s100
      %p112 = scmp.eq.s32.totalorder %s27, 7
      %p113 = por %p111, %p112
      %p115 = scmp.ne.s32.totalorder %s100, %s114
      %p116 = scmp.eq.s32.totalorder %s27, 0
      %p117 = por %p115, %p116
      %s119 = sadd.s32 %s118, 1
      %p122 = scmp.eq.s32.totalorder %s21, 7
      %p123 = scmp.ne.s32.totalorder %s118, %s120
      %p124 = scmp.eq.s32.totalorder %s21, 0
      %p125 = por %p123, %p124
      %p126 = scmp.ne.s32.totalorder %s118, %s120
      %p127 = scmp.eq.s32.totalorder %s26, 7
      %p128 = por %p126, %p127
      %p129 = scmp.ne.s32.totalorder %s120, %s121
      %p130 = scmp.eq.s32.totalorder %s26, 0
      %p131 = por %p129, %p130
      %p132 = scmp.ne.s32.totalorder %s120, %s121
      %p133 = scmp.eq.s32.totalorder %s27, 7
      %p134 = por %p132, %p133
      %p136 = scmp.ne.s32.totalorder %s121, %s135
      %p137 = scmp.eq.s32.totalorder %s27, 0
      %p138 = por %p136, %p137
      %s140 = sadd.s32 %s139, 1
      %p143 = scmp.eq.s32.totalorder %s21, 7
      %p144 = scmp.ne.s32.totalorder %s139, %s141
      %p145 = scmp.eq.s32.totalorder %s21, 0
      %p146 = por %p144, %p145
      %p147 = scmp.ne.s32.totalorder %s139, %s141
      %p148 = scmp.eq.s32.totalorder %s26, 7
      %p149 = por %p147, %p148
      %p150 = scmp.ne.s32.totalorder %s141, %s142
      %p151 = scmp.eq.s32.totalorder %s26, 0
      %p152 = por %p150, %p151
      %p153 = scmp.ne.s32.totalorder %s141, %s142
      %p154 = scmp.eq.s32.totalorder %s27, 7
      %p155 = por %p153, %p154
      %p157 = scmp.ne.s32.totalorder %s142, %s156
      %p158 = scmp.eq.s32.totalorder %s27, 0
      %p159 = por %p157, %p158
      %s161 = sadd.s32 %s160, 1
      %p164 = scmp.eq.s32.totalorder %s21, 7
      %p165 = scmp.ne.s32.totalorder %s160, %s162
      %p166 = scmp.eq.s32.totalorder %s21, 0
      %p167 = por %p165, %p166
      %p168 = scmp.ne.s32.totalorder %s160, %s162
      %p169 = scmp.eq.s32.totalorder %s26, 7
      %p170 = por %p168, %p169
      %p171 = scmp.ne.s32.totalorder %s162, %s163
      %p172 = scmp.eq.s32.totalorder %s26, 0
      %p173 = por %p171, %p172
      %p174 = scmp.ne.s32.totalorder %s162, %s163
      %p175 = scmp.eq.s32.totalorder %s27, 7
      %p176 = por %p174, %p175
      %p178 = scmp.ne.s32.totalorder %s163, %s177
      %p179 = scmp.eq.s32.totalorder %s27, 0
      %p180 = por %p178, %p179
      %s182 = sadd.s32 %s181, 1
      %p185 = scmp.eq.s32.totalorder %s21, 7
      %p186 = scmp.ne.s32.totalorder %s181, %s183
      %p187 = scmp.eq.s32.totalorder %s21, 0
      %p188 = por %p186, %p187
      %p189 = scmp.ne.s32.totalorder %s181, %s183
      %p190 = scmp.eq.s32.totalorder %s26, 7
      %p191 = por %p189, %p190
      %p192 = scmp.ne.s32.totalorder %s183, %s184
      %p193 = scmp.eq.s32.totalorder %s26, 0
      %p194 = por %p192, %p193
      %p195 = scmp.ne.s32.totalorder %s183, %s184
      %p196 = scmp.eq.s32.totalorder %s27, 7
      %p197 = por %p195, %p196
      %p199 = scmp.ne.s32.totalorder %s184, %s198
      %p200 = scmp.eq.s32.totalorder %s27, 0
      %p201 = por %p199, %p200
      %s203 = sadd.s32 %s202, 1
      %p206 = scmp.eq.s32.totalorder %s21, 7
      %p207 = scmp.ne.s32.totalorder %s202, %s204
      %p208 = scmp.eq.s32.totalorder %s21, 0
      %p209 = por %p207, %p208
      %p210 = scmp.ne.s32.totalorder %s202, %s204
      %p211 = scmp.eq.s32.totalorder %s26, 7
      %p212 = por %p210, %p211
      %p213 = scmp.ne.s32.totalorder %s204, %s205
      %p214 = scmp.eq.s32.totalorder %s26, 0
      %p215 = por %p213, %p214
      %p216 = scmp.ne.s32.totalorder %s204, %s205
      %p217 = scmp.eq.s32.totalorder %s27, 7
      %p218 = por %p216, %p217
      %p220 = scmp.ne.s32.totalorder %s205, %s219
      %p221 = scmp.eq.s32.totalorder %s27, 0
      %p222 = por %p220, %p221
      %s224 = sadd.s32 %s223, 1
      %p227 = scmp.eq.s32.totalorder %s21, 7
      %p228 = scmp.ne.s32.totalorder %s223, %s225
      %p229 = scmp.eq.s32.totalorder %s21, 0
      %p230 = por %p228, %p229
      %p231 = scmp.ne.s32.totalorder %s223, %s225
      %p232 = scmp.eq.s32.totalorder %s26, 7
      %p233 = por %p231, %p232
      %p234 = scmp.ne.s32.totalorder %s225, %s226
      %p235 = scmp.eq.s32.totalorder %s26, 0
      %p236 = por %p234, %p235
      %p237 = scmp.ne.s32.totalorder %s225, %s226
      %p238 = scmp.eq.s32.totalorder %s27, 7
      %p239 = por %p237, %p238
      %p241 = scmp.ne.s32.totalorder %s226, %s240
      %p242 = scmp.eq.s32.totalorder %s27, 0
      %p243 = por %p241, %p242
      %s244 = ssub.s32 %s21, %s28
      %p245 = scmp.eq.s32.totalorder %s244, 0
      %s247 = sadd.s32 %s246, 1
      %s248 = scalar_select %p245, %s246, %s247
      %p251 = pneg %p245
      %p252 = scmp.eq.s32.totalorder %s21, 7
      %p253 = por %p251, %p252
      %p254 = scmp.ne.s32.totalorder %s246, %s249
      %p255 = scmp.eq.s32.totalorder %s21, 0
      %p256 = por %p254, %p255
      %p257 = scmp.ne.s32.totalorder %s246, %s249
      %p258 = scmp.eq.s32.totalorder %s26, 7
      %p259 = por %p257, %p258
      %p260 = scmp.ne.s32.totalorder %s249, %s250
      %p261 = scmp.eq.s32.totalorder %s26, 0
      %p262 = por %p260, %p261
      %p263 = scmp.ne.s32.totalorder %s249, %s250
      %p264 = scmp.eq.s32.totalorder %s27, 7
      %p265 = por %p263, %p264
      %p267 = scmp.ne.s32.totalorder %s250, %s266
      %p268 = scmp.eq.s32.totalorder %s27, 0
      %p269 = por %p267, %p268
      %p270 = scmp.le.s32.totalorder 1, %s21
      %p271 = scmp.lt.s32.totalorder %s21, 9
      %p272 = pnand %p270, %p271
      %p273 = pneg %p272
      // Predicated region
      $region9: #{forward.1} parent=5 // pred_check
        _
      $region10: #{forward.1} parent=5 // pred_check_branch
        %275 = sbr.rel (%p272) target = $region12
      $region11: #{forward.1} parent=5 // pred_region
        %s276 = ssub.s32 %s21, 1
        // Predicated region
        $region13: #{forward.1} parent=11 // pred_check
          %p277 = pneg %p68
        $region14: #{forward.1} parent=11 // pred_check_branch
          %279 = sbr.rel (%p277) target = $region16
        $region15: #{forward.1} parent=11 // pred_region
          _
        $region16: #{forward.1} parent=11 // pred_fallthru
          _
        // Predicated region
        $region17: #{forward.1} parent=11 // pred_check
          %p280 = pneg %p89
        $region18: #{forward.1} parent=11 // pred_check_branch
          %282 = sbr.rel (%p280) target = $region20
        $region19: #{forward.1} parent=11 // pred_region
          _
        $region20: #{forward.1} parent=11 // pred_fallthru
          _
        // Predicated region
        $region21: #{forward.1} parent=11 // pred_check
          %p283 = pneg %p110
        $region22: #{forward.1} parent=11 // pred_check_branch
          %285 = sbr.rel (%p283) target = $region24
        $region23: #{forward.1} parent=11 // pred_region
          _
        $region24: #{forward.1} parent=11 // pred_fallthru
          _
        // Predicated region
        $region25: #{forward.1} parent=11 // pred_check
          %p286 = pneg %p131
        $region26: #{forward.1} parent=11 // pred_check_branch
          %288 = sbr.rel (%p286) target = $region28
        $region27: #{forward.1} parent=11 // pred_region
          _
        $region28: #{forward.1} parent=11 // pred_fallthru
          _
        // Predicated region
        $region29: #{forward.1} parent=11 // pred_check
          %p289 = pneg %p152
        $region30: #{forward.1} parent=11 // pred_check_branch
          %291 = sbr.rel (%p289) target = $region32
        $region31: #{forward.1} parent=11 // pred_region
          _
        $region32: #{forward.1} parent=11 // pred_fallthru
          _
        // Predicated region
        $region33: #{forward.1} parent=11 // pred_check
          %p292 = pneg %p173
        $region34: #{forward.1} parent=11 // pred_check_branch
          %294 = sbr.rel (%p292) target = $region36
        $region35: #{forward.1} parent=11 // pred_region
          _
        $region36: #{forward.1} parent=11 // pred_fallthru
          _
        // Predicated region
        $region37: #{forward.1} parent=11 // pred_check
          %p295 = pneg %p194
        $region38: #{forward.1} parent=11 // pred_check_branch
          %297 = sbr.rel (%p295) target = $region40
        $region39: #{forward.1} parent=11 // pred_region
          _
        $region40: #{forward.1} parent=11 // pred_fallthru
          _
        // Predicated region
        $region41: #{forward.1} parent=11 // pred_check
          %p298 = pneg %p215
        $region42: #{forward.1} parent=11 // pred_check_branch
          %300 = sbr.rel (%p298) target = $region44
        $region43: #{forward.1} parent=11 // pred_region
          _
        $region44: #{forward.1} parent=11 // pred_fallthru
          _
        // Predicated region
        $region45: #{forward.1} parent=11 // pred_check
          %p301 = pneg %p236
        $region46: #{forward.1} parent=11 // pred_check_branch
          %303 = sbr.rel (%p301) target = $region48
        $region47: #{forward.1} parent=11 // pred_region
          _
        $region48: #{forward.1} parent=11 // pred_fallthru
          _
      $region12: #{forward.1} parent=5 // pred_fallthru
        _
      %p304 = scmp.lt.s32.totalorder %s21, 8
      // Predicated region
      $region49: #{forward.1} parent=5 // pred_check
        %p305 = pneg %p304
      $region50: #{forward.1} parent=5 // pred_check_branch
        %307 = sbr.rel (%p305) target = $region52
      $region51: #{forward.1} parent=5 // pred_region
        // Predicated region
        $region53: #{forward.1} parent=51 // pred_check
          %p308 = pneg %p41
        $region54: #{forward.1} parent=51 // pred_check_branch
          %310 = sbr.rel (%p308) target = $region56
        $region55: #{forward.1} parent=51 // pred_region
          %s311 = smul.u32 4, %s21
          %p312 = scmp.lt.s32.totalorder %s311, 31
          %s313 = scalar_select %p312, %s311, 31
          %s314 = smul.addr %s313, 4
          %s315 = scalar_lea.vmem %s0, %s314
          %s316 = smul.u32 4, %s21
        $region56: #{forward.1} parent=51 // pred_fallthru
          _
      $region52: #{forward.1} parent=5 // pred_fallthru
        _
      %p317 = scmp.le.s32.totalorder 1, %s21
      %p318 = scmp.lt.s32.totalorder %s21, 9
      %p319 = pnand %p317, %p318
      %p320 = pneg %p319
      // Predicated region
      $region57: #{forward.1} parent=5 // pred_check
        _
      $region58: #{forward.1} parent=5 // pred_check_branch
        %322 = sbr.rel (%p319) target = $region60
      $region59: #{forward.1} parent=5 // pred_region
        %s323 = ssub.s32 %s21, 1
        %s324 = smul.u32 4, %s26
        %p325 = scmp.lt.s32.totalorder %s324, 31
        %s326 = scalar_select %p325, %s324, 31
        %s327 = smul.addr %s326, 4
        %s328 = scalar_lea.vmem %s0, %s327
        %p329 = pneg %p47
        %p330 = pneg %p44
        %p331 = pneg %p68
        %p332 = pneg %p65
        %p333 = pneg %p89
        %p334 = pneg %p86
        %p335 = pneg %p110
        %p336 = pneg %p107
        %p337 = pneg %p131
        %p338 = pneg %p128
        %p339 = pneg %p152
        %p340 = pneg %p149
        %p341 = pneg %p173
        %p342 = pneg %p170
        %p343 = pneg %p194
        %p344 = pneg %p191
        %p345 = pneg %p215
        %p346 = pneg %p212
        %p347 = pneg %p236
        %p348 = pneg %p233
        %p349 = pneg %p262
        %p350 = pneg %p259
        %s351 = sand.u32 %s249, 1
        %s352 = scalar_lea.sflag [#allocation4], %s351
        %s353 = sand.u32 %s249, 1
        %s354 = smul.addr %s353, 4
        %s355 = scalar_lea.vmem [#allocation3], %s354
        %s356 = smul.u32 4, %s26
        %p357 = scmp.lt.s32.totalorder %s356, 31
        %s358 = scalar_select %p357, %s356, 31
        %s359 = smul.addr %s358, 4
        %s360 = scalar_lea.vmem %s0, %s359
        %s361 = smul.u32 4, %s26
        %s362 = smul.u32 4, %s26
        %v363 = vld [vmem:[%s360] sm:$0xff]
        %v364 = vld [vmem:[%s360 + $0x8] sm:$0xff]
        %v365 = vld [vmem:[%s1] sm:$0xff]
        %v366 = vld [vmem:[%s1 + $0x8] sm:$0xff]
        %v367 = vld [vmem:[%s1 + $0x10] sm:$0xff]
        %v368 = vld [vmem:[%s1 + $0x18] sm:$0xff]
        %v369 = vld [vmem:[%s2] sm:$0xff]
        %v370 = vld [vmem:[%s2 + $0x8] sm:$0xff]
        %v371 = vld [vmem:[%s2 + $0x10] sm:$0xff]
        %v372 = vld [vmem:[%s2 + $0x18] sm:$0xff]
        %374 = vset.pattern.permute.xlu0 0
        %375 = vperm.xlu0 %374, %v369
        %v376 = vpop.permute.xlu0 %375
        %379 = vset.pattern.permute.xlu0 0
        %380 = vperm.xlu0 %379, %v370
        %v381 = vpop.permute.xlu0 %380
        %384 = vset.pattern.permute.xlu0 0
        %385 = vperm.xlu0 %384, %v371
        %v386 = vpop.permute.xlu0 %385
        %389 = vset.pattern.permute.xlu0 0
        %390 = vperm.xlu0 %389, %v372
        %v391 = vpop.permute.xlu0 %390
        %v395 = vcombine.high %v363, %v363
        %v396 = vcombine.high %v364, %v364
        %vm397 = vcmask 31744
        %v399 = vsel %vm397, %v365, 0
        %v402 = vsel %vm397, %v366, 0
        %v405 = vsel %vm397, %v367, 0
        %v408 = vsel %vm397, %v368, 0
        %vm410 = vcmask 1043456
        %v411 = vsel %vm410, %v363, 0
        %v413 = vsel %vm410, %v395, 0
        %v415 = vsel %vm410, %v364, 0
        %v417 = vsel %vm410, %v396, 0
        %419 = vmatprep.subr.mxu0 %v413
        %420 = vmatpush1.msra.mxu0 %v411
        %421 = vmatprep.subr.mxu0 0.0
        %422 = vmatpush1.msra.mxu0 0.0
        %423 = vmatprep.subr.mxu0 0.0
        %424 = vmatpush1.msra.mxu0 0.0
        %425 = vmatprep.subr.mxu0 0.0
        %426 = vmatpush1.msra.mxu0 0.0
        %427 = vmatprep.subr.mxu0 0.0
        %428 = vmatpush1.msra.mxu0 0.0
        %429 = vmatprep.subr.mxu0 0.0
        %430 = vmatpush1.msra.mxu0 0.0
        %431 = vmatprep.subr.mxu0 0.0
        %432 = vmatpush1.msra.mxu0 0.0
        %433 = vmatprep.subr.mxu0 0.0
        %434 = vmatpush1.msra.mxu0 0.0
        %435 = vmatprep.subr.mxu0 0.0
        %436 = vmatpush1.msra.mxu0 0.0
        %437 = vmatprep.subr.mxu0 0.0
        %438 = vmatpush1.msra.mxu0 0.0
        %439 = vmatprep.subr.mxu0 0.0
        %440 = vmatpush1.msra.mxu0 0.0
        %441 = vmatprep.subr.mxu0 0.0
        %442 = vmatpush1.msra.mxu0 0.0
        %443 = vmatprep.subr.mxu0 0.0
        %444 = vmatpush1.msra.mxu0 0.0
        %445 = vmatprep.subr.mxu0 0.0
        %446 = vmatpush1.msra.mxu0 0.0
        %447 = vmatprep.subr.mxu0 0.0
        %448 = vmatpush1.msra.mxu0 0.0
        %449 = vmatprep.subr.mxu0 0.0
        %450 = vmatpush1.msra.mxu0 0.0
        %451 = vmatprep.subr.mxu0 0.0
        %452 = vmatpush1.msra.mxu0 0.0
        %453 = vmatprep.subr.mxu0 0.0
        %454 = vmatpush1.msra.mxu0 0.0
        %455 = vmatprep.subr.mxu0 0.0
        %456 = vmatpush1.msra.mxu0 0.0
        %457 = vmatprep.subr.mxu0 0.0
        %458 = vmatpush1.msra.mxu0 0.0
        %459 = vmatprep.subr.mxu0 0.0
        %460 = vmatpush1.msra.mxu0 0.0
        %461 = vmatprep.subr.mxu0 0.0
        %462 = vmatpush1.msra.mxu0 0.0
        %463 = vmatprep.subr.mxu0 0.0
        %464 = vmatpush1.msra.mxu0 0.0
        %465 = vmatprep.subr.mxu0 0.0
        %466 = vmatpush1.msra.mxu0 0.0
        %467 = vmatprep.subr.mxu0 0.0
        %468 = vmatpush1.msra.mxu0 0.0
        %469 = vmatprep.subr.mxu0 0.0
        %470 = vmatpush1.msra.mxu0 0.0
        %471 = vmatprep.subr.mxu0 0.0
        %472 = vmatpush1.msra.mxu0 0.0
        %473 = vmatprep.subr.mxu0 0.0
        %474 = vmatpush1.msra.mxu0 0.0
        %475 = vmatprep.subr.mxu0 0.0
        %476 = vmatpush1.msra.mxu0 0.0
        %477 = vmatprep.subr.mxu0 0.0
        %478 = vmatpush1.msra.mxu0 0.0
        %479 = vmatprep.subr.mxu0 0.0
        %480 = vmatpush1.msra.mxu0 0.0
        %481 = vmatprep.subr.mxu0 0.0
        %482 = vmatpush1.msra.mxu0 0.0
        %483 = vmatprep.mubr.f32.mxu0 0.0
        %484 = vmatmul.mubr.f32.gmra.mrb[0].mxu0 %v399
        %v485 = vpop.f32.mrb[0].mxu0
        %v486 = vadd.f32 %v376, %v485
        %v487 = vpop.f32.mrb[0].mxu0
        %v488 = vadd.f32 %v376, %v487
        %489 = vmatprep.mubr.f32.mxu0 0.0
        %490 = vmatmul.mubr.f32.gmra.mrb[0].mxu0 %v402
        %v491 = vpop.f32.mrb[0].mxu0
        %v492 = vadd.f32 %v381, %v491
        %v493 = vpop.f32.mrb[0].mxu0
        %v494 = vadd.f32 %v381, %v493
        %495 = vmatprep.mubr.f32.mxu0 0.0
        %496 = vmatmul.mubr.f32.gmra.mrb[0].mxu0 %v405
        %v497 = vpop.f32.mrb[0].mxu0
        %v498 = vadd.f32 %v386, %v497
        %v499 = vpop.f32.mrb[0].mxu0
        %v500 = vadd.f32 %v386, %v499
        %501 = vmatprep.mubr.f32.mxu0 0.0
        %502 = vmatmul.mubr.f32.gmra.mrb[0].mxu0 %v408
        %v503 = vpop.f32.mrb[0].mxu0
        %v504 = vadd.f32 %v391, %v503
        %v505 = vpop.f32.mrb[0].mxu0
        %v506 = vadd.f32 %v391, %v505
        %507 = vdwg.mxu0
        %508 = vmatprep.subr.mxu0 %v417
        %509 = vmatpush1.msra.mxu0 %v415
        %510 = vmatprep.subr.mxu0 0.0
        %511 = vmatpush1.msra.mxu0 0.0
        %512 = vmatprep.subr.mxu0 0.0
        %513 = vmatpush1.msra.mxu0 0.0
        %514 = vmatprep.subr.mxu0 0.0
        %515 = vmatpush1.msra.mxu0 0.0
        %516 = vmatprep.subr.mxu0 0.0
        %517 = vmatpush1.msra.mxu0 0.0
        %518 = vmatprep.subr.mxu0 0.0
        %519 = vmatpush1.msra.mxu0 0.0
        %520 = vmatprep.subr.mxu0 0.0
        %521 = vmatpush1.msra.mxu0 0.0
        %522 = vmatprep.subr.mxu0 0.0
        %523 = vmatpush1.msra.mxu0 0.0
        %524 = vmatprep.subr.mxu0 0.0
        %525 = vmatpush1.msra.mxu0 0.0
        %526 = vmatprep.subr.mxu0 0.0
        %527 = vmatpush1.msra.mxu0 0.0
        %528 = vmatprep.subr.mxu0 0.0
        %529 = vmatpush1.msra.mxu0 0.0
        %530 = vmatprep.subr.mxu0 0.0
        %531 = vmatpush1.msra.mxu0 0.0
        %532 = vmatprep.subr.mxu0 0.0
        %533 = vmatpush1.msra.mxu0 0.0
        %534 = vmatprep.subr.mxu0 0.0
        %535 = vmatpush1.msra.mxu0 0.0
        %536 = vmatprep.subr.mxu0 0.0
        %537 = vmatpush1.msra.mxu0 0.0
        %538 = vmatprep.subr.mxu0 0.0
        %539 = vmatpush1.msra.mxu0 0.0
        %540 = vmatprep.subr.mxu0 0.0
        %541 = vmatpush1.msra.mxu0 0.0
        %542 = vmatprep.subr.mxu0 0.0
        %543 = vmatpush1.msra.mxu0 0.0
        %544 = vmatprep.subr.mxu0 0.0
        %545 = vmatpush1.msra.mxu0 0.0
        %546 = vmatprep.subr.mxu0 0.0
        %547 = vmatpush1.msra.mxu0 0.0
        %548 = vmatprep.subr.mxu0 0.0
        %549 = vmatpush1.msra.mxu0 0.0
        %550 = vmatprep.subr.mxu0 0.0
        %551 = vmatpush1.msra.mxu0 0.0
        %552 = vmatprep.subr.mxu0 0.0
        %553 = vmatpush1.msra.mxu0 0.0
        %554 = vmatprep.subr.mxu0 0.0
        %555 = vmatpush1.msra.mxu0 0.0
        %556 = vmatprep.subr.mxu0 0.0
        %557 = vmatpush1.msra.mxu0 0.0
        %558 = vmatprep.subr.mxu0 0.0
        %559 = vmatpush1.msra.mxu0 0.0
        %560 = vmatprep.subr.mxu0 0.0
        %561 = vmatpush1.msra.mxu0 0.0
        %562 = vmatprep.subr.mxu0 0.0
        %563 = vmatpush1.msra.mxu0 0.0
        %564 = vmatprep.subr.mxu0 0.0
        %565 = vmatpush1.msra.mxu0 0.0
        %566 = vmatprep.subr.mxu0 0.0
        %567 = vmatpush1.msra.mxu0 0.0
        %568 = vmatprep.subr.mxu0 0.0
        %569 = vmatpush1.msra.mxu0 0.0
        %570 = vmatprep.subr.mxu0 0.0
        %571 = vmatpush1.msra.mxu0 0.0
        %572 = vmatprep.mubr.f32.mxu0 0.0
        %573 = vmatmul.mubr.f32.gmra.mrb[0].mxu0 %v399
        %v574 = vpop.f32.mrb[0].mxu0
        %v575 = vadd.f32 %v376, %v574
        %v576 = vpop.f32.mrb[0].mxu0
        %v577 = vadd.f32 %v376, %v576
        %578 = vmatprep.mubr.f32.mxu0 0.0
        %579 = vmatmul.mubr.f32.gmra.mrb[0].mxu0 %v402
        %v580 = vpop.f32.mrb[0].mxu0
        %v581 = vadd.f32 %v381, %v580
        %v582 = vpop.f32.mrb[0].mxu0
        %v583 = vadd.f32 %v381, %v582
        %584 = vmatprep.mubr.f32.mxu0 0.0
        %585 = vmatmul.mubr.f32.gmra.mrb[0].mxu0 %v405
        %v586 = vpop.f32.mrb[0].mxu0
        %v587 = vadd.f32 %v386, %v586
        %v588 = vpop.f32.mrb[0].mxu0
        %v589 = vadd.f32 %v386, %v588
        %590 = vmatprep.mubr.f32.mxu0 0.0
        %591 = vmatmul.mubr.f32.gmra.mrb[0].mxu0 %v408
        %v592 = vpop.f32.mrb[0].mxu0
        %v593 = vadd.f32 %v391, %v592
        %v594 = vpop.f32.mrb[0].mxu0
        %v595 = vadd.f32 %v391, %v594
        %596 = vdwg.mxu0
        %v597 = vmul.f32 %v486, 100.0
        %v598 = vmul.f32 %v488, 100.0
        %v599 = vmul.f32 %v575, 100.0
        %v600 = vmul.f32 %v577, 100.0
        %v601 = vmul.f32 %v492, 100.0
        %v602 = vmul.f32 %v494, 100.0
        %v603 = vmul.f32 %v581, 100.0
        %v604 = vmul.f32 %v583, 100.0
        %v605 = vmul.f32 %v498, 100.0
        %v606 = vmul.f32 %v500, 100.0
        %v607 = vmul.f32 %v587, 100.0
        %v608 = vmul.f32 %v589, 100.0
        %v609 = vmul.f32 %v504, 100.0
        %v610 = vmul.f32 %v506, 100.0
        %v611 = vmul.f32 %v593, 100.0
        %v612 = vmul.f32 %v595, 100.0
        %v613 = vand.u32 2147483647, %v597
        %v614 = vand.u32 2147483647, %v598
        %v615 = vand.u32 2147483647, %v599
        %v616 = vand.u32 2147483647, %v600
        %v617 = vand.u32 2147483647, %v601
        %v618 = vand.u32 2147483647, %v602
        %v619 = vand.u32 2147483647, %v603
        %v620 = vand.u32 2147483647, %v604
        %v621 = vand.u32 2147483647, %v605
        %v622 = vand.u32 2147483647, %v606
        %v623 = vand.u32 2147483647, %v607
        %v624 = vand.u32 2147483647, %v608
        %v625 = vand.u32 2147483647, %v609
        %v626 = vand.u32 2147483647, %v610
        %v627 = vand.u32 2147483647, %v611
        %v628 = vand.u32 2147483647, %v612
        %v629 = vsub.f32 0.0, %v613
        %v630 = vsub.f32 0.0, %v614
        %v631 = vsub.f32 0.0, %v615
        %v632 = vsub.f32 0.0, %v616
        %v633 = vsub.f32 0.0, %v617
        %v634 = vsub.f32 0.0, %v618
        %v635 = vsub.f32 0.0, %v619
        %v636 = vsub.f32 0.0, %v620
        %v637 = vsub.f32 0.0, %v621
        %v638 = vsub.f32 0.0, %v622
        %v639 = vsub.f32 0.0, %v623
        %v640 = vsub.f32 0.0, %v624
        %v641 = vsub.f32 0.0, %v625
        %v642 = vsub.f32 0.0, %v626
        %v643 = vsub.f32 0.0, %v627
        %v644 = vsub.f32 0.0, %v628
        %v645 = vmul.f32 %v629, 1.442695
        %v646 = vpow.pop %v645
        %v647 = vmul.f32 %v630, 1.442695
        %v648 = vpow.pop %v647
        %v649 = vmul.f32 %v631, 1.442695
        %v650 = vpow.pop %v649
        %v651 = vmul.f32 %v632, 1.442695
        %v652 = vpow.pop %v651
        %v653 = vmul.f32 %v633, 1.442695
        %v654 = vpow.pop %v653
        %v655 = vmul.f32 %v634, 1.442695
        %v656 = vpow.pop %v655
        %v657 = vmul.f32 %v635, 1.442695
        %v658 = vpow.pop %v657
        %v659 = vmul.f32 %v636, 1.442695
        %v660 = vpow.pop %v659
        %v661 = vmul.f32 %v637, 1.442695
        %v662 = vpow.pop %v661
        %v663 = vmul.f32 %v638, 1.442695
        %v664 = vpow.pop %v663
        %v665 = vmul.f32 %v639, 1.442695
        %v666 = vpow.pop %v665
        %v667 = vmul.f32 %v640, 1.442695
        %v668 = vpow.pop %v667
        %v669 = vmul.f32 %v641, 1.442695
        %v670 = vpow.pop %v669
        %v671 = vmul.f32 %v642, 1.442695
        %v672 = vpow.pop %v671
        %v673 = vmul.f32 %v643, 1.442695
        %v674 = vpow.pop %v673
        %v675 = vmul.f32 %v644, 1.442695
        %v676 = vpow.pop %v675
        %v677 = vmul.f32 %v646, 2.0
        %v678 = vmul.f32 %v648, 2.0
        %v679 = vmul.f32 %v650, 2.0
        %v680 = vmul.f32 %v652, 2.0
        %v681 = vmul.f32 %v654, 2.0
        %v682 = vmul.f32 %v656, 2.0
        %v683 = vmul.f32 %v658, 2.0
        %v684 = vmul.f32 %v660, 2.0
        %v685 = vmul.f32 %v662, 2.0
        %v686 = vmul.f32 %v664, 2.0
        %v687 = vmul.f32 %v666, 2.0
        %v688 = vmul.f32 %v668, 2.0
        %v689 = vmul.f32 %v670, 2.0
        %v690 = vmul.f32 %v672, 2.0
        %v691 = vmul.f32 %v674, 2.0
        %v692 = vmul.f32 %v676, 2.0
        %v693 = vsub.f32 %v677, 1.0
        %v694 = vsub.f32 %v678, 1.0
        %v695 = vsub.f32 %v679, 1.0
        %v696 = vsub.f32 %v680, 1.0
        %v697 = vsub.f32 %v681, 1.0
        %v698 = vsub.f32 %v682, 1.0
        %v699 = vsub.f32 %v683, 1.0
        %v700 = vsub.f32 %v684, 1.0
        %v701 = vsub.f32 %v685, 1.0
        %v702 = vsub.f32 %v686, 1.0
        %v703 = vsub.f32 %v687, 1.0
        %v704 = vsub.f32 %v688, 1.0
        %v705 = vsub.f32 %v689, 1.0
        %v706 = vsub.f32 %v690, 1.0
        %v707 = vsub.f32 %v691, 1.0
        %v708 = vsub.f32 %v692, 1.0
        %v709 = vmul.f32 %v693, 7.1528166e-06
        %v710 = vmul.f32 %v694, 7.1528166e-06
        %v711 = vmul.f32 %v695, 7.1528166e-06
        %v712 = vmul.f32 %v696, 7.1528166e-06
        %v713 = vmul.f32 %v697, 7.1528166e-06
        %v714 = vmul.f32 %v698, 7.1528166e-06
        %v715 = vmul.f32 %v699, 7.1528166e-06
        %v716 = vmul.f32 %v700, 7.1528166e-06
        %v717 = vmul.f32 %v701, 7.1528166e-06
        %v718 = vmul.f32 %v702, 7.1528166e-06
        %v719 = vmul.f32 %v703, 7.1528166e-06
        %v720 = vmul.f32 %v704, 7.1528166e-06
        %v721 = vmul.f32 %v705, 7.1528166e-06
        %v722 = vmul.f32 %v706, 7.1528166e-06
        %v723 = vmul.f32 %v707, 7.1528166e-06
        %v724 = vmul.f32 %v708, 7.1528166e-06
        %v725 = vadd.f32 %v709, -2.4015302e-05
        %v726 = vadd.f32 %v710, -2.4015302e-05
        %v727 = vadd.f32 %v711, -2.4015302e-05
        %v728 = vadd.f32 %v712, -2.4015302e-05
        %v729 = vadd.f32 %v713, -2.4015302e-05
        %v730 = vadd.f32 %v714, -2.4015302e-05
        %v731 = vadd.f32 %v715, -2.4015302e-05
        %v732 = vadd.f32 %v716, -2.4015302e-05
        %v733 = vadd.f32 %v717, -2.4015302e-05
        %v734 = vadd.f32 %v718, -2.4015302e-05
        %v735 = vadd.f32 %v719, -2.4015302e-05
        %v736 = vadd.f32 %v720, -2.4015302e-05
        %v737 = vadd.f32 %v721, -2.4015302e-05
        %v738 = vadd.f32 %v722, -2.4015302e-05
        %v739 = vadd.f32 %v723, -2.4015302e-05
        %v740 = vadd.f32 %v724, -2.4015302e-05
        %v741 = vmul.f32 %v725, %v693
        %v742 = vmul.f32 %v726, %v694
        %v743 = vmul.f32 %v727, %v695
        %v744 = vmul.f32 %v728, %v696
        %v745 = vmul.f32 %v729, %v697
        %v746 = vmul.f32 %v730, %v698
        %v747 = vmul.f32 %v731, %v699
        %v748 = vmul.f32 %v732, %v700
        %v749 = vmul.f32 %v733, %v701
        %v750 = vmul.f32 %v734, %v702
        %v751 = vmul.f32 %v735, %v703
        %v752 = vmul.f32 %v736, %v704
        %v753 = vmul.f32 %v737, %v705
        %v754 = vmul.f32 %v738, %v706
        %v755 = vmul.f32 %v739, %v707
        %v756 = vmul.f32 %v740, %v708
        %v757 = vadd.f32 %v741, 6.3934975e-05
        %v758 = vadd.f32 %v742, 6.3934975e-05
        %v759 = vadd.f32 %v743, 6.3934975e-05
        %v760 = vadd.f32 %v744, 6.3934975e-05
        %v761 = vadd.f32 %v745, 6.3934975e-05
        %v762 = vadd.f32 %v746, 6.3934975e-05
        %v763 = vadd.f32 %v747, 6.3934975e-05
        %v764 = vadd.f32 %v748, 6.3934975e-05
        %v765 = vadd.f32 %v749, 6.3934975e-05
        %v766 = vadd.f32 %v750, 6.3934975e-05
        %v767 = vadd.f32 %v751, 6.3934975e-05
        %v768 = vadd.f32 %v752, 6.3934975e-05
        %v769 = vadd.f32 %v753, 6.3934975e-05
        %v770 = vadd.f32 %v754, 6.3934975e-05
        %v771 = vadd.f32 %v755, 6.3934975e-05
        %v772 = vadd.f32 %v756, 6.3934975e-05
        %v773 = vmul.f32 %v757, %v693
        %v774 = vmul.f32 %v758, %v694
        %v775 = vmul.f32 %v759, %v695
        %v776 = vmul.f32 %v760, %v696
        %v777 = vmul.f32 %v761, %v697
        %v778 = vmul.f32 %v762, %v698
        %v779 = vmul.f32 %v763, %v699
        %v780 = vmul.f32 %v764, %v700
        %v781 = vmul.f32 %v765, %v701
        %v782 = vmul.f32 %v766, %v702
        %v783 = vmul.f32 %v767, %v703
        %v784 = vmul.f32 %v768, %v704
        %v785 = vmul.f32 %v769, %v705
        %v786 = vmul.f32 %v770, %v706
        %v787 = vmul.f32 %v771, %v707
        %v788 = vmul.f32 %v772, %v708
        %v789 = vadd.f32 %v773, -0.00022406426
        %v790 = vadd.f32 %v774, -0.00022406426
        %v791 = vadd.f32 %v775, -0.00022406426
        %v792 = vadd.f32 %v776, -0.00022406426
        %v793 = vadd.f32 %v777, -0.00022406426
        %v794 = vadd.f32 %v778, -0.00022406426
        %v795 = vadd.f32 %v779, -0.00022406426
        %v796 = vadd.f32 %v780, -0.00022406426
        %v797 = vadd.f32 %v781, -0.00022406426
        %v798 = vadd.f32 %v782, -0.00022406426
        %v799 = vadd.f32 %v783, -0.00022406426
        %v800 = vadd.f32 %v784, -0.00022406426
        %v801 = vadd.f32 %v785, -0.00022406426
        %v802 = vadd.f32 %v786, -0.00022406426
        %v803 = vadd.f32 %v787, -0.00022406426
        %v804 = vadd.f32 %v788, -0.00022406426
        %v805 = vmul.f32 %v789, %v693
        %v806 = vmul.f32 %v790, %v694
        %v807 = vmul.f32 %v791, %v695
        %v808 = vmul.f32 %v792, %v696
        %v809 = vmul.f32 %v793, %v697
        %v810 = vmul.f32 %v794, %v698
        %v811 = vmul.f32 %v795, %v699
        %v812 = vmul.f32 %v796, %v700
        %v813 = vmul.f32 %v797, %v701
        %v814 = vmul.f32 %v798, %v702
        %v815 = vmul.f32 %v799, %v703
        %v816 = vmul.f32 %v800, %v704
        %v817 = vmul.f32 %v801, %v705
        %v818 = vmul.f32 %v802, %v706
        %v819 = vmul.f32 %v803, %v707
        %v820 = vmul.f32 %v804, %v708
        %v821 = vadd.f32 %v805, 0.0008235513
        %v822 = vadd.f32 %v806, 0.0008235513
        %v823 = vadd.f32 %v807, 0.0008235513
        %v824 = vadd.f32 %v808, 0.0008235513
        %v825 = vadd.f32 %v809, 0.0008235513
        %v826 = vadd.f32 %v810, 0.0008235513
        %v827 = vadd.f32 %v811, 0.0008235513
        %v828 = vadd.f32 %v812, 0.0008235513
        %v829 = vadd.f32 %v813, 0.0008235513
        %v830 = vadd.f32 %v814, 0.0008235513
        %v831 = vadd.f32 %v815, 0.0008235513
        %v832 = vadd.f32 %v816, 0.0008235513
        %v833 = vadd.f32 %v817, 0.0008235513
        %v834 = vadd.f32 %v818, 0.0008235513
        %v835 = vadd.f32 %v819, 0.0008235513
        %v836 = vadd.f32 %v820, 0.0008235513
        %v837 = vmul.f32 %v821, %v693
        %v838 = vmul.f32 %v822, %v694
        %v839 = vmul.f32 %v823, %v695
        %v840 = vmul.f32 %v824, %v696
        %v841 = vmul.f32 %v825, %v697
        %v842 = vmul.f32 %v826, %v698
        %v843 = vmul.f32 %v827, %v699
        %v844 = vmul.f32 %v828, %v700
        %v845 = vmul.f32 %v829, %v701
        %v846 = vmul.f32 %v830, %v702
        %v847 = vmul.f32 %v831, %v703
        %v848 = vmul.f32 %v832, %v704
        %v849 = vmul.f32 %v833, %v705
        %v850 = vmul.f32 %v834, %v706
        %v851 = vmul.f32 %v835, %v707
        %v852 = vmul.f32 %v836, %v708
        %v853 = vadd.f32 %v837, -0.0030880838
        %v854 = vadd.f32 %v838, -0.0030880838
        %v855 = vadd.f32 %v839, -0.0030880838
        %v856 = vadd.f32 %v840, -0.0030880838
        %v857 = vadd.f32 %v841, -0.0030880838
        %v858 = vadd.f32 %v842, -0.0030880838
        %v859 = vadd.f32 %v843, -0.0030880838
        %v860 = vadd.f32 %v844, -0.0030880838
        %v861 = vadd.f32 %v845, -0.0030880838
        %v862 = vadd.f32 %v846, -0.0030880838
        %v863 = vadd.f32 %v847, -0.0030880838
        %v864 = vadd.f32 %v848, -0.0030880838
        %v865 = vadd.f32 %v849, -0.0030880838
        %v866 = vadd.f32 %v850, -0.0030880838
        %v867 = vadd.f32 %v851, -0.0030880838
        %v868 = vadd.f32 %v852, -0.0030880838
        %v869 = vmul.f32 %v853, %v693
        %v870 = vmul.f32 %v854, %v694
        %v871 = vmul.f32 %v855, %v695
        %v872 = vmul.f32 %v856, %v696
        %v873 = vmul.f32 %v857, %v697
        %v874 = vmul.f32 %v858, %v698
        %v875 = vmul.f32 %v859, %v699
        %v876 = vmul.f32 %v860, %v700
        %v877 = vmul.f32 %v861, %v701
        %v878 = vmul.f32 %v862, %v702
        %v879 = vmul.f32 %v863, %v703
        %v880 = vmul.f32 %v864, %v704
        %v881 = vmul.f32 %v865, %v705
        %v882 = vmul.f32 %v866, %v706
        %v883 = vmul.f32 %v867, %v707
        %v884 = vmul.f32 %v868, %v708
        %v885 = vadd.f32 %v869, 0.012345615
        %v886 = vadd.f32 %v870, 0.012345615
        %v887 = vadd.f32 %v871, 0.012345615
        %v888 = vadd.f32 %v872, 0.012345615
        %v889 = vadd.f32 %v873, 0.012345615
        %v890 = vadd.f32 %v874, 0.012345615
        %v891 = vadd.f32 %v875, 0.012345615
        %v892 = vadd.f32 %v876, 0.012345615
        %v893 = vadd.f32 %v877, 0.012345615
        %v894 = vadd.f32 %v878, 0.012345615
        %v895 = vadd.f32 %v879, 0.012345615
        %v896 = vadd.f32 %v880, 0.012345615
        %v897 = vadd.f32 %v881, 0.012345615
        %v898 = vadd.f32 %v882, 0.012345615
        %v899 = vadd.f32 %v883, 0.012345615
        %v900 = vadd.f32 %v884, 0.012345615
        %v901 = vmul.f32 %v885, %v693
        %v902 = vmul.f32 %v886, %v694
        %v903 = vmul.f32 %v887, %v695
        %v904 = vmul.f32 %v888, %v696
        %v905 = vmul.f32 %v889, %v697
        %v906 = vmul.f32 %v890, %v698
        %v907 = vmul.f32 %v891, %v699
        %v908 = vmul.f32 %v892, %v700
        %v909 = vmul.f32 %v893, %v701
        %v910 = vmul.f32 %v894, %v702
        %v911 = vmul.f32 %v895, %v703
        %v912 = vmul.f32 %v896, %v704
        %v913 = vmul.f32 %v897, %v705
        %v914 = vmul.f32 %v898, %v706
        %v915 = vmul.f32 %v899, %v707
        %v916 = vmul.f32 %v900, %v708
        %v917 = vadd.f32 %v901, -0.055555344
        %v918 = vadd.f32 %v902, -0.055555344
        %v919 = vadd.f32 %v903, -0.055555344
        %v920 = vadd.f32 %v904, -0.055555344
        %v921 = vadd.f32 %v905, -0.055555344
        %v922 = vadd.f32 %v906, -0.055555344
        %v923 = vadd.f32 %v907, -0.055555344
        %v924 = vadd.f32 %v908, -0.055555344
        %v925 = vadd.f32 %v909, -0.055555344
        %v926 = vadd.f32 %v910, -0.055555344
        %v927 = vadd.f32 %v911, -0.055555344
        %v928 = vadd.f32 %v912, -0.055555344
        %v929 = vadd.f32 %v913, -0.055555344
        %v930 = vadd.f32 %v914, -0.055555344
        %v931 = vadd.f32 %v915, -0.055555344
        %v932 = vadd.f32 %v916, -0.055555344
        %v933 = vmul.f32 %v917, %v693
        %v934 = vmul.f32 %v918, %v694
        %v935 = vmul.f32 %v919, %v695
        %v936 = vmul.f32 %v920, %v696
        %v937 = vmul.f32 %v921, %v697
        %v938 = vmul.f32 %v922, %v698
        %v939 = vmul.f32 %v923, %v699
        %v940 = vmul.f32 %v924, %v700
        %v941 = vmul.f32 %v925, %v701
        %v942 = vmul.f32 %v926, %v702
        %v943 = vmul.f32 %v927, %v703
        %v944 = vmul.f32 %v928, %v704
        %v945 = vmul.f32 %v929, %v705
        %v946 = vmul.f32 %v930, %v706
        %v947 = vmul.f32 %v931, %v707
        %v948 = vmul.f32 %v932, %v708
        %v949 = vadd.f32 %v933, 0.33333334
        %v950 = vadd.f32 %v934, 0.33333334
        %v951 = vadd.f32 %v935, 0.33333334
        %v952 = vadd.f32 %v936, 0.33333334
        %v953 = vadd.f32 %v937, 0.33333334
        %v954 = vadd.f32 %v938, 0.33333334
        %v955 = vadd.f32 %v939, 0.33333334
        %v956 = vadd.f32 %v940, 0.33333334
        %v957 = vadd.f32 %v941, 0.33333334
        %v958 = vadd.f32 %v942, 0.33333334
        %v959 = vadd.f32 %v943, 0.33333334
        %v960 = vadd.f32 %v944, 0.33333334
        %v961 = vadd.f32 %v945, 0.33333334
        %v962 = vadd.f32 %v946, 0.33333334
        %v963 = vadd.f32 %v947, 0.33333334
        %v964 = vadd.f32 %v948, 0.33333334
        %v965 = vmul.f32 %v949, %v693
        %v966 = vmul.f32 %v950, %v694
        %v967 = vmul.f32 %v951, %v695
        %v968 = vmul.f32 %v952, %v696
        %v969 = vmul.f32 %v953, %v697
        %v970 = vmul.f32 %v954, %v698
        %v971 = vmul.f32 %v955, %v699
        %v972 = vmul.f32 %v956, %v700
        %v973 = vmul.f32 %v957, %v701
        %v974 = vmul.f32 %v958, %v702
        %v975 = vmul.f32 %v959, %v703
        %v976 = vmul.f32 %v960, %v704
        %v977 = vmul.f32 %v961, %v705
        %v978 = vmul.f32 %v962, %v706
        %v979 = vmul.f32 %v963, %v707
        %v980 = vmul.f32 %v964, %v708
        %v981 = vadd.f32 %v965, 0.4054651
        %v982 = vadd.f32 %v966, 0.4054651
        %v983 = vadd.f32 %v967, 0.4054651
        %v984 = vadd.f32 %v968, 0.4054651
        %v985 = vadd.f32 %v969, 0.4054651
        %v986 = vadd.f32 %v970, 0.4054651
        %v987 = vadd.f32 %v971, 0.4054651
        %v988 = vadd.f32 %v972, 0.4054651
        %v989 = vadd.f32 %v973, 0.4054651
        %v990 = vadd.f32 %v974, 0.4054651
        %v991 = vadd.f32 %v975, 0.4054651
        %v992 = vadd.f32 %v976, 0.4054651
        %v993 = vadd.f32 %v977, 0.4054651
        %v994 = vadd.f32 %v978, 0.4054651
        %v995 = vadd.f32 %v979, 0.4054651
        %v996 = vadd.f32 %v980, 0.4054651
        %v997 = vmax.f32 %v597, 0.0
        %v998 = vmax.f32 %v598, 0.0
        %v999 = vmax.f32 %v599, 0.0
        %v1000 = vmax.f32 %v600, 0.0
        %v1001 = vmax.f32 %v601, 0.0
        %v1002 = vmax.f32 %v602, 0.0
        %v1003 = vmax.f32 %v603, 0.0
        %v1004 = vmax.f32 %v604, 0.0
        %v1005 = vmax.f32 %v605, 0.0
        %v1006 = vmax.f32 %v606, 0.0
        %v1007 = vmax.f32 %v607, 0.0
        %v1008 = vmax.f32 %v608, 0.0
        %v1009 = vmax.f32 %v609, 0.0
        %v1010 = vmax.f32 %v610, 0.0
        %v1011 = vmax.f32 %v611, 0.0
        %v1012 = vmax.f32 %v612, 0.0
        %v1013 = vadd.f32 %v997, %v981
        %v1014 = vadd.f32 %v998, %v982
        %v1015 = vadd.f32 %v999, %v983
        %v1016 = vadd.f32 %v1000, %v984
        %v1017 = vadd.f32 %v1001, %v985
        %v1018 = vadd.f32 %v1002, %v986
        %v1019 = vadd.f32 %v1003, %v987
        %v1020 = vadd.f32 %v1004, %v988
        %v1021 = vadd.f32 %v1005, %v989
        %v1022 = vadd.f32 %v1006, %v990
        %v1023 = vadd.f32 %v1007, %v991
        %v1024 = vadd.f32 %v1008, %v992
        %v1025 = vadd.f32 %v1009, %v993
        %v1026 = vadd.f32 %v1010, %v994
        %v1027 = vadd.f32 %v1011, %v995
        %v1028 = vadd.f32 %v1012, %v996
        %v1029 = vmul.f32 %v1013, 0.01
        %v1030 = vmul.f32 %v1014, 0.01
        %v1031 = vmul.f32 %v1015, 0.01
        %v1032 = vmul.f32 %v1016, 0.01
        %v1033 = vmul.f32 %v1017, 0.01
        %v1034 = vmul.f32 %v1018, 0.01
        %v1035 = vmul.f32 %v1019, 0.01
        %v1036 = vmul.f32 %v1020, 0.01
        %v1037 = vmul.f32 %v1021, 0.01
        %v1038 = vmul.f32 %v1022, 0.01
        %v1039 = vmul.f32 %v1023, 0.01
        %v1040 = vmul.f32 %v1024, 0.01
        %v1041 = vmul.f32 %v1025, 0.01
        %v1042 = vmul.f32 %v1026, 0.01
        %v1043 = vmul.f32 %v1027, 0.01
        %v1044 = vmul.f32 %v1028, 0.01
        %vm1045 = vcmp.gt.f32.partialorder %v597, 20.0
        %vm1046 = vcmp.gt.f32.partialorder %v598, 20.0
        %vm1047 = vcmp.gt.f32.partialorder %v599, 20.0
        %vm1048 = vcmp.gt.f32.partialorder %v600, 20.0
        %vm1049 = vcmp.gt.f32.partialorder %v601, 20.0
        %vm1050 = vcmp.gt.f32.partialorder %v602, 20.0
        %vm1051 = vcmp.gt.f32.partialorder %v603, 20.0
        %vm1052 = vcmp.gt.f32.partialorder %v604, 20.0
        %vm1053 = vcmp.gt.f32.partialorder %v605, 20.0
        %vm1054 = vcmp.gt.f32.partialorder %v606, 20.0
        %vm1055 = vcmp.gt.f32.partialorder %v607, 20.0
        %vm1056 = vcmp.gt.f32.partialorder %v608, 20.0
        %vm1057 = vcmp.gt.f32.partialorder %v609, 20.0
        %vm1058 = vcmp.gt.f32.partialorder %v610, 20.0
        %vm1059 = vcmp.gt.f32.partialorder %v611, 20.0
        %vm1060 = vcmp.gt.f32.partialorder %v612, 20.0
        %v1061 = vsel %vm1045, %v486, %v1029
        %v1062 = vsel %vm1046, %v488, %v1030
        %v1063 = vsel %vm1047, %v575, %v1031
        %v1064 = vsel %vm1048, %v577, %v1032
        %v1065 = vsel %vm1049, %v492, %v1033
        %v1066 = vsel %vm1050, %v494, %v1034
        %v1067 = vsel %vm1051, %v581, %v1035
        %v1068 = vsel %vm1052, %v583, %v1036
        %v1069 = vsel %vm1053, %v498, %v1037
        %v1070 = vsel %vm1054, %v500, %v1038
        %v1071 = vsel %vm1055, %v587, %v1039
        %v1072 = vsel %vm1056, %v589, %v1040
        %v1073 = vsel %vm1057, %v504, %v1041
        %v1074 = vsel %vm1058, %v506, %v1042
        %v1075 = vsel %vm1059, %v593, %v1043
        %v1076 = vsel %vm1060, %v595, %v1044
        %v1077 = vld [vmem:[%s3] sm:$0xff]
        %v1078 = vld [vmem:[%s3 + $0x8] sm:$0xff]
        %v1079 = vld [vmem:[%s3 + $0x10] sm:$0xff]
        %v1080 = vld [vmem:[%s3 + $0x18] sm:$0xf]
        %v1081 = vld [vmem:[%s4] sm:$0xff]
        %v1082 = vld [vmem:[%s4 + $0x8] sm:$0xff]
        %v1083 = vld [vmem:[%s4 + $0x10] sm:$0xff]
        %v1084 = vld [vmem:[%s4 + $0x18] sm:$0xf]
        %1086 = vset.pattern.permute.xlu0 0
        %1087 = vperm.xlu0 %1086, %v1081
        %v1088 = vpop.permute.xlu0 %1087
        %1091 = vset.pattern.permute.xlu0 0
        %1092 = vperm.xlu0 %1091, %v1082
        %v1093 = vpop.permute.xlu0 %1092
        %1096 = vset.pattern.permute.xlu0 0
        %1097 = vperm.xlu0 %1096, %v1083
        %v1098 = vpop.permute.xlu0 %1097
        %1101 = vset.pattern.permute.xlu0 0
        %1102 = vperm.xlu0 %1101, %v1084
        %v1103 = vpop.permute.xlu0 %1102
        %vm1105 = vcmask 261120
        %v1107 = vsel %vm1105, %v1077, 0
        %v1110 = vsel %vm1105, %v1078, 0
        %v1113 = vsel %vm1105, %v1079, 0
        %v1116 = vsel %vm1105, %v1080, 0
        %1118 = vmatprep.subr.mxu0 %v1062
        %1119 = vmatpush1.msra.mxu0 %v1061
        %1120 = vmatprep.subr.mxu0 %v1066
        %1121 = vmatpush1.msra.mxu0 %v1065
        %1122 = vmatprep.subr.mxu0 %v1070
        %1123 = vmatpush1.msra.mxu0 %v1069
        %1124 = vmatprep.subr.mxu0 %v1074
        %1125 = vmatpush1.msra.mxu0 %v1073
        %1126 = vmatprep.subr.mxu0 0.0
        %1127 = vmatpush1.msra.mxu0 0.0
        %1128 = vmatprep.subr.mxu0 0.0
        %1129 = vmatpush1.msra.mxu0 0.0
        %1130 = vmatprep.subr.mxu0 0.0
        %1131 = vmatpush1.msra.mxu0 0.0
        %1132 = vmatprep.subr.mxu0 0.0
        %1133 = vmatpush1.msra.mxu0 0.0
        %1134 = vmatprep.subr.mxu0 0.0
        %1135 = vmatpush1.msra.mxu0 0.0
        %1136 = vmatprep.subr.mxu0 0.0
        %1137 = vmatpush1.msra.mxu0 0.0
        %1138 = vmatprep.subr.mxu0 0.0
        %1139 = vmatpush1.msra.mxu0 0.0
        %1140 = vmatprep.subr.mxu0 0.0
        %1141 = vmatpush1.msra.mxu0 0.0
        %1142 = vmatprep.subr.mxu0 0.0
        %1143 = vmatpush1.msra.mxu0 0.0
        %1144 = vmatprep.subr.mxu0 0.0
        %1145 = vmatpush1.msra.mxu0 0.0
        %1146 = vmatprep.subr.mxu0 0.0
        %1147 = vmatpush1.msra.mxu0 0.0
        %1148 = vmatprep.subr.mxu0 0.0
        %1149 = vmatpush1.msra.mxu0 0.0
        %1150 = vmatprep.subr.mxu0 0.0
        %1151 = vmatpush1.msra.mxu0 0.0
        %1152 = vmatprep.subr.mxu0 0.0
        %1153 = vmatpush1.msra.mxu0 0.0
        %1154 = vmatprep.subr.mxu0 0.0
        %1155 = vmatpush1.msra.mxu0 0.0
        %1156 = vmatprep.subr.mxu0 0.0
        %1157 = vmatpush1.msra.mxu0 0.0
        %1158 = vmatprep.subr.mxu0 0.0
        %1159 = vmatpush1.msra.mxu0 0.0
        %1160 = vmatprep.subr.mxu0 0.0
        %1161 = vmatpush1.msra.mxu0 0.0
        %1162 = vmatprep.subr.mxu0 0.0
        %1163 = vmatpush1.msra.mxu0 0.0
        %1164 = vmatprep.subr.mxu0 0.0
        %1165 = vmatpush1.msra.mxu0 0.0
        %1166 = vmatprep.subr.mxu0 0.0
        %1167 = vmatpush1.msra.mxu0 0.0
        %1168 = vmatprep.subr.mxu0 0.0
        %1169 = vmatpush1.msra.mxu0 0.0
        %1170 = vmatprep.subr.mxu0 0.0
        %1171 = vmatpush1.msra.mxu0 0.0
        %1172 = vmatprep.subr.mxu0 0.0
        %1173 = vmatpush1.msra.mxu0 0.0
        %1174 = vmatprep.subr.mxu0 0.0
        %1175 = vmatpush1.msra.mxu0 0.0
        %1176 = vmatprep.subr.mxu0 0.0
        %1177 = vmatpush1.msra.mxu0 0.0
        %1178 = vmatprep.subr.mxu0 0.0
        %1179 = vmatpush1.msra.mxu0 0.0
        %1180 = vmatprep.subr.mxu0 0.0
        %1181 = vmatpush1.msra.mxu0 0.0
        %1182 = vmatprep.mubr.f32.mxu0 0.0
        %1183 = vmatmul.mubr.f32.gmra.mrb[0].mxu0 %v1107
        %v1184 = vpop.f32.mrb[0].mxu0
        %v1185 = vadd.f32 %v1088, %v1184
        %v1186 = vpop.f32.mrb[0].mxu0
        %v1187 = vadd.f32 %v1088, %v1186
        %1188 = vmatprep.mubr.f32.mxu0 0.0
        %1189 = vmatmul.mubr.f32.gmra.mrb[0].mxu0 %v1110
        %v1190 = vpop.f32.mrb[0].mxu0
        %v1191 = vadd.f32 %v1093, %v1190
        %v1192 = vpop.f32.mrb[0].mxu0
        %v1193 = vadd.f32 %v1093, %v1192
        %1194 = vmatprep.mubr.f32.mxu0 0.0
        %1195 = vmatmul.mubr.f32.gmra.mrb[0].mxu0 %v1113
        %v1196 = vpop.f32.mrb[0].mxu0
        %v1197 = vadd.f32 %v1098, %v1196
        %v1198 = vpop.f32.mrb[0].mxu0
        %v1199 = vadd.f32 %v1098, %v1198
        %1200 = vmatprep.mubr.f32.mxu0 0.0
        %1201 = vmatmul.mubr.f32.gmra.mrb[0].mxu0 %v1116
        %v1202 = vpop.f32.mrb[0].mxu0
        %v1203 = vadd.f32 %v1103, %v1202
        %v1204 = vpop.f32.mrb[0].mxu0
        %v1205 = vadd.f32 %v1103, %v1204
        %1206 = vdwg.mxu0
        %1207 = vmatprep.subr.mxu0 %v1064
        %1208 = vmatpush1.msra.mxu0 %v1063
        %1209 = vmatprep.subr.mxu0 %v1068
        %1210 = vmatpush1.msra.mxu0 %v1067
        %1211 = vmatprep.subr.mxu0 %v1072
        %1212 = vmatpush1.msra.mxu0 %v1071
        %1213 = vmatprep.subr.mxu0 %v1076
        %1214 = vmatpush1.msra.mxu0 %v1075
        %1215 = vmatprep.subr.mxu0 0.0
        %1216 = vmatpush1.msra.mxu0 0.0
        %1217 = vmatprep.subr.mxu0 0.0
        %1218 = vmatpush1.msra.mxu0 0.0
        %1219 = vmatprep.subr.mxu0 0.0
        %1220 = vmatpush1.msra.mxu0 0.0
        %1221 = vmatprep.subr.mxu0 0.0
        %1222 = vmatpush1.msra.mxu0 0.0
        %1223 = vmatprep.subr.mxu0 0.0
        %1224 = vmatpush1.msra.mxu0 0.0
        %1225 = vmatprep.subr.mxu0 0.0
        %1226 = vmatpush1.msra.mxu0 0.0
        %1227 = vmatprep.subr.mxu0 0.0
        %1228 = vmatpush1.msra.mxu0 0.0
        %1229 = vmatprep.subr.mxu0 0.0
        %1230 = vmatpush1.msra.mxu0 0.0
        %1231 = vmatprep.subr.mxu0 0.0
        %1232 = vmatpush1.msra.mxu0 0.0
        %1233 = vmatprep.subr.mxu0 0.0
        %1234 = vmatpush1.msra.mxu0 0.0
        %1235 = vmatprep.subr.mxu0 0.0
        %1236 = vmatpush1.msra.mxu0 0.0
        %1237 = vmatprep.subr.mxu0 0.0
        %1238 = vmatpush1.msra.mxu0 0.0
        %1239 = vmatprep.subr.mxu0 0.0
        %1240 = vmatpush1.msra.mxu0 0.0
        %1241 = vmatprep.subr.mxu0 0.0
        %1242 = vmatpush1.msra.mxu0 0.0
        %1243 = vmatprep.subr.mxu0 0.0
        %1244 = vmatpush1.msra.mxu0 0.0
        %1245 = vmatprep.subr.mxu0 0.0
        %1246 = vmatpush1.msra.mxu0 0.0
        %1247 = vmatprep.subr.mxu0 0.0
        %1248 = vmatpush1.msra.mxu0 0.0
        %1249 = vmatprep.subr.mxu0 0.0
        %1250 = vmatpush1.msra.mxu0 0.0
        %1251 = vmatprep.subr.mxu0 0.0
        %1252 = vmatpush1.msra.mxu0 0.0
        %1253 = vmatprep.subr.mxu0 0.0
        %1254 = vmatpush1.msra.mxu0 0.0
        %1255 = vmatprep.subr.mxu0 0.0
        %1256 = vmatpush1.msra.mxu0 0.0
        %1257 = vmatprep.subr.mxu0 0.0
        %1258 = vmatpush1.msra.mxu0 0.0
        %1259 = vmatprep.subr.mxu0 0.0
        %1260 = vmatpush1.msra.mxu0 0.0
        %1261 = vmatprep.subr.mxu0 0.0
        %1262 = vmatpush1.msra.mxu0 0.0
        %1263 = vmatprep.subr.mxu0 0.0
        %1264 = vmatpush1.msra.mxu0 0.0
        %1265 = vmatprep.subr.mxu0 0.0
        %1266 = vmatpush1.msra.mxu0 0.0
        %1267 = vmatprep.subr.mxu0 0.0
        %1268 = vmatpush1.msra.mxu0 0.0
        %1269 = vmatprep.subr.mxu0 0.0
        %1270 = vmatpush1.msra.mxu0 0.0
        %1271 = vmatprep.mubr.f32.mxu0 0.0
        %1272 = vmatmul.mubr.f32.gmra.mrb[0].mxu0 %v1107
        %v1273 = vpop.f32.mrb[0].mxu0
        %v1274 = vadd.f32 %v1088, %v1273
        %v1275 = vpop.f32.mrb[0].mxu0
        %v1276 = vadd.f32 %v1088, %v1275
        %1277 = vmatprep.mubr.f32.mxu0 0.0
        %1278 = vmatmul.mubr.f32.gmra.mrb[0].mxu0 %v1110
        %v1279 = vpop.f32.mrb[0].mxu0
        %v1280 = vadd.f32 %v1093, %v1279
        %v1281 = vpop.f32.mrb[0].mxu0
        %v1282 = vadd.f32 %v1093, %v1281
        %1283 = vmatprep.mubr.f32.mxu0 0.0
        %1284 = vmatmul.mubr.f32.gmra.mrb[0].mxu0 %v1113
        %v1285 = vpop.f32.mrb[0].mxu0
        %v1286 = vadd.f32 %v1098, %v1285
        %v1287 = vpop.f32.mrb[0].mxu0
        %v1288 = vadd.f32 %v1098, %v1287
        %1289 = vmatprep.mubr.f32.mxu0 0.0
        %1290 = vmatmul.mubr.f32.gmra.mrb[0].mxu0 %v1116
        %v1291 = vpop.f32.mrb[0].mxu0
        %v1292 = vadd.f32 %v1103, %v1291
        %v1293 = vpop.f32.mrb[0].mxu0
        %v1294 = vadd.f32 %v1103, %v1293
        %1295 = vdwg.mxu0
        %v1296 = vmul.f32 %v1185, 100.0
        %v1297 = vmul.f32 %v1187, 100.0
        %v1298 = vmul.f32 %v1274, 100.0
        %v1299 = vmul.f32 %v1276, 100.0
        %v1300 = vmul.f32 %v1191, 100.0
        %v1301 = vmul.f32 %v1193, 100.0
        %v1302 = vmul.f32 %v1280, 100.0
        %v1303 = vmul.f32 %v1282, 100.0
        %v1304 = vmul.f32 %v1197, 100.0
        %v1305 = vmul.f32 %v1199, 100.0
        %v1306 = vmul.f32 %v1286, 100.0
        %v1307 = vmul.f32 %v1288, 100.0
        %v1308 = vmul.f32 %v1203, 100.0
        %v1309 = vmul.f32 %v1205, 100.0
        %v1310 = vmul.f32 %v1292, 100.0
        %v1311 = vmul.f32 %v1294, 100.0
        %v1312 = vand.u32 2147483647, %v1296
        %v1313 = vand.u32 2147483647, %v1297
        %v1314 = vand.u32 2147483647, %v1298
        %v1315 = vand.u32 2147483647, %v1299
        %v1316 = vand.u32 2147483647, %v1300
        %v1317 = vand.u32 2147483647, %v1301
        %v1318 = vand.u32 2147483647, %v1302
        %v1319 = vand.u32 2147483647, %v1303
        %v1320 = vand.u32 2147483647, %v1304
        %v1321 = vand.u32 2147483647, %v1305
        %v1322 = vand.u32 2147483647, %v1306
        %v1323 = vand.u32 2147483647, %v1307
        %v1324 = vand.u32 2147483647, %v1308
        %v1325 = vand.u32 2147483647, %v1309
        %v1326 = vand.u32 2147483647, %v1310
        %v1327 = vand.u32 2147483647, %v1311
        %v1328 = vsub.f32 0.0, %v1312
        %v1329 = vsub.f32 0.0, %v1313
        %v1330 = vsub.f32 0.0, %v1314
        %v1331 = vsub.f32 0.0, %v1315
        %v1332 = vsub.f32 0.0, %v1316
        %v1333 = vsub.f32 0.0, %v1317
        %v1334 = vsub.f32 0.0, %v1318
        %v1335 = vsub.f32 0.0, %v1319
        %v1336 = vsub.f32 0.0, %v1320
        %v1337 = vsub.f32 0.0, %v1321
        %v1338 = vsub.f32 0.0, %v1322
        %v1339 = vsub.f32 0.0, %v1323
        %v1340 = vsub.f32 0.0, %v1324
        %v1341 = vsub.f32 0.0, %v1325
        %v1342 = vsub.f32 0.0, %v1326
        %v1343 = vsub.f32 0.0, %v1327
        %v1344 = vmul.f32 %v1328, 1.442695
        %v1345 = vpow.pop %v1344
        %v1346 = vmul.f32 %v1329, 1.442695
        %v1347 = vpow.pop %v1346
        %v1348 = vmul.f32 %v1330, 1.442695
        %v1349 = vpow.pop %v1348
        %v1350 = vmul.f32 %v1331, 1.442695
        %v1351 = vpow.pop %v1350
        %v1352 = vmul.f32 %v1332, 1.442695
        %v1353 = vpow.pop %v1352
        %v1354 = vmul.f32 %v1333, 1.442695
        %v1355 = vpow.pop %v1354
        %v1356 = vmul.f32 %v1334, 1.442695
        %v1357 = vpow.pop %v1356
        %v1358 = vmul.f32 %v1335, 1.442695
        %v1359 = vpow.pop %v1358
        %v1360 = vmul.f32 %v1336, 1.442695
        %v1361 = vpow.pop %v1360
        %v1362 = vmul.f32 %v1337, 1.442695
        %v1363 = vpow.pop %v1362
        %v1364 = vmul.f32 %v1338, 1.442695
        %v1365 = vpow.pop %v1364
        %v1366 = vmul.f32 %v1339, 1.442695
        %v1367 = vpow.pop %v1366
        %v1368 = vmul.f32 %v1340, 1.442695
        %v1369 = vpow.pop %v1368
        %v1370 = vmul.f32 %v1341, 1.442695
        %v1371 = vpow.pop %v1370
        %v1372 = vmul.f32 %v1342, 1.442695
        %v1373 = vpow.pop %v1372
        %v1374 = vmul.f32 %v1343, 1.442695
        %v1375 = vpow.pop %v1374
        %v1376 = vmul.f32 %v1345, 2.0
        %v1377 = vmul.f32 %v1347, 2.0
        %v1378 = vmul.f32 %v1349, 2.0
        %v1379 = vmul.f32 %v1351, 2.0
        %v1380 = vmul.f32 %v1353, 2.0
        %v1381 = vmul.f32 %v1355, 2.0
        %v1382 = vmul.f32 %v1357, 2.0
        %v1383 = vmul.f32 %v1359, 2.0
        %v1384 = vmul.f32 %v1361, 2.0
        %v1385 = vmul.f32 %v1363, 2.0
        %v1386 = vmul.f32 %v1365, 2.0
        %v1387 = vmul.f32 %v1367, 2.0
        %v1388 = vmul.f32 %v1369, 2.0
        %v1389 = vmul.f32 %v1371, 2.0
        %v1390 = vmul.f32 %v1373, 2.0
        %v1391 = vmul.f32 %v1375, 2.0
        %v1392 = vsub.f32 %v1376, 1.0
        %v1393 = vsub.f32 %v1377, 1.0
        %v1394 = vsub.f32 %v1378, 1.0
        %v1395 = vsub.f32 %v1379, 1.0
        %v1396 = vsub.f32 %v1380, 1.0
        %v1397 = vsub.f32 %v1381, 1.0
        %v1398 = vsub.f32 %v1382, 1.0
        %v1399 = vsub.f32 %v1383, 1.0
        %v1400 = vsub.f32 %v1384, 1.0
        %v1401 = vsub.f32 %v1385, 1.0
        %v1402 = vsub.f32 %v1386, 1.0
        %v1403 = vsub.f32 %v1387, 1.0
        %v1404 = vsub.f32 %v1388, 1.0
        %v1405 = vsub.f32 %v1389, 1.0
        %v1406 = vsub.f32 %v1390, 1.0
        %v1407 = vsub.f32 %v1391, 1.0
        %v1408 = vmul.f32 %v1392, 7.1528166e-06
        %v1409 = vmul.f32 %v1393, 7.1528166e-06
        %v1410 = vmul.f32 %v1394, 7.1528166e-06
        %v1411 = vmul.f32 %v1395, 7.1528166e-06
        %v1412 = vmul.f32 %v1396, 7.1528166e-06
        %v1413 = vmul.f32 %v1397, 7.1528166e-06
        %v1414 = vmul.f32 %v1398, 7.1528166e-06
        %v1415 = vmul.f32 %v1399, 7.1528166e-06
        %v1416 = vmul.f32 %v1400, 7.1528166e-06
        %v1417 = vmul.f32 %v1401, 7.1528166e-06
        %v1418 = vmul.f32 %v1402, 7.1528166e-06
        %v1419 = vmul.f32 %v1403, 7.1528166e-06
        %v1420 = vmul.f32 %v1404, 7.1528166e-06
        %v1421 = vmul.f32 %v1405, 7.1528166e-06
        %v1422 = vmul.f32 %v1406, 7.1528166e-06
        %v1423 = vmul.f32 %v1407, 7.1528166e-06
        %v1424 = vadd.f32 %v1408, -2.4015302e-05
        %v1425 = vadd.f32 %v1409, -2.4015302e-05
        %v1426 = vadd.f32 %v1410, -2.4015302e-05
        %v1427 = vadd.f32 %v1411, -2.4015302e-05
        %v1428 = vadd.f32 %v1412, -2.4015302e-05
        %v1429 = vadd.f32 %v1413, -2.4015302e-05
        %v1430 = vadd.f32 %v1414, -2.4015302e-05
        %v1431 = vadd.f32 %v1415, -2.4015302e-05
        %v1432 = vadd.f32 %v1416, -2.4015302e-05
        %v1433 = vadd.f32 %v1417, -2.4015302e-05
        %v1434 = vadd.f32 %v1418, -2.4015302e-05
        %v1435 = vadd.f32 %v1419, -2.4015302e-05
        %v1436 = vadd.f32 %v1420, -2.4015302e-05
        %v1437 = vadd.f32 %v1421, -2.4015302e-05
        %v1438 = vadd.f32 %v1422, -2.4015302e-05
        %v1439 = vadd.f32 %v1423, -2.4015302e-05
        %v1440 = vmul.f32 %v1424, %v1392
        %v1441 = vmul.f32 %v1425, %v1393
        %v1442 = vmul.f32 %v1426, %v1394
        %v1443 = vmul.f32 %v1427, %v1395
        %v1444 = vmul.f32 %v1428, %v1396
        %v1445 = vmul.f32 %v1429, %v1397
        %v1446 = vmul.f32 %v1430, %v1398
        %v1447 = vmul.f32 %v1431, %v1399
        %v1448 = vmul.f32 %v1432, %v1400
        %v1449 = vmul.f32 %v1433, %v1401
        %v1450 = vmul.f32 %v1434, %v1402
        %v1451 = vmul.f32 %v1435, %v1403
        %v1452 = vmul.f32 %v1436, %v1404
        %v1453 = vmul.f32 %v1437, %v1405
        %v1454 = vmul.f32 %v1438, %v1406
        %v1455 = vmul.f32 %v1439, %v1407
        %v1456 = vadd.f32 %v1440, 6.3934975e-05
        %v1457 = vadd.f32 %v1441, 6.3934975e-05
        %v1458 = vadd.f32 %v1442, 6.3934975e-05
        %v1459 = vadd.f32 %v1443, 6.3934975e-05
        %v1460 = vadd.f32 %v1444, 6.3934975e-05
        %v1461 = vadd.f32 %v1445, 6.3934975e-05
        %v1462 = vadd.f32 %v1446, 6.3934975e-05
        %v1463 = vadd.f32 %v1447, 6.3934975e-05
        %v1464 = vadd.f32 %v1448, 6.3934975e-05
        %v1465 = vadd.f32 %v1449, 6.3934975e-05
        %v1466 = vadd.f32 %v1450, 6.3934975e-05
        %v1467 = vadd.f32 %v1451, 6.3934975e-05
        %v1468 = vadd.f32 %v1452, 6.3934975e-05
        %v1469 = vadd.f32 %v1453, 6.3934975e-05
        %v1470 = vadd.f32 %v1454, 6.3934975e-05
        %v1471 = vadd.f32 %v1455, 6.3934975e-05
        %v1472 = vmul.f32 %v1456, %v1392
        %v1473 = vmul.f32 %v1457, %v1393
        %v1474 = vmul.f32 %v1458, %v1394
        %v1475 = vmul.f32 %v1459, %v1395
        %v1476 = vmul.f32 %v1460, %v1396
        %v1477 = vmul.f32 %v1461, %v1397
        %v1478 = vmul.f32 %v1462, %v1398
        %v1479 = vmul.f32 %v1463, %v1399
        %v1480 = vmul.f32 %v1464, %v1400
        %v1481 = vmul.f32 %v1465, %v1401
        %v1482 = vmul.f32 %v1466, %v1402
        %v1483 = vmul.f32 %v1467, %v1403
        %v1484 = vmul.f32 %v1468, %v1404
        %v1485 = vmul.f32 %v1469, %v1405
        %v1486 = vmul.f32 %v1470, %v1406
        %v1487 = vmul.f32 %v1471, %v1407
        %v1488 = vadd.f32 %v1472, -0.00022406426
        %v1489 = vadd.f32 %v1473, -0.00022406426
        %v1490 = vadd.f32 %v1474, -0.00022406426
        %v1491 = vadd.f32 %v1475, -0.00022406426
        %v1492 = vadd.f32 %v1476, -0.00022406426
        %v1493 = vadd.f32 %v1477, -0.00022406426
        %v1494 = vadd.f32 %v1478, -0.00022406426
        %v1495 = vadd.f32 %v1479, -0.00022406426
        %v1496 = vadd.f32 %v1480, -0.00022406426
        %v1497 = vadd.f32 %v1481, -0.00022406426
        %v1498 = vadd.f32 %v1482, -0.00022406426
        %v1499 = vadd.f32 %v1483, -0.00022406426
        %v1500 = vadd.f32 %v1484, -0.00022406426
        %v1501 = vadd.f32 %v1485, -0.00022406426
        %v1502 = vadd.f32 %v1486, -0.00022406426
        %v1503 = vadd.f32 %v1487, -0.00022406426
        %v1504 = vmul.f32 %v1488, %v1392
        %v1505 = vmul.f32 %v1489, %v1393
        %v1506 = vmul.f32 %v1490, %v1394
        %v1507 = vmul.f32 %v1491, %v1395
        %v1508 = vmul.f32 %v1492, %v1396
        %v1509 = vmul.f32 %v1493, %v1397
        %v1510 = vmul.f32 %v1494, %v1398
        %v1511 = vmul.f32 %v1495, %v1399
        %v1512 = vmul.f32 %v1496, %v1400
        %v1513 = vmul.f32 %v1497, %v1401
        %v1514 = vmul.f32 %v1498, %v1402
        %v1515 = vmul.f32 %v1499, %v1403
        %v1516 = vmul.f32 %v1500, %v1404
        %v1517 = vmul.f32 %v1501, %v1405
        %v1518 = vmul.f32 %v1502, %v1406
        %v1519 = vmul.f32 %v1503, %v1407
        %v1520 = vadd.f32 %v1504, 0.0008235513
        %v1521 = vadd.f32 %v1505, 0.0008235513
        %v1522 = vadd.f32 %v1506, 0.0008235513
        %v1523 = vadd.f32 %v1507, 0.0008235513
        %v1524 = vadd.f32 %v1508, 0.0008235513
        %v1525 = vadd.f32 %v1509, 0.0008235513
        %v1526 = vadd.f32 %v1510, 0.0008235513
        %v1527 = vadd.f32 %v1511, 0.0008235513
        %v1528 = vadd.f32 %v1512, 0.0008235513
        %v1529 = vadd.f32 %v1513, 0.0008235513
        %v1530 = vadd.f32 %v1514, 0.0008235513
        %v1531 = vadd.f32 %v1515, 0.0008235513
        %v1532 = vadd.f32 %v1516, 0.0008235513
        %v1533 = vadd.f32 %v1517, 0.0008235513
        %v1534 = vadd.f32 %v1518, 0.0008235513
        %v1535 = vadd.f32 %v1519, 0.0008235513
        %v1536 = vmul.f32 %v1520, %v1392
        %v1537 = vmul.f32 %v1521, %v1393
        %v1538 = vmul.f32 %v1522, %v1394
        %v1539 = vmul.f32 %v1523, %v1395
        %v1540 = vmul.f32 %v1524, %v1396
        %v1541 = vmul.f32 %v1525, %v1397
        %v1542 = vmul.f32 %v1526, %v1398
        %v1543 = vmul.f32 %v1527, %v1399
        %v1544 = vmul.f32 %v1528, %v1400
        %v1545 = vmul.f32 %v1529, %v1401
        %v1546 = vmul.f32 %v1530, %v1402
        %v1547 = vmul.f32 %v1531, %v1403
        %v1548 = vmul.f32 %v1532, %v1404
        %v1549 = vmul.f32 %v1533, %v1405
        %v1550 = vmul.f32 %v1534, %v1406
        %v1551 = vmul.f32 %v1535, %v1407
        %v1552 = vadd.f32 %v1536, -0.0030880838
        %v1553 = vadd.f32 %v1537, -0.0030880838
        %v1554 = vadd.f32 %v1538, -0.0030880838
        %v1555 = vadd.f32 %v1539, -0.0030880838
        %v1556 = vadd.f32 %v1540, -0.0030880838
        %v1557 = vadd.f32 %v1541, -0.0030880838
        %v1558 = vadd.f32 %v1542, -0.0030880838
        %v1559 = vadd.f32 %v1543, -0.0030880838
        %v1560 = vadd.f32 %v1544, -0.0030880838
        %v1561 = vadd.f32 %v1545, -0.0030880838
        %v1562 = vadd.f32 %v1546, -0.0030880838
        %v1563 = vadd.f32 %v1547, -0.0030880838
        %v1564 = vadd.f32 %v1548, -0.0030880838
        %v1565 = vadd.f32 %v1549, -0.0030880838
        %v1566 = vadd.f32 %v1550, -0.0030880838
        %v1567 = vadd.f32 %v1551, -0.0030880838
        %v1568 = vmul.f32 %v1552, %v1392
        %v1569 = vmul.f32 %v1553, %v1393
        %v1570 = vmul.f32 %v1554, %v1394
        %v1571 = vmul.f32 %v1555, %v1395
        %v1572 = vmul.f32 %v1556, %v1396
        %v1573 = vmul.f32 %v1557, %v1397
        %v1574 = vmul.f32 %v1558, %v1398
        %v1575 = vmul.f32 %v1559, %v1399
        %v1576 = vmul.f32 %v1560, %v1400
        %v1577 = vmul.f32 %v1561, %v1401
        %v1578 = vmul.f32 %v1562, %v1402
        %v1579 = vmul.f32 %v1563, %v1403
        %v1580 = vmul.f32 %v1564, %v1404
        %v1581 = vmul.f32 %v1565, %v1405
        %v1582 = vmul.f32 %v1566, %v1406
        %v1583 = vmul.f32 %v1567, %v1407
        %v1584 = vadd.f32 %v1568, 0.012345615
        %v1585 = vadd.f32 %v1569, 0.012345615
        %v1586 = vadd.f32 %v1570, 0.012345615
        %v1587 = vadd.f32 %v1571, 0.012345615
        %v1588 = vadd.f32 %v1572, 0.012345615
        %v1589 = vadd.f32 %v1573, 0.012345615
        %v1590 = vadd.f32 %v1574, 0.012345615
        %v1591 = vadd.f32 %v1575, 0.012345615
        %v1592 = vadd.f32 %v1576, 0.012345615
        %v1593 = vadd.f32 %v1577, 0.012345615
        %v1594 = vadd.f32 %v1578, 0.012345615
        %v1595 = vadd.f32 %v1579, 0.012345615
        %v1596 = vadd.f32 %v1580, 0.012345615
        %v1597 = vadd.f32 %v1581, 0.012345615
        %v1598 = vadd.f32 %v1582, 0.012345615
        %v1599 = vadd.f32 %v1583, 0.012345615
        %v1600 = vmul.f32 %v1584, %v1392
        %v1601 = vmul.f32 %v1585, %v1393
        %v1602 = vmul.f32 %v1586, %v1394
        %v1603 = vmul.f32 %v1587, %v1395
        %v1604 = vmul.f32 %v1588, %v1396
        %v1605 = vmul.f32 %v1589, %v1397
        %v1606 = vmul.f32 %v1590, %v1398
        %v1607 = vmul.f32 %v1591, %v1399
        %v1608 = vmul.f32 %v1592, %v1400
        %v1609 = vmul.f32 %v1593, %v1401
        %v1610 = vmul.f32 %v1594, %v1402
        %v1611 = vmul.f32 %v1595, %v1403
        %v1612 = vmul.f32 %v1596, %v1404
        %v1613 = vmul.f32 %v1597, %v1405
        %v1614 = vmul.f32 %v1598, %v1406
        %v1615 = vmul.f32 %v1599, %v1407
        %v1616 = vadd.f32 %v1600, -0.055555344
        %v1617 = vadd.f32 %v1601, -0.055555344
        %v1618 = vadd.f32 %v1602, -0.055555344
        %v1619 = vadd.f32 %v1603, -0.055555344
        %v1620 = vadd.f32 %v1604, -0.055555344
        %v1621 = vadd.f32 %v1605, -0.055555344
        %v1622 = vadd.f32 %v1606, -0.055555344
        %v1623 = vadd.f32 %v1607, -0.055555344
        %v1624 = vadd.f32 %v1608, -0.055555344
        %v1625 = vadd.f32 %v1609, -0.055555344
        %v1626 = vadd.f32 %v1610, -0.055555344
        %v1627 = vadd.f32 %v1611, -0.055555344
        %v1628 = vadd.f32 %v1612, -0.055555344
        %v1629 = vadd.f32 %v1613, -0.055555344
        %v1630 = vadd.f32 %v1614, -0.055555344
        %v1631 = vadd.f32 %v1615, -0.055555344
        %v1632 = vmul.f32 %v1616, %v1392
        %v1633 = vmul.f32 %v1617, %v1393
        %v1634 = vmul.f32 %v1618, %v1394
        %v1635 = vmul.f32 %v1619, %v1395
        %v1636 = vmul.f32 %v1620, %v1396
        %v1637 = vmul.f32 %v1621, %v1397
        %v1638 = vmul.f32 %v1622, %v1398
        %v1639 = vmul.f32 %v1623, %v1399
        %v1640 = vmul.f32 %v1624, %v1400
        %v1641 = vmul.f32 %v1625, %v1401
        %v1642 = vmul.f32 %v1626, %v1402
        %v1643 = vmul.f32 %v1627, %v1403
        %v1644 = vmul.f32 %v1628, %v1404
        %v1645 = vmul.f32 %v1629, %v1405
        %v1646 = vmul.f32 %v1630, %v1406
        %v1647 = vmul.f32 %v1631, %v1407
        %v1648 = vadd.f32 %v1632, 0.33333334
        %v1649 = vadd.f32 %v1633, 0.33333334
        %v1650 = vadd.f32 %v1634, 0.33333334
        %v1651 = vadd.f32 %v1635, 0.33333334
        %v1652 = vadd.f32 %v1636, 0.33333334
        %v1653 = vadd.f32 %v1637, 0.33333334
        %v1654 = vadd.f32 %v1638, 0.33333334
        %v1655 = vadd.f32 %v1639, 0.33333334
        %v1656 = vadd.f32 %v1640, 0.33333334
        %v1657 = vadd.f32 %v1641, 0.33333334
        %v1658 = vadd.f32 %v1642, 0.33333334
        %v1659 = vadd.f32 %v1643, 0.33333334
        %v1660 = vadd.f32 %v1644, 0.33333334
        %v1661 = vadd.f32 %v1645, 0.33333334
        %v1662 = vadd.f32 %v1646, 0.33333334
        %v1663 = vadd.f32 %v1647, 0.33333334
        %v1664 = vmul.f32 %v1648, %v1392
        %v1665 = vmul.f32 %v1649, %v1393
        %v1666 = vmul.f32 %v1650, %v1394
        %v1667 = vmul.f32 %v1651, %v1395
        %v1668 = vmul.f32 %v1652, %v1396
        %v1669 = vmul.f32 %v1653, %v1397
        %v1670 = vmul.f32 %v1654, %v1398
        %v1671 = vmul.f32 %v1655, %v1399
        %v1672 = vmul.f32 %v1656, %v1400
        %v1673 = vmul.f32 %v1657, %v1401
        %v1674 = vmul.f32 %v1658, %v1402
        %v1675 = vmul.f32 %v1659, %v1403
        %v1676 = vmul.f32 %v1660, %v1404
        %v1677 = vmul.f32 %v1661, %v1405
        %v1678 = vmul.f32 %v1662, %v1406
        %v1679 = vmul.f32 %v1663, %v1407
        %v1680 = vadd.f32 %v1664, 0.4054651
        %v1681 = vadd.f32 %v1665, 0.4054651
        %v1682 = vadd.f32 %v1666, 0.4054651
        %v1683 = vadd.f32 %v1667, 0.4054651
        %v1684 = vadd.f32 %v1668, 0.4054651
        %v1685 = vadd.f32 %v1669, 0.4054651
        %v1686 = vadd.f32 %v1670, 0.4054651
        %v1687 = vadd.f32 %v1671, 0.4054651
        %v1688 = vadd.f32 %v1672, 0.4054651
        %v1689 = vadd.f32 %v1673, 0.4054651
        %v1690 = vadd.f32 %v1674, 0.4054651
        %v1691 = vadd.f32 %v1675, 0.4054651
        %v1692 = vadd.f32 %v1676, 0.4054651
        %v1693 = vadd.f32 %v1677, 0.4054651
        %v1694 = vadd.f32 %v1678, 0.4054651
        %v1695 = vadd.f32 %v1679, 0.4054651
        %v1696 = vmax.f32 %v1296, 0.0
        %v1697 = vmax.f32 %v1297, 0.0
        %v1698 = vmax.f32 %v1298, 0.0
        %v1699 = vmax.f32 %v1299, 0.0
        %v1700 = vmax.f32 %v1300, 0.0
        %v1701 = vmax.f32 %v1301, 0.0
        %v1702 = vmax.f32 %v1302, 0.0
        %v1703 = vmax.f32 %v1303, 0.0
        %v1704 = vmax.f32 %v1304, 0.0
        %v1705 = vmax.f32 %v1305, 0.0
        %v1706 = vmax.f32 %v1306, 0.0
        %v1707 = vmax.f32 %v1307, 0.0
        %v1708 = vmax.f32 %v1308, 0.0
        %v1709 = vmax.f32 %v1309, 0.0
        %v1710 = vmax.f32 %v1310, 0.0
        %v1711 = vmax.f32 %v1311, 0.0
        %v1712 = vadd.f32 %v1696, %v1680
        %v1713 = vadd.f32 %v1697, %v1681
        %v1714 = vadd.f32 %v1698, %v1682
        %v1715 = vadd.f32 %v1699, %v1683
        %v1716 = vadd.f32 %v1700, %v1684
        %v1717 = vadd.f32 %v1701, %v1685
        %v1718 = vadd.f32 %v1702, %v1686
        %v1719 = vadd.f32 %v1703, %v1687
        %v1720 = vadd.f32 %v1704, %v1688
        %v1721 = vadd.f32 %v1705, %v1689
        %v1722 = vadd.f32 %v1706, %v1690
        %v1723 = vadd.f32 %v1707, %v1691
        %v1724 = vadd.f32 %v1708, %v1692
        %v1725 = vadd.f32 %v1709, %v1693
        %v1726 = vadd.f32 %v1710, %v1694
        %v1727 = vadd.f32 %v1711, %v1695
        %v1728 = vmul.f32 %v1712, 0.01
        %v1729 = vmul.f32 %v1713, 0.01
        %v1730 = vmul.f32 %v1714, 0.01
        %v1731 = vmul.f32 %v1715, 0.01
        %v1732 = vmul.f32 %v1716, 0.01
        %v1733 = vmul.f32 %v1717, 0.01
        %v1734 = vmul.f32 %v1718, 0.01
        %v1735 = vmul.f32 %v1719, 0.01
        %v1736 = vmul.f32 %v1720, 0.01
        %v1737 = vmul.f32 %v1721, 0.01
        %v1738 = vmul.f32 %v1722, 0.01
        %v1739 = vmul.f32 %v1723, 0.01
        %v1740 = vmul.f32 %v1724, 0.01
        %v1741 = vmul.f32 %v1725, 0.01
        %v1742 = vmul.f32 %v1726, 0.01
        %v1743 = vmul.f32 %v1727, 0.01
        %vm1744 = vcmp.gt.f32.partialorder %v1296, 20.0
        %vm1745 = vcmp.gt.f32.partialorder %v1297, 20.0
        %vm1746 = vcmp.gt.f32.partialorder %v1298, 20.0
        %vm1747 = vcmp.gt.f32.partialorder %v1299, 20.0
        %vm1748 = vcmp.gt.f32.partialorder %v1300, 20.0
        %vm1749 = vcmp.gt.f32.partialorder %v1301, 20.0
        %vm1750 = vcmp.gt.f32.partialorder %v1302, 20.0
        %vm1751 = vcmp.gt.f32.partialorder %v1303, 20.0
        %vm1752 = vcmp.gt.f32.partialorder %v1304, 20.0
        %vm1753 = vcmp.gt.f32.partialorder %v1305, 20.0
        %vm1754 = vcmp.gt.f32.partialorder %v1306, 20.0
        %vm1755 = vcmp.gt.f32.partialorder %v1307, 20.0
        %vm1756 = vcmp.gt.f32.partialorder %v1308, 20.0
        %vm1757 = vcmp.gt.f32.partialorder %v1309, 20.0
        %vm1758 = vcmp.gt.f32.partialorder %v1310, 20.0
        %vm1759 = vcmp.gt.f32.partialorder %v1311, 20.0
        %v1760 = vsel %vm1744, %v1185, %v1728
        %v1761 = vsel %vm1745, %v1187, %v1729
        %v1762 = vsel %vm1746, %v1274, %v1730
        %v1763 = vsel %vm1747, %v1276, %v1731
        %v1764 = vsel %vm1748, %v1191, %v1732
        %v1765 = vsel %vm1749, %v1193, %v1733
        %v1766 = vsel %vm1750, %v1280, %v1734
        %v1767 = vsel %vm1751, %v1282, %v1735
        %v1768 = vsel %vm1752, %v1197, %v1736
        %v1769 = vsel %vm1753, %v1199, %v1737
        %v1770 = vsel %vm1754, %v1286, %v1738
        %v1771 = vsel %vm1755, %v1288, %v1739
        %v1772 = vsel %vm1756, %v1203, %v1740
        %v1773 = vsel %vm1757, %v1205, %v1741
        %v1774 = vsel %vm1758, %v1292, %v1742
        %v1775 = vsel %vm1759, %v1294, %v1743
        %v1776 = vld [vmem:[%s5] sm:$0xff]
        %v1777 = vld [vmem:[%s5 + $0x8] sm:$0xff]
        %v1778 = vld [vmem:[%s5 + $0x10] sm:$0xff]
        %v1779 = vld [vmem:[%s5 + $0x18] sm:$0xff]
        %v1780 = vld [vmem:[%s6] sm:$0xff]
        %v1781 = vld [vmem:[%s6 + $0x8] sm:$0xff]
        %v1782 = vld [vmem:[%s6 + $0x10] sm:$0xff]
        %v1783 = vld [vmem:[%s6 + $0x18] sm:$0xff]
        %v1784 = vld [vmem:[%s7] sm:$0xff]
        %v1785 = vld [vmem:[%s7 + $0x8] sm:$0xff]
        %v1786 = vld [vmem:[%s7 + $0x10] sm:$0xff]
        %v1787 = vld [vmem:[%s7 + $0x18] sm:$0xff]
        %v1789 = vsel %vm397, %v1780, 0
        %v1792 = vsel %vm397, %v1781, 0
        %v1795 = vsel %vm397, %v1782, 0
        %v1798 = vsel %vm397, %v1783, 0
        %1800 = vmatprep.subr.mxu0 %v413
        %1801 = vmatpush1.msra.mxu0 %v411
        %1802 = vmatprep.subr.mxu0 0.0
        %1803 = vmatpush1.msra.mxu0 0.0
        %1804 = vmatprep.subr.mxu0 0.0
        %1805 = vmatpush1.msra.mxu0 0.0
        %1806 = vmatprep.subr.mxu0 0.0
        %1807 = vmatpush1.msra.mxu0 0.0
        %1808 = vmatprep.subr.mxu0 0.0
        %1809 = vmatpush1.msra.mxu0 0.0
        %1810 = vmatprep.subr.mxu0 0.0
        %1811 = vmatpush1.msra.mxu0 0.0
        %1812 = vmatprep.subr.mxu0 0.0
        %1813 = vmatpush1.msra.mxu0 0.0
        %1814 = vmatprep.subr.mxu0 0.0
        %1815 = vmatpush1.msra.mxu0 0.0
        %1816 = vmatprep.subr.mxu0 0.0
        %1817 = vmatpush1.msra.mxu0 0.0
        %1818 = vmatprep.subr.mxu0 0.0
        %1819 = vmatpush1.msra.mxu0 0.0
        %1820 = vmatprep.subr.mxu0 0.0
        %1821 = vmatpush1.msra.mxu0 0.0
        %1822 = vmatprep.subr.mxu0 0.0
        %1823 = vmatpush1.msra.mxu0 0.0
        %1824 = vmatprep.subr.mxu0 0.0
        %1825 = vmatpush1.msra.mxu0 0.0
        %1826 = vmatprep.subr.mxu0 0.0
        %1827 = vmatpush1.msra.mxu0 0.0
        %1828 = vmatprep.subr.mxu0 0.0
        %1829 = vmatpush1.msra.mxu0 0.0
        %1830 = vmatprep.subr.mxu0 0.0
        %1831 = vmatpush1.msra.mxu0 0.0
        %1832 = vmatprep.subr.mxu0 0.0
        %1833 = vmatpush1.msra.mxu0 0.0
        %1834 = vmatprep.subr.mxu0 0.0
        %1835 = vmatpush1.msra.mxu0 0.0
        %1836 = vmatprep.subr.mxu0 0.0
        %1837 = vmatpush1.msra.mxu0 0.0
        %1838 = vmatprep.subr.mxu0 0.0
        %1839 = vmatpush1.msra.mxu0 0.0
        %1840 = vmatprep.subr.mxu0 0.0
        %1841 = vmatpush1.msra.mxu0 0.0
        %1842 = vmatprep.subr.mxu0 0.0
        %1843 = vmatpush1.msra.mxu0 0.0
        %1844 = vmatprep.subr.mxu0 0.0
        %1845 = vmatpush1.msra.mxu0 0.0
        %1846 = vmatprep.subr.mxu0 0.0
        %1847 = vmatpush1.msra.mxu0 0.0
        %1848 = vmatprep.subr.mxu0 0.0
        %1849 = vmatpush1.msra.mxu0 0.0
        %1850 = vmatprep.subr.mxu0 0.0
        %1851 = vmatpush1.msra.mxu0 0.0
        %1852 = vmatprep.subr.mxu0 0.0
        %1853 = vmatpush1.msra.mxu0 0.0
        %1854 = vmatprep.subr.mxu0 0.0
        %1855 = vmatpush1.msra.mxu0 0.0
        %1856 = vmatprep.subr.mxu0 0.0
        %1857 = vmatpush1.msra.mxu0 0.0
        %1858 = vmatprep.subr.mxu0 0.0
        %1859 = vmatpush1.msra.mxu0 0.0
        %1860 = vmatprep.subr.mxu0 0.0
        %1861 = vmatpush1.msra.mxu0 0.0
        %1862 = vmatprep.subr.mxu0 0.0
        %1863 = vmatpush1.msra.mxu0 0.0
        %1864 = vmatprep.mubr.f32.mxu0 0.0
        %1865 = vmatmul.mubr.f32.gmra.mrb[0].mxu0 %v1789
        %v1866 = vpop.f32.mrb[0].mxu0
        %v1867 = vadd.f32 0.0, %v1866
        %v1868 = vpop.f32.mrb[0].mxu0
        %v1869 = vadd.f32 0.0, %v1868
        %1870 = vmatprep.mubr.f32.mxu0 0.0
        %1871 = vmatmul.mubr.f32.gmra.mrb[0].mxu0 %v1792
        %v1872 = vpop.f32.mrb[0].mxu0
        %v1873 = vadd.f32 0.0, %v1872
        %v1874 = vpop.f32.mrb[0].mxu0
        %v1875 = vadd.f32 0.0, %v1874
        %1876 = vmatprep.mubr.f32.mxu0 0.0
        %1877 = vmatmul.mubr.f32.gmra.mrb[0].mxu0 %v1795
        %v1878 = vpop.f32.mrb[0].mxu0
        %v1879 = vadd.f32 0.0, %v1878
        %v1880 = vpop.f32.mrb[0].mxu0
        %v1881 = vadd.f32 0.0, %v1880
        %1882 = vmatprep.mubr.f32.mxu0 0.0
        %1883 = vmatmul.mubr.f32.gmra.mrb[0].mxu0 %v1798
        %v1884 = vpop.f32.mrb[0].mxu0
        %v1885 = vadd.f32 0.0, %v1884
        %v1886 = vpop.f32.mrb[0].mxu0
        %v1887 = vadd.f32 0.0, %v1886
        %1888 = vdwg.mxu0
        %1889 = vmatprep.subr.mxu0 %v417
        %1890 = vmatpush1.msra.mxu0 %v415
        %1891 = vmatprep.subr.mxu0 0.0
        %1892 = vmatpush1.msra.mxu0 0.0
        %1893 = vmatprep.subr.mxu0 0.0
        %1894 = vmatpush1.msra.mxu0 0.0
        %1895 = vmatprep.subr.mxu0 0.0
        %1896 = vmatpush1.msra.mxu0 0.0
        %1897 = vmatprep.subr.mxu0 0.0
        %1898 = vmatpush1.msra.mxu0 0.0
        %1899 = vmatprep.subr.mxu0 0.0
        %1900 = vmatpush1.msra.mxu0 0.0
        %1901 = vmatprep.subr.mxu0 0.0
        %1902 = vmatpush1.msra.mxu0 0.0
        %1903 = vmatprep.subr.mxu0 0.0
        %1904 = vmatpush1.msra.mxu0 0.0
        %1905 = vmatprep.subr.mxu0 0.0
        %1906 = vmatpush1.msra.mxu0 0.0
        %1907 = vmatprep.subr.mxu0 0.0
        %1908 = vmatpush1.msra.mxu0 0.0
        %1909 = vmatprep.subr.mxu0 0.0
        %1910 = vmatpush1.msra.mxu0 0.0
        %1911 = vmatprep.subr.mxu0 0.0
        %1912 = vmatpush1.msra.mxu0 0.0
        %1913 = vmatprep.subr.mxu0 0.0
        %1914 = vmatpush1.msra.mxu0 0.0
        %1915 = vmatprep.subr.mxu0 0.0
        %1916 = vmatpush1.msra.mxu0 0.0
        %1917 = vmatprep.subr.mxu0 0.0
        %1918 = vmatpush1.msra.mxu0 0.0
        %1919 = vmatprep.subr.mxu0 0.0
        %1920 = vmatpush1.msra.mxu0 0.0
        %1921 = vmatprep.subr.mxu0 0.0
        %1922 = vmatpush1.msra.mxu0 0.0
        %1923 = vmatprep.subr.mxu0 0.0
        %1924 = vmatpush1.msra.mxu0 0.0
        %1925 = vmatprep.subr.mxu0 0.0
        %1926 = vmatpush1.msra.mxu0 0.0
        %1927 = vmatprep.subr.mxu0 0.0
        %1928 = vmatpush1.msra.mxu0 0.0
        %1929 = vmatprep.subr.mxu0 0.0
        %1930 = vmatpush1.msra.mxu0 0.0
        %1931 = vmatprep.subr.mxu0 0.0
        %1932 = vmatpush1.msra.mxu0 0.0
        %1933 = vmatprep.subr.mxu0 0.0
        %1934 = vmatpush1.msra.mxu0 0.0
        %1935 = vmatprep.subr.mxu0 0.0
        %1936 = vmatpush1.msra.mxu0 0.0
        %1937 = vmatprep.subr.mxu0 0.0
        %1938 = vmatpush1.msra.mxu0 0.0
        %1939 = vmatprep.subr.mxu0 0.0
        %1940 = vmatpush1.msra.mxu0 0.0
        %1941 = vmatprep.subr.mxu0 0.0
        %1942 = vmatpush1.msra.mxu0 0.0
        %1943 = vmatprep.subr.mxu0 0.0
        %1944 = vmatpush1.msra.mxu0 0.0
        %1945 = vmatprep.subr.mxu0 0.0
        %1946 = vmatpush1.msra.mxu0 0.0
        %1947 = vmatprep.subr.mxu0 0.0
        %1948 = vmatpush1.msra.mxu0 0.0
        %1949 = vmatprep.subr.mxu0 0.0
        %1950 = vmatpush1.msra.mxu0 0.0
        %1951 = vmatprep.subr.mxu0 0.0
        %1952 = vmatpush1.msra.mxu0 0.0
        %1953 = vmatprep.mubr.f32.mxu0 0.0
        %1954 = vmatmul.mubr.f32.gmra.mrb[0].mxu0 %v1789
        %v1955 = vpop.f32.mrb[0].mxu0
        %v1956 = vadd.f32 0.0, %v1955
        %v1957 = vpop.f32.mrb[0].mxu0
        %v1958 = vadd.f32 0.0, %v1957
        %1959 = vmatprep.mubr.f32.mxu0 0.0
        %1960 = vmatmul.mubr.f32.gmra.mrb[0].mxu0 %v1792
        %v1961 = vpop.f32.mrb[0].mxu0
        %v1962 = vadd.f32 0.0, %v1961
        %v1963 = vpop.f32.mrb[0].mxu0
        %v1964 = vadd.f32 0.0, %v1963
        %1965 = vmatprep.mubr.f32.mxu0 0.0
        %1966 = vmatmul.mubr.f32.gmra.mrb[0].mxu0 %v1795
        %v1967 = vpop.f32.mrb[0].mxu0
        %v1968 = vadd.f32 0.0, %v1967
        %v1969 = vpop.f32.mrb[0].mxu0
        %v1970 = vadd.f32 0.0, %v1969
        %1971 = vmatprep.mubr.f32.mxu0 0.0
        %1972 = vmatmul.mubr.f32.gmra.mrb[0].mxu0 %v1798
        %v1973 = vpop.f32.mrb[0].mxu0
        %v1974 = vadd.f32 0.0, %v1973
        %v1975 = vpop.f32.mrb[0].mxu0
        %v1976 = vadd.f32 0.0, %v1975
        %1977 = vdwg.mxu0
        %vm1978 = vcmask 228352
        %v1980 = vsel %vm1978, %v1776, 0
        %v1983 = vsel %vm1978, %v1777, 0
        %v1986 = vsel %vm1978, %v1778, 0
        %v1989 = vsel %vm1978, %v1779, 0
        %v1992 = vsel %vm410, %v1772, 0
        %v1995 = vsel %vm410, %v1773, 0
        %v1998 = vsel %vm410, %v1774, 0
        %v2001 = vsel %vm410, %v1775, 0
        %2003 = vmatprep.subr.mxu0 %v1761
        %2004 = vmatpush1.msra.mxu0 %v1760
        %2005 = vmatprep.subr.mxu0 %v1765
        %2006 = vmatpush1.msra.mxu0 %v1764
        %2007 = vmatprep.subr.mxu0 %v1769
        %2008 = vmatpush1.msra.mxu0 %v1768
        %2009 = vmatprep.subr.mxu0 %v1995
        %2010 = vmatpush1.msra.mxu0 %v1992
        %2011 = vmatprep.subr.mxu0 0.0
        %2012 = vmatpush1.msra.mxu0 0.0
        %2013 = vmatprep.subr.mxu0 0.0
        %2014 = vmatpush1.msra.mxu0 0.0
        %2015 = vmatprep.subr.mxu0 0.0
        %2016 = vmatpush1.msra.mxu0 0.0
        %2017 = vmatprep.subr.mxu0 0.0
        %2018 = vmatpush1.msra.mxu0 0.0
        %2019 = vmatprep.subr.mxu0 0.0
        %2020 = vmatpush1.msra.mxu0 0.0
        %2021 = vmatprep.subr.mxu0 0.0
        %2022 = vmatpush1.msra.mxu0 0.0
        %2023 = vmatprep.subr.mxu0 0.0
        %2024 = vmatpush1.msra.mxu0 0.0
        %2025 = vmatprep.subr.mxu0 0.0
        %2026 = vmatpush1.msra.mxu0 0.0
        %2027 = vmatprep.subr.mxu0 0.0
        %2028 = vmatpush1.msra.mxu0 0.0
        %2029 = vmatprep.subr.mxu0 0.0
        %2030 = vmatpush1.msra.mxu0 0.0
        %2031 = vmatprep.subr.mxu0 0.0
        %2032 = vmatpush1.msra.mxu0 0.0
        %2033 = vmatprep.subr.mxu0 0.0
        %2034 = vmatpush1.msra.mxu0 0.0
        %2035 = vmatprep.subr.mxu0 0.0
        %2036 = vmatpush1.msra.mxu0 0.0
        %2037 = vmatprep.subr.mxu0 0.0
        %2038 = vmatpush1.msra.mxu0 0.0
        %2039 = vmatprep.subr.mxu0 0.0
        %2040 = vmatpush1.msra.mxu0 0.0
        %2041 = vmatprep.subr.mxu0 0.0
        %2042 = vmatpush1.msra.mxu0 0.0
        %2043 = vmatprep.subr.mxu0 0.0
        %2044 = vmatpush1.msra.mxu0 0.0
        %2045 = vmatprep.subr.mxu0 0.0
        %2046 = vmatpush1.msra.mxu0 0.0
        %2047 = vmatprep.subr.mxu0 0.0
        %2048 = vmatpush1.msra.mxu0 0.0
        %2049 = vmatprep.subr.mxu0 0.0
        %2050 = vmatpush1.msra.mxu0 0.0
        %2051 = vmatprep.subr.mxu0 0.0
        %2052 = vmatpush1.msra.mxu0 0.0
        %2053 = vmatprep.subr.mxu0 0.0
        %2054 = vmatpush1.msra.mxu0 0.0
        %2055 = vmatprep.subr.mxu0 0.0
        %2056 = vmatpush1.msra.mxu0 0.0
        %2057 = vmatprep.subr.mxu0 0.0
        %2058 = vmatpush1.msra.mxu0 0.0
        %2059 = vmatprep.subr.mxu0 0.0
        %2060 = vmatpush1.msra.mxu0 0.0
        %2061 = vmatprep.subr.mxu0 0.0
        %2062 = vmatpush1.msra.mxu0 0.0
        %2063 = vmatprep.subr.mxu0 0.0
        %2064 = vmatpush1.msra.mxu0 0.0
        %2065 = vmatprep.subr.mxu0 0.0
        %2066 = vmatpush1.msra.mxu0 0.0
        %2067 = vmatprep.mubr.f32.mxu0 0.0
        %2068 = vmatmul.mubr.f32.gmra.mrb[0].mxu0 %v1980
        %v2069 = vpop.f32.mrb[0].mxu0
        %v2070 = vadd.f32 %v1867, %v2069
        %v2071 = vpop.f32.mrb[0].mxu0
        %v2072 = vadd.f32 %v1869, %v2071
        %2073 = vmatprep.mubr.f32.mxu0 0.0
        %2074 = vmatmul.mubr.f32.gmra.mrb[0].mxu0 %v1983
        %v2075 = vpop.f32.mrb[0].mxu0
        %v2076 = vadd.f32 %v1873, %v2075
        %v2077 = vpop.f32.mrb[0].mxu0
        %v2078 = vadd.f32 %v1875, %v2077
        %2079 = vmatprep.mubr.f32.mxu0 0.0
        %2080 = vmatmul.mubr.f32.gmra.mrb[0].mxu0 %v1986
        %v2081 = vpop.f32.mrb[0].mxu0
        %v2082 = vadd.f32 %v1879, %v2081
        %v2083 = vpop.f32.mrb[0].mxu0
        %v2084 = vadd.f32 %v1881, %v2083
        %2085 = vmatprep.mubr.f32.mxu0 0.0
        %2086 = vmatmul.mubr.f32.gmra.mrb[0].mxu0 %v1989
        %v2087 = vpop.f32.mrb[0].mxu0
        %v2088 = vadd.f32 %v1885, %v2087
        %v2089 = vpop.f32.mrb[0].mxu0
        %v2090 = vadd.f32 %v1887, %v2089
        %2091 = vdwg.mxu0
        %2092 = vmatprep.subr.mxu0 %v1763
        %2093 = vmatpush1.msra.mxu0 %v1762
        %2094 = vmatprep.subr.mxu0 %v1767
        %2095 = vmatpush1.msra.mxu0 %v1766
        %2096 = vmatprep.subr.mxu0 %v1771
        %2097 = vmatpush1.msra.mxu0 %v1770
        %2098 = vmatprep.subr.mxu0 %v2001
        %2099 = vmatpush1.msra.mxu0 %v1998
        %2100 = vmatprep.subr.mxu0 0.0
        %2101 = vmatpush1.msra.mxu0 0.0
        %2102 = vmatprep.subr.mxu0 0.0
        %2103 = vmatpush1.msra.mxu0 0.0
        %2104 = vmatprep.subr.mxu0 0.0
        %2105 = vmatpush1.msra.mxu0 0.0
        %2106 = vmatprep.subr.mxu0 0.0
        %2107 = vmatpush1.msra.mxu0 0.0
        %2108 = vmatprep.subr.mxu0 0.0
        %2109 = vmatpush1.msra.mxu0 0.0
        %2110 = vmatprep.subr.mxu0 0.0
        %2111 = vmatpush1.msra.mxu0 0.0
        %2112 = vmatprep.subr.mxu0 0.0
        %2113 = vmatpush1.msra.mxu0 0.0
        %2114 = vmatprep.subr.mxu0 0.0
        %2115 = vmatpush1.msra.mxu0 0.0
        %2116 = vmatprep.subr.mxu0 0.0
        %2117 = vmatpush1.msra.mxu0 0.0
        %2118 = vmatprep.subr.mxu0 0.0
        %2119 = vmatpush1.msra.mxu0 0.0
        %2120 = vmatprep.subr.mxu0 0.0
        %2121 = vmatpush1.msra.mxu0 0.0
        %2122 = vmatprep.subr.mxu0 0.0
        %2123 = vmatpush1.msra.mxu0 0.0
        %2124 = vmatprep.subr.mxu0 0.0
        %2125 = vmatpush1.msra.mxu0 0.0
        %2126 = vmatprep.subr.mxu0 0.0
        %2127 = vmatpush1.msra.mxu0 0.0
        %2128 = vmatprep.subr.mxu0 0.0
        %2129 = vmatpush1.msra.mxu0 0.0
        %2130 = vmatprep.subr.mxu0 0.0
        %2131 = vmatpush1.msra.mxu0 0.0
        %2132 = vmatprep.subr.mxu0 0.0
        %2133 = vmatpush1.msra.mxu0 0.0
        %2134 = vmatprep.subr.mxu0 0.0
        %2135 = vmatpush1.msra.mxu0 0.0
        %2136 = vmatprep.subr.mxu0 0.0
        %2137 = vmatpush1.msra.mxu0 0.0
        %2138 = vmatprep.subr.mxu0 0.0
        %2139 = vmatpush1.msra.mxu0 0.0
        %2140 = vmatprep.subr.mxu0 0.0
        %2141 = vmatpush1.msra.mxu0 0.0
        %2142 = vmatprep.subr.mxu0 0.0
        %2143 = vmatpush1.msra.mxu0 0.0
        %2144 = vmatprep.subr.mxu0 0.0
        %2145 = vmatpush1.msra.mxu0 0.0
        %2146 = vmatprep.subr.mxu0 0.0
        %2147 = vmatpush1.msra.mxu0 0.0
        %2148 = vmatprep.subr.mxu0 0.0
        %2149 = vmatpush1.msra.mxu0 0.0
        %2150 = vmatprep.subr.mxu0 0.0
        %2151 = vmatpush1.msra.mxu0 0.0
        %2152 = vmatprep.subr.mxu0 0.0
        %2153 = vmatpush1.msra.mxu0 0.0
        %2154 = vmatprep.subr.mxu0 0.0
        %2155 = vmatpush1.msra.mxu0 0.0
        %2156 = vmatprep.mubr.f32.mxu0 0.0
        %2157 = vmatmul.mubr.f32.gmra.mrb[0].mxu0 %v1980
        %v2158 = vpop.f32.mrb[0].mxu0
        %v2159 = vadd.f32 %v1956, %v2158
        %v2160 = vpop.f32.mrb[0].mxu0
        %v2161 = vadd.f32 %v1958, %v2160
        %2162 = vmatprep.mubr.f32.mxu0 0.0
        %2163 = vmatmul.mubr.f32.gmra.mrb[0].mxu0 %v1983
        %v2164 = vpop.f32.mrb[0].mxu0
        %v2165 = vadd.f32 %v1962, %v2164
        %v2166 = vpop.f32.mrb[0].mxu0
        %v2167 = vadd.f32 %v1964, %v2166
        %2168 = vmatprep.mubr.f32.mxu0 0.0
        %2169 = vmatmul.mubr.f32.gmra.mrb[0].mxu0 %v1986
        %v2170 = vpop.f32.mrb[0].mxu0
        %v2171 = vadd.f32 %v1968, %v2170
        %v2172 = vpop.f32.mrb[0].mxu0
        %v2173 = vadd.f32 %v1970, %v2172
        %2174 = vmatprep.mubr.f32.mxu0 0.0
        %2175 = vmatmul.mubr.f32.gmra.mrb[0].mxu0 %v1989
        %v2176 = vpop.f32.mrb[0].mxu0
        %v2177 = vadd.f32 %v1974, %v2176
        %v2178 = vpop.f32.mrb[0].mxu0
        %v2179 = vadd.f32 %v1976, %v2178
        %2180 = vdwg.mxu0
        %2182 = vset.pattern.permute.xlu0 0
        %2183 = vperm.xlu0 %2182, %v1784
        %v2184 = vpop.permute.xlu0 %2183
        %2187 = vset.pattern.permute.xlu0 0
        %2188 = vperm.xlu0 %2187, %v1785
        %v2189 = vpop.permute.xlu0 %2188
        %2192 = vset.pattern.permute.xlu0 0
        %2193 = vperm.xlu0 %2192, %v1786
        %v2194 = vpop.permute.xlu0 %2193
        %2197 = vset.pattern.permute.xlu0 0
        %2198 = vperm.xlu0 %2197, %v1787
        %v2199 = vpop.permute.xlu0 %2198
        %v2201 = vadd.f32 %v2070, %v2184
        %v2202 = vadd.f32 %v2072, %v2184
        %v2203 = vadd.f32 %v2159, %v2184
        %v2204 = vadd.f32 %v2161, %v2184
        %v2205 = vadd.f32 %v2076, %v2189
        %v2206 = vadd.f32 %v2078, %v2189
        %v2207 = vadd.f32 %v2165, %v2189
        %v2208 = vadd.f32 %v2167, %v2189
        %v2209 = vadd.f32 %v2082, %v2194
        %v2210 = vadd.f32 %v2084, %v2194
        %v2211 = vadd.f32 %v2171, %v2194
        %v2212 = vadd.f32 %v2173, %v2194
        %v2213 = vadd.f32 %v2088, %v2199
        %v2214 = vadd.f32 %v2090, %v2199
        %v2215 = vadd.f32 %v2177, %v2199
        %v2216 = vadd.f32 %v2179, %v2199
        %v2217 = vmul.f32 %v2201, 100.0
        %v2218 = vmul.f32 %v2202, 100.0
        %v2219 = vmul.f32 %v2203, 100.0
        %v2220 = vmul.f32 %v2204, 100.0
        %v2221 = vmul.f32 %v2205, 100.0
        %v2222 = vmul.f32 %v2206, 100.0
        %v2223 = vmul.f32 %v2207, 100.0
        %v2224 = vmul.f32 %v2208, 100.0
        %v2225 = vmul.f32 %v2209, 100.0
        %v2226 = vmul.f32 %v2210, 100.0
        %v2227 = vmul.f32 %v2211, 100.0
        %v2228 = vmul.f32 %v2212, 100.0
        %v2229 = vmul.f32 %v2213, 100.0
        %v2230 = vmul.f32 %v2214, 100.0
        %v2231 = vmul.f32 %v2215, 100.0
        %v2232 = vmul.f32 %v2216, 100.0
        %v2233 = vand.u32 2147483647, %v2217
        %v2234 = vand.u32 2147483647, %v2218
        %v2235 = vand.u32 2147483647, %v2219
        %v2236 = vand.u32 2147483647, %v2220
        %v2237 = vand.u32 2147483647, %v2221
        %v2238 = vand.u32 2147483647, %v2222
        %v2239 = vand.u32 2147483647, %v2223
        %v2240 = vand.u32 2147483647, %v2224
        %v2241 = vand.u32 2147483647, %v2225
        %v2242 = vand.u32 2147483647, %v2226
        %v2243 = vand.u32 2147483647, %v2227
        %v2244 = vand.u32 2147483647, %v2228
        %v2245 = vand.u32 2147483647, %v2229
        %v2246 = vand.u32 2147483647, %v2230
        %v2247 = vand.u32 2147483647, %v2231
        %v2248 = vand.u32 2147483647, %v2232
        %v2249 = vsub.f32 0.0, %v2233
        %v2250 = vsub.f32 0.0, %v2234
        %v2251 = vsub.f32 0.0, %v2235
        %v2252 = vsub.f32 0.0, %v2236
        %v2253 = vsub.f32 0.0, %v2237
        %v2254 = vsub.f32 0.0, %v2238
        %v2255 = vsub.f32 0.0, %v2239
        %v2256 = vsub.f32 0.0, %v2240
        %v2257 = vsub.f32 0.0, %v2241
        %v2258 = vsub.f32 0.0, %v2242
        %v2259 = vsub.f32 0.0, %v2243
        %v2260 = vsub.f32 0.0, %v2244
        %v2261 = vsub.f32 0.0, %v2245
        %v2262 = vsub.f32 0.0, %v2246
        %v2263 = vsub.f32 0.0, %v2247
        %v2264 = vsub.f32 0.0, %v2248
        %v2265 = vmul.f32 %v2249, 1.442695
        %v2266 = vpow.pop %v2265
        %v2267 = vmul.f32 %v2250, 1.442695
        %v2268 = vpow.pop %v2267
        %v2269 = vmul.f32 %v2251, 1.442695
        %v2270 = vpow.pop %v2269
        %v2271 = vmul.f32 %v2252, 1.442695
        %v2272 = vpow.pop %v2271
        %v2273 = vmul.f32 %v2253, 1.442695
        %v2274 = vpow.pop %v2273
        %v2275 = vmul.f32 %v2254, 1.442695
        %v2276 = vpow.pop %v2275
        %v2277 = vmul.f32 %v2255, 1.442695
        %v2278 = vpow.pop %v2277
        %v2279 = vmul.f32 %v2256, 1.442695
        %v2280 = vpow.pop %v2279
        %v2281 = vmul.f32 %v2257, 1.442695
        %v2282 = vpow.pop %v2281
        %v2283 = vmul.f32 %v2258, 1.442695
        %v2284 = vpow.pop %v2283
        %v2285 = vmul.f32 %v2259, 1.442695
        %v2286 = vpow.pop %v2285
        %v2287 = vmul.f32 %v2260, 1.442695
        %v2288 = vpow.pop %v2287
        %v2289 = vmul.f32 %v2261, 1.442695
        %v2290 = vpow.pop %v2289
        %v2291 = vmul.f32 %v2262, 1.442695
        %v2292 = vpow.pop %v2291
        %v2293 = vmul.f32 %v2263, 1.442695
        %v2294 = vpow.pop %v2293
        %v2295 = vmul.f32 %v2264, 1.442695
        %v2296 = vpow.pop %v2295
        %v2297 = vmul.f32 %v2266, 2.0
        %v2298 = vmul.f32 %v2268, 2.0
        %v2299 = vmul.f32 %v2270, 2.0
        %v2300 = vmul.f32 %v2272, 2.0
        %v2301 = vmul.f32 %v2274, 2.0
        %v2302 = vmul.f32 %v2276, 2.0
        %v2303 = vmul.f32 %v2278, 2.0
        %v2304 = vmul.f32 %v2280, 2.0
        %v2305 = vmul.f32 %v2282, 2.0
        %v2306 = vmul.f32 %v2284, 2.0
        %v2307 = vmul.f32 %v2286, 2.0
        %v2308 = vmul.f32 %v2288, 2.0
        %v2309 = vmul.f32 %v2290, 2.0
        %v2310 = vmul.f32 %v2292, 2.0
        %v2311 = vmul.f32 %v2294, 2.0
        %v2312 = vmul.f32 %v2296, 2.0
        %v2313 = vsub.f32 %v2297, 1.0
        %v2314 = vsub.f32 %v2298, 1.0
        %v2315 = vsub.f32 %v2299, 1.0
        %v2316 = vsub.f32 %v2300, 1.0
        %v2317 = vsub.f32 %v2301, 1.0
        %v2318 = vsub.f32 %v2302, 1.0
        %v2319 = vsub.f32 %v2303, 1.0
        %v2320 = vsub.f32 %v2304, 1.0
        %v2321 = vsub.f32 %v2305, 1.0
        %v2322 = vsub.f32 %v2306, 1.0
        %v2323 = vsub.f32 %v2307, 1.0
        %v2324 = vsub.f32 %v2308, 1.0
        %v2325 = vsub.f32 %v2309, 1.0
        %v2326 = vsub.f32 %v2310, 1.0
        %v2327 = vsub.f32 %v2311, 1.0
        %v2328 = vsub.f32 %v2312, 1.0
        %v2329 = vmul.f32 %v2313, 7.1528166e-06
        %v2330 = vmul.f32 %v2314, 7.1528166e-06
        %v2331 = vmul.f32 %v2315, 7.1528166e-06
        %v2332 = vmul.f32 %v2316, 7.1528166e-06
        %v2333 = vmul.f32 %v2317, 7.1528166e-06
        %v2334 = vmul.f32 %v2318, 7.1528166e-06
        %v2335 = vmul.f32 %v2319, 7.1528166e-06
        %v2336 = vmul.f32 %v2320, 7.1528166e-06
        %v2337 = vmul.f32 %v2321, 7.1528166e-06
        %v2338 = vmul.f32 %v2322, 7.1528166e-06
        %v2339 = vmul.f32 %v2323, 7.1528166e-06
        %v2340 = vmul.f32 %v2324, 7.1528166e-06
        %v2341 = vmul.f32 %v2325, 7.1528166e-06
        %v2342 = vmul.f32 %v2326, 7.1528166e-06
        %v2343 = vmul.f32 %v2327, 7.1528166e-06
        %v2344 = vmul.f32 %v2328, 7.1528166e-06
        %v2345 = vadd.f32 %v2329, -2.4015302e-05
        %v2346 = vadd.f32 %v2330, -2.4015302e-05
        %v2347 = vadd.f32 %v2331, -2.4015302e-05
        %v2348 = vadd.f32 %v2332, -2.4015302e-05
        %v2349 = vadd.f32 %v2333, -2.4015302e-05
        %v2350 = vadd.f32 %v2334, -2.4015302e-05
        %v2351 = vadd.f32 %v2335, -2.4015302e-05
        %v2352 = vadd.f32 %v2336, -2.4015302e-05
        %v2353 = vadd.f32 %v2337, -2.4015302e-05
        %v2354 = vadd.f32 %v2338, -2.4015302e-05
        %v2355 = vadd.f32 %v2339, -2.4015302e-05
        %v2356 = vadd.f32 %v2340, -2.4015302e-05
        %v2357 = vadd.f32 %v2341, -2.4015302e-05
        %v2358 = vadd.f32 %v2342, -2.4015302e-05
        %v2359 = vadd.f32 %v2343, -2.4015302e-05
        %v2360 = vadd.f32 %v2344, -2.4015302e-05
        %v2361 = vmul.f32 %v2345, %v2313
        %v2362 = vmul.f32 %v2346, %v2314
        %v2363 = vmul.f32 %v2347, %v2315
        %v2364 = vmul.f32 %v2348, %v2316
        %v2365 = vmul.f32 %v2349, %v2317
        %v2366 = vmul.f32 %v2350, %v2318
        %v2367 = vmul.f32 %v2351, %v2319
        %v2368 = vmul.f32 %v2352, %v2320
        %v2369 = vmul.f32 %v2353, %v2321
        %v2370 = vmul.f32 %v2354, %v2322
        %v2371 = vmul.f32 %v2355, %v2323
        %v2372 = vmul.f32 %v2356, %v2324
        %v2373 = vmul.f32 %v2357, %v2325
        %v2374 = vmul.f32 %v2358, %v2326
        %v2375 = vmul.f32 %v2359, %v2327
        %v2376 = vmul.f32 %v2360, %v2328
        %v2377 = vadd.f32 %v2361, 6.3934975e-05
        %v2378 = vadd.f32 %v2362, 6.3934975e-05
        %v2379 = vadd.f32 %v2363, 6.3934975e-05
        %v2380 = vadd.f32 %v2364, 6.3934975e-05
        %v2381 = vadd.f32 %v2365, 6.3934975e-05
        %v2382 = vadd.f32 %v2366, 6.3934975e-05
        %v2383 = vadd.f32 %v2367, 6.3934975e-05
        %v2384 = vadd.f32 %v2368, 6.3934975e-05
        %v2385 = vadd.f32 %v2369, 6.3934975e-05
        %v2386 = vadd.f32 %v2370, 6.3934975e-05
        %v2387 = vadd.f32 %v2371, 6.3934975e-05
        %v2388 = vadd.f32 %v2372, 6.3934975e-05
        %v2389 = vadd.f32 %v2373, 6.3934975e-05
        %v2390 = vadd.f32 %v2374, 6.3934975e-05
        %v2391 = vadd.f32 %v2375, 6.3934975e-05
        %v2392 = vadd.f32 %v2376, 6.3934975e-05
        %v2393 = vmul.f32 %v2377, %v2313
        %v2394 = vmul.f32 %v2378, %v2314
        %v2395 = vmul.f32 %v2379, %v2315
        %v2396 = vmul.f32 %v2380, %v2316
        %v2397 = vmul.f32 %v2381, %v2317
        %v2398 = vmul.f32 %v2382, %v2318
        %v2399 = vmul.f32 %v2383, %v2319
        %v2400 = vmul.f32 %v2384, %v2320
        %v2401 = vmul.f32 %v2385, %v2321
        %v2402 = vmul.f32 %v2386, %v2322
        %v2403 = vmul.f32 %v2387, %v2323
        %v2404 = vmul.f32 %v2388, %v2324
        %v2405 = vmul.f32 %v2389, %v2325
        %v2406 = vmul.f32 %v2390, %v2326
        %v2407 = vmul.f32 %v2391, %v2327
        %v2408 = vmul.f32 %v2392, %v2328
        %v2409 = vadd.f32 %v2393, -0.00022406426
        %v2410 = vadd.f32 %v2394, -0.00022406426
        %v2411 = vadd.f32 %v2395, -0.00022406426
        %v2412 = vadd.f32 %v2396, -0.00022406426
        %v2413 = vadd.f32 %v2397, -0.00022406426
        %v2414 = vadd.f32 %v2398, -0.00022406426
        %v2415 = vadd.f32 %v2399, -0.00022406426
        %v2416 = vadd.f32 %v2400, -0.00022406426
        %v2417 = vadd.f32 %v2401, -0.00022406426
        %v2418 = vadd.f32 %v2402, -0.00022406426
        %v2419 = vadd.f32 %v2403, -0.00022406426
        %v2420 = vadd.f32 %v2404, -0.00022406426
        %v2421 = vadd.f32 %v2405, -0.00022406426
        %v2422 = vadd.f32 %v2406, -0.00022406426
        %v2423 = vadd.f32 %v2407, -0.00022406426
        %v2424 = vadd.f32 %v2408, -0.00022406426
        %v2425 = vmul.f32 %v2409, %v2313
        %v2426 = vmul.f32 %v2410, %v2314
        %v2427 = vmul.f32 %v2411, %v2315
        %v2428 = vmul.f32 %v2412, %v2316
        %v2429 = vmul.f32 %v2413, %v2317
        %v2430 = vmul.f32 %v2414, %v2318
        %v2431 = vmul.f32 %v2415, %v2319
        %v2432 = vmul.f32 %v2416, %v2320
        %v2433 = vmul.f32 %v2417, %v2321
        %v2434 = vmul.f32 %v2418, %v2322
        %v2435 = vmul.f32 %v2419, %v2323
        %v2436 = vmul.f32 %v2420, %v2324
        %v2437 = vmul.f32 %v2421, %v2325
        %v2438 = vmul.f32 %v2422, %v2326
        %v2439 = vmul.f32 %v2423, %v2327
        %v2440 = vmul.f32 %v2424, %v2328
        %v2441 = vadd.f32 %v2425, 0.0008235513
        %v2442 = vadd.f32 %v2426, 0.0008235513
        %v2443 = vadd.f32 %v2427, 0.0008235513
        %v2444 = vadd.f32 %v2428, 0.0008235513
        %v2445 = vadd.f32 %v2429, 0.0008235513
        %v2446 = vadd.f32 %v2430, 0.0008235513
        %v2447 = vadd.f32 %v2431, 0.0008235513
        %v2448 = vadd.f32 %v2432, 0.0008235513
        %v2449 = vadd.f32 %v2433, 0.0008235513
        %v2450 = vadd.f32 %v2434, 0.0008235513
        %v2451 = vadd.f32 %v2435, 0.0008235513
        %v2452 = vadd.f32 %v2436, 0.0008235513
        %v2453 = vadd.f32 %v2437, 0.0008235513
        %v2454 = vadd.f32 %v2438, 0.0008235513
        %v2455 = vadd.f32 %v2439, 0.0008235513
        %v2456 = vadd.f32 %v2440, 0.0008235513
        %v2457 = vmul.f32 %v2441, %v2313
        %v2458 = vmul.f32 %v2442, %v2314
        %v2459 = vmul.f32 %v2443, %v2315
        %v2460 = vmul.f32 %v2444, %v2316
        %v2461 = vmul.f32 %v2445, %v2317
        %v2462 = vmul.f32 %v2446, %v2318
        %v2463 = vmul.f32 %v2447, %v2319
        %v2464 = vmul.f32 %v2448, %v2320
        %v2465 = vmul.f32 %v2449, %v2321
        %v2466 = vmul.f32 %v2450, %v2322
        %v2467 = vmul.f32 %v2451, %v2323
        %v2468 = vmul.f32 %v2452, %v2324
        %v2469 = vmul.f32 %v2453, %v2325
        %v2470 = vmul.f32 %v2454, %v2326
        %v2471 = vmul.f32 %v2455, %v2327
        %v2472 = vmul.f32 %v2456, %v2328
        %v2473 = vadd.f32 %v2457, -0.0030880838
        %v2474 = vadd.f32 %v2458, -0.0030880838
        %v2475 = vadd.f32 %v2459, -0.0030880838
        %v2476 = vadd.f32 %v2460, -0.0030880838
        %v2477 = vadd.f32 %v2461, -0.0030880838
        %v2478 = vadd.f32 %v2462, -0.0030880838
        %v2479 = vadd.f32 %v2463, -0.0030880838
        %v2480 = vadd.f32 %v2464, -0.0030880838
        %v2481 = vadd.f32 %v2465, -0.0030880838
        %v2482 = vadd.f32 %v2466, -0.0030880838
        %v2483 = vadd.f32 %v2467, -0.0030880838
        %v2484 = vadd.f32 %v2468, -0.0030880838
        %v2485 = vadd.f32 %v2469, -0.0030880838
        %v2486 = vadd.f32 %v2470, -0.0030880838
        %v2487 = vadd.f32 %v2471, -0.0030880838
        %v2488 = vadd.f32 %v2472, -0.0030880838
        %v2489 = vmul.f32 %v2473, %v2313
        %v2490 = vmul.f32 %v2474, %v2314
        %v2491 = vmul.f32 %v2475, %v2315
        %v2492 = vmul.f32 %v2476, %v2316
        %v2493 = vmul.f32 %v2477, %v2317
        %v2494 = vmul.f32 %v2478, %v2318
        %v2495 = vmul.f32 %v2479, %v2319
        %v2496 = vmul.f32 %v2480, %v2320
        %v2497 = vmul.f32 %v2481, %v2321
        %v2498 = vmul.f32 %v2482, %v2322
        %v2499 = vmul.f32 %v2483, %v2323
        %v2500 = vmul.f32 %v2484, %v2324
        %v2501 = vmul.f32 %v2485, %v2325
        %v2502 = vmul.f32 %v2486, %v2326
        %v2503 = vmul.f32 %v2487, %v2327
        %v2504 = vmul.f32 %v2488, %v2328
        %v2505 = vadd.f32 %v2489, 0.012345615
        %v2506 = vadd.f32 %v2490, 0.012345615
        %v2507 = vadd.f32 %v2491, 0.012345615
        %v2508 = vadd.f32 %v2492, 0.012345615
        %v2509 = vadd.f32 %v2493, 0.012345615
        %v2510 = vadd.f32 %v2494, 0.012345615
        %v2511 = vadd.f32 %v2495, 0.012345615
        %v2512 = vadd.f32 %v2496, 0.012345615
        %v2513 = vadd.f32 %v2497, 0.012345615
        %v2514 = vadd.f32 %v2498, 0.012345615
        %v2515 = vadd.f32 %v2499, 0.012345615
        %v2516 = vadd.f32 %v2500, 0.012345615
        %v2517 = vadd.f32 %v2501, 0.012345615
        %v2518 = vadd.f32 %v2502, 0.012345615
        %v2519 = vadd.f32 %v2503, 0.012345615
        %v2520 = vadd.f32 %v2504, 0.012345615
        %v2521 = vmul.f32 %v2505, %v2313
        %v2522 = vmul.f32 %v2506, %v2314
        %v2523 = vmul.f32 %v2507, %v2315
        %v2524 = vmul.f32 %v2508, %v2316
        %v2525 = vmul.f32 %v2509, %v2317
        %v2526 = vmul.f32 %v2510, %v2318
        %v2527 = vmul.f32 %v2511, %v2319
        %v2528 = vmul.f32 %v2512, %v2320
        %v2529 = vmul.f32 %v2513, %v2321
        %v2530 = vmul.f32 %v2514, %v2322
        %v2531 = vmul.f32 %v2515, %v2323
        %v2532 = vmul.f32 %v2516, %v2324
        %v2533 = vmul.f32 %v2517, %v2325
        %v2534 = vmul.f32 %v2518, %v2326
        %v2535 = vmul.f32 %v2519, %v2327
        %v2536 = vmul.f32 %v2520, %v2328
        %v2537 = vadd.f32 %v2521, -0.055555344
        %v2538 = vadd.f32 %v2522, -0.055555344
        %v2539 = vadd.f32 %v2523, -0.055555344
        %v2540 = vadd.f32 %v2524, -0.055555344
        %v2541 = vadd.f32 %v2525, -0.055555344
        %v2542 = vadd.f32 %v2526, -0.055555344
        %v2543 = vadd.f32 %v2527, -0.055555344
        %v2544 = vadd.f32 %v2528, -0.055555344
        %v2545 = vadd.f32 %v2529, -0.055555344
        %v2546 = vadd.f32 %v2530, -0.055555344
        %v2547 = vadd.f32 %v2531, -0.055555344
        %v2548 = vadd.f32 %v2532, -0.055555344
        %v2549 = vadd.f32 %v2533, -0.055555344
        %v2550 = vadd.f32 %v2534, -0.055555344
        %v2551 = vadd.f32 %v2535, -0.055555344
        %v2552 = vadd.f32 %v2536, -0.055555344
        %v2553 = vmul.f32 %v2537, %v2313
        %v2554 = vmul.f32 %v2538, %v2314
        %v2555 = vmul.f32 %v2539, %v2315
        %v2556 = vmul.f32 %v2540, %v2316
        %v2557 = vmul.f32 %v2541, %v2317
        %v2558 = vmul.f32 %v2542, %v2318
        %v2559 = vmul.f32 %v2543, %v2319
        %v2560 = vmul.f32 %v2544, %v2320
        %v2561 = vmul.f32 %v2545, %v2321
        %v2562 = vmul.f32 %v2546, %v2322
        %v2563 = vmul.f32 %v2547, %v2323
        %v2564 = vmul.f32 %v2548, %v2324
        %v2565 = vmul.f32 %v2549, %v2325
        %v2566 = vmul.f32 %v2550, %v2326
        %v2567 = vmul.f32 %v2551, %v2327
        %v2568 = vmul.f32 %v2552, %v2328
        %v2569 = vadd.f32 %v2553, 0.33333334
        %v2570 = vadd.f32 %v2554, 0.33333334
        %v2571 = vadd.f32 %v2555, 0.33333334
        %v2572 = vadd.f32 %v2556, 0.33333334
        %v2573 = vadd.f32 %v2557, 0.33333334
        %v2574 = vadd.f32 %v2558, 0.33333334
        %v2575 = vadd.f32 %v2559, 0.33333334
        %v2576 = vadd.f32 %v2560, 0.33333334
        %v2577 = vadd.f32 %v2561, 0.33333334
        %v2578 = vadd.f32 %v2562, 0.33333334
        %v2579 = vadd.f32 %v2563, 0.33333334
        %v2580 = vadd.f32 %v2564, 0.33333334
        %v2581 = vadd.f32 %v2565, 0.33333334
        %v2582 = vadd.f32 %v2566, 0.33333334
        %v2583 = vadd.f32 %v2567, 0.33333334
        %v2584 = vadd.f32 %v2568, 0.33333334
        %v2585 = vmul.f32 %v2569, %v2313
        %v2586 = vmul.f32 %v2570, %v2314
        %v2587 = vmul.f32 %v2571, %v2315
        %v2588 = vmul.f32 %v2572, %v2316
        %v2589 = vmul.f32 %v2573, %v2317
        %v2590 = vmul.f32 %v2574, %v2318
        %v2591 = vmul.f32 %v2575, %v2319
        %v2592 = vmul.f32 %v2576, %v2320
        %v2593 = vmul.f32 %v2577, %v2321
        %v2594 = vmul.f32 %v2578, %v2322
        %v2595 = vmul.f32 %v2579, %v2323
        %v2596 = vmul.f32 %v2580, %v2324
        %v2597 = vmul.f32 %v2581, %v2325
        %v2598 = vmul.f32 %v2582, %v2326
        %v2599 = vmul.f32 %v2583, %v2327
        %v2600 = vmul.f32 %v2584, %v2328
        %v2601 = vadd.f32 %v2585, 0.4054651
        %v2602 = vadd.f32 %v2586, 0.4054651
        %v2603 = vadd.f32 %v2587, 0.4054651
        %v2604 = vadd.f32 %v2588, 0.4054651
        %v2605 = vadd.f32 %v2589, 0.4054651
        %v2606 = vadd.f32 %v2590, 0.4054651
        %v2607 = vadd.f32 %v2591, 0.4054651
        %v2608 = vadd.f32 %v2592, 0.4054651
        %v2609 = vadd.f32 %v2593, 0.4054651
        %v2610 = vadd.f32 %v2594, 0.4054651
        %v2611 = vadd.f32 %v2595, 0.4054651
        %v2612 = vadd.f32 %v2596, 0.4054651
        %v2613 = vadd.f32 %v2597, 0.4054651
        %v2614 = vadd.f32 %v2598, 0.4054651
        %v2615 = vadd.f32 %v2599, 0.4054651
        %v2616 = vadd.f32 %v2600, 0.4054651
        %v2617 = vmax.f32 %v2217, 0.0
        %v2618 = vmax.f32 %v2218, 0.0
        %v2619 = vmax.f32 %v2219, 0.0
        %v2620 = vmax.f32 %v2220, 0.0
        %v2621 = vmax.f32 %v2221, 0.0
        %v2622 = vmax.f32 %v2222, 0.0
        %v2623 = vmax.f32 %v2223, 0.0
        %v2624 = vmax.f32 %v2224, 0.0
        %v2625 = vmax.f32 %v2225, 0.0
        %v2626 = vmax.f32 %v2226, 0.0
        %v2627 = vmax.f32 %v2227, 0.0
        %v2628 = vmax.f32 %v2228, 0.0
        %v2629 = vmax.f32 %v2229, 0.0
        %v2630 = vmax.f32 %v2230, 0.0
        %v2631 = vmax.f32 %v2231, 0.0
        %v2632 = vmax.f32 %v2232, 0.0
        %v2633 = vadd.f32 %v2617, %v2601
        %v2634 = vadd.f32 %v2618, %v2602
        %v2635 = vadd.f32 %v2619, %v2603
        %v2636 = vadd.f32 %v2620, %v2604
        %v2637 = vadd.f32 %v2621, %v2605
        %v2638 = vadd.f32 %v2622, %v2606
        %v2639 = vadd.f32 %v2623, %v2607
        %v2640 = vadd.f32 %v2624, %v2608
        %v2641 = vadd.f32 %v2625, %v2609
        %v2642 = vadd.f32 %v2626, %v2610
        %v2643 = vadd.f32 %v2627, %v2611
        %v2644 = vadd.f32 %v2628, %v2612
        %v2645 = vadd.f32 %v2629, %v2613
        %v2646 = vadd.f32 %v2630, %v2614
        %v2647 = vadd.f32 %v2631, %v2615
        %v2648 = vadd.f32 %v2632, %v2616
        %v2649 = vmul.f32 %v2633, 0.01
        %v2650 = vmul.f32 %v2634, 0.01
        %v2651 = vmul.f32 %v2635, 0.01
        %v2652 = vmul.f32 %v2636, 0.01
        %v2653 = vmul.f32 %v2637, 0.01
        %v2654 = vmul.f32 %v2638, 0.01
        %v2655 = vmul.f32 %v2639, 0.01
        %v2656 = vmul.f32 %v2640, 0.01
        %v2657 = vmul.f32 %v2641, 0.01
        %v2658 = vmul.f32 %v2642, 0.01
        %v2659 = vmul.f32 %v2643, 0.01
        %v2660 = vmul.f32 %v2644, 0.01
        %v2661 = vmul.f32 %v2645, 0.01
        %v2662 = vmul.f32 %v2646, 0.01
        %v2663 = vmul.f32 %v2647, 0.01
        %v2664 = vmul.f32 %v2648, 0.01
        %vm2665 = vcmp.gt.f32.partialorder %v2217, 20.0
        %vm2666 = vcmp.gt.f32.partialorder %v2218, 20.0
        %vm2667 = vcmp.gt.f32.partialorder %v2219, 20.0
        %vm2668 = vcmp.gt.f32.partialorder %v2220, 20.0
        %vm2669 = vcmp.gt.f32.partialorder %v2221, 20.0
        %vm2670 = vcmp.gt.f32.partialorder %v2222, 20.0
        %vm2671 = vcmp.gt.f32.partialorder %v2223, 20.0
        %vm2672 = vcmp.gt.f32.partialorder %v2224, 20.0
        %vm2673 = vcmp.gt.f32.partialorder %v2225, 20.0
        %vm2674 = vcmp.gt.f32.partialorder %v2226, 20.0
        %vm2675 = vcmp.gt.f32.partialorder %v2227, 20.0
        %vm2676 = vcmp.gt.f32.partialorder %v2228, 20.0
        %vm2677 = vcmp.gt.f32.partialorder %v2229, 20.0
        %vm2678 = vcmp.gt.f32.partialorder %v2230, 20.0
        %vm2679 = vcmp.gt.f32.partialorder %v2231, 20.0
        %vm2680 = vcmp.gt.f32.partialorder %v2232, 20.0
        %v2681 = vsel %vm2665, %v2201, %v2649
        %v2682 = vsel %vm2666, %v2202, %v2650
        %v2683 = vsel %vm2667, %v2203, %v2651
        %v2684 = vsel %vm2668, %v2204, %v2652
        %v2685 = vsel %vm2669, %v2205, %v2653
        %v2686 = vsel %vm2670, %v2206, %v2654
        %v2687 = vsel %vm2671, %v2207, %v2655
        %v2688 = vsel %vm2672, %v2208, %v2656
        %v2689 = vsel %vm2673, %v2209, %v2657
        %v2690 = vsel %vm2674, %v2210, %v2658
        %v2691 = vsel %vm2675, %v2211, %v2659
        %v2692 = vsel %vm2676, %v2212, %v2660
        %v2693 = vsel %vm2677, %v2213, %v2661
        %v2694 = vsel %vm2678, %v2214, %v2662
        %v2695 = vsel %vm2679, %v2215, %v2663
        %v2696 = vsel %vm2680, %v2216, %v2664
        %v2697 = vld [vmem:[%s8] sm:$0x1]
        %v2698 = vld [vmem:[#allocation2] sm:$0x1]
        %2700 = vset.pattern.permute.xlu0 0
        %2701 = vperm.xlu0 %2700, %v2698
        %v2702 = vpop.permute.xlu0 %2701
        %v2704 = vlaneseq
        %v2705 = vshrl.u32 %v2704, 7
        %v2706 = vsub.s32 0, %v2705
        %v2707 = vrot.slane %v2702, %v2706
        %v2709 = vsel %vm1105, %v2697, 0
        %2711 = vmatprep.subr.mxu0 %v2682
        %2712 = vmatpush1.msra.mxu0 %v2681
        %2713 = vmatprep.subr.mxu0 %v2686
        %2714 = vmatpush1.msra.mxu0 %v2685
        %2715 = vmatprep.subr.mxu0 %v2690
        %2716 = vmatpush1.msra.mxu0 %v2689
        %2717 = vmatprep.subr.mxu0 %v2694
        %2718 = vmatpush1.msra.mxu0 %v2693
        %2719 = vmatprep.subr.mxu0 0.0
        %2720 = vmatpush1.msra.mxu0 0.0
        %2721 = vmatprep.subr.mxu0 0.0
        %2722 = vmatpush1.msra.mxu0 0.0
        %2723 = vmatprep.subr.mxu0 0.0
        %2724 = vmatpush1.msra.mxu0 0.0
        %2725 = vmatprep.subr.mxu0 0.0
        %2726 = vmatpush1.msra.mxu0 0.0
        %2727 = vmatprep.subr.mxu0 0.0
        %2728 = vmatpush1.msra.mxu0 0.0
        %2729 = vmatprep.subr.mxu0 0.0
        %2730 = vmatpush1.msra.mxu0 0.0
        %2731 = vmatprep.subr.mxu0 0.0
        %2732 = vmatpush1.msra.mxu0 0.0
        %2733 = vmatprep.subr.mxu0 0.0
        %2734 = vmatpush1.msra.mxu0 0.0
        %2735 = vmatprep.subr.mxu0 0.0
        %2736 = vmatpush1.msra.mxu0 0.0
        %2737 = vmatprep.subr.mxu0 0.0
        %2738 = vmatpush1.msra.mxu0 0.0
        %2739 = vmatprep.subr.mxu0 0.0
        %2740 = vmatpush1.msra.mxu0 0.0
        %2741 = vmatprep.subr.mxu0 0.0
        %2742 = vmatpush1.msra.mxu0 0.0
        %2743 = vmatprep.subr.mxu0 0.0
        %2744 = vmatpush1.msra.mxu0 0.0
        %2745 = vmatprep.subr.mxu0 0.0
        %2746 = vmatpush1.msra.mxu0 0.0
        %2747 = vmatprep.subr.mxu0 0.0
        %2748 = vmatpush1.msra.mxu0 0.0
        %2749 = vmatprep.subr.mxu0 0.0
        %2750 = vmatpush1.msra.mxu0 0.0
        %2751 = vmatprep.subr.mxu0 0.0
        %2752 = vmatpush1.msra.mxu0 0.0
        %2753 = vmatprep.subr.mxu0 0.0
        %2754 = vmatpush1.msra.mxu0 0.0
        %2755 = vmatprep.subr.mxu0 0.0
        %2756 = vmatpush1.msra.mxu0 0.0
        %2757 = vmatprep.subr.mxu0 0.0
        %2758 = vmatpush1.msra.mxu0 0.0
        %2759 = vmatprep.subr.mxu0 0.0
        %2760 = vmatpush1.msra.mxu0 0.0
        %2761 = vmatprep.subr.mxu0 0.0
        %2762 = vmatpush1.msra.mxu0 0.0
        %2763 = vmatprep.subr.mxu0 0.0
        %2764 = vmatpush1.msra.mxu0 0.0
        %2765 = vmatprep.subr.mxu0 0.0
        %2766 = vmatpush1.msra.mxu0 0.0
        %2767 = vmatprep.subr.mxu0 0.0
        %2768 = vmatpush1.msra.mxu0 0.0
        %2769 = vmatprep.subr.mxu0 0.0
        %2770 = vmatpush1.msra.mxu0 0.0
        %2771 = vmatprep.subr.mxu0 0.0
        %2772 = vmatpush1.msra.mxu0 0.0
        %2773 = vmatprep.subr.mxu0 0.0
        %2774 = vmatpush1.msra.mxu0 0.0
        %2775 = vmatprep.mubr.f32.mxu0 0.0
        %2776 = vmatmul.mubr.f32.gmra.mrb[0].mxu0 %v2709
        %v2777 = vpop.f32.mrb[0].mxu0
        %v2778 = vadd.f32 %v2707, %v2777
        %v2779 = vpop.f32.mrb[0].mxu0
        %v2780 = vadd.f32 %v2707, %v2779
        %2781 = vdwg.mxu0
        %2782 = vmatprep.subr.mxu0 %v2684
        %2783 = vmatpush1.msra.mxu0 %v2683
        %2784 = vmatprep.subr.mxu0 %v2688
        %2785 = vmatpush1.msra.mxu0 %v2687
        %2786 = vmatprep.subr.mxu0 %v2692
        %2787 = vmatpush1.msra.mxu0 %v2691
        %2788 = vmatprep.subr.mxu0 %v2696
        %2789 = vmatpush1.msra.mxu0 %v2695
        %2790 = vmatprep.subr.mxu0 0.0
        %2791 = vmatpush1.msra.mxu0 0.0
        %2792 = vmatprep.subr.mxu0 0.0
        %2793 = vmatpush1.msra.mxu0 0.0
        %2794 = vmatprep.subr.mxu0 0.0
        %2795 = vmatpush1.msra.mxu0 0.0
        %2796 = vmatprep.subr.mxu0 0.0
        %2797 = vmatpush1.msra.mxu0 0.0
        %2798 = vmatprep.subr.mxu0 0.0
        %2799 = vmatpush1.msra.mxu0 0.0
        %2800 = vmatprep.subr.mxu0 0.0
        %2801 = vmatpush1.msra.mxu0 0.0
        %2802 = vmatprep.subr.mxu0 0.0
        %2803 = vmatpush1.msra.mxu0 0.0
        %2804 = vmatprep.subr.mxu0 0.0
        %2805 = vmatpush1.msra.mxu0 0.0
        %2806 = vmatprep.subr.mxu0 0.0
        %2807 = vmatpush1.msra.mxu0 0.0
        %2808 = vmatprep.subr.mxu0 0.0
        %2809 = vmatpush1.msra.mxu0 0.0
        %2810 = vmatprep.subr.mxu0 0.0
        %2811 = vmatpush1.msra.mxu0 0.0
        %2812 = vmatprep.subr.mxu0 0.0
        %2813 = vmatpush1.msra.mxu0 0.0
        %2814 = vmatprep.subr.mxu0 0.0
        %2815 = vmatpush1.msra.mxu0 0.0
        %2816 = vmatprep.subr.mxu0 0.0
        %2817 = vmatpush1.msra.mxu0 0.0
        %2818 = vmatprep.subr.mxu0 0.0
        %2819 = vmatpush1.msra.mxu0 0.0
        %2820 = vmatprep.subr.mxu0 0.0
        %2821 = vmatpush1.msra.mxu0 0.0
        %2822 = vmatprep.subr.mxu0 0.0
        %2823 = vmatpush1.msra.mxu0 0.0
        %2824 = vmatprep.subr.mxu0 0.0
        %2825 = vmatpush1.msra.mxu0 0.0
        %2826 = vmatprep.subr.mxu0 0.0
        %2827 = vmatpush1.msra.mxu0 0.0
        %2828 = vmatprep.subr.mxu0 0.0
        %2829 = vmatpush1.msra.mxu0 0.0
        %2830 = vmatprep.subr.mxu0 0.0
        %2831 = vmatpush1.msra.mxu0 0.0
        %2832 = vmatprep.subr.mxu0 0.0
        %2833 = vmatpush1.msra.mxu0 0.0
        %2834 = vmatprep.subr.mxu0 0.0
        %2835 = vmatpush1.msra.mxu0 0.0
        %2836 = vmatprep.subr.mxu0 0.0
        %2837 = vmatpush1.msra.mxu0 0.0
        %2838 = vmatprep.subr.mxu0 0.0
        %2839 = vmatpush1.msra.mxu0 0.0
        %2840 = vmatprep.subr.mxu0 0.0
        %2841 = vmatpush1.msra.mxu0 0.0
        %2842 = vmatprep.subr.mxu0 0.0
        %2843 = vmatpush1.msra.mxu0 0.0
        %2844 = vmatprep.subr.mxu0 0.0
        %2845 = vmatpush1.msra.mxu0 0.0
        %2846 = vmatprep.mubr.f32.mxu0 0.0
        %2847 = vmatmul.mubr.f32.gmra.mrb[0].mxu0 %v2709
        %v2848 = vpop.f32.mrb[0].mxu0
        %v2849 = vadd.f32 %v2707, %v2848
        %v2850 = vpop.f32.mrb[0].mxu0
        %v2851 = vadd.f32 %v2707, %v2850
        %2852 = vdwg.mxu0
        %v2857 = vcombine.low %v2778, %v2780
        %v2858 = vcombine.low %v2849, %v2851
        %v2860 = vunpack.c.l.s4 1966171168
        %v2861 = vunpack.c.0.s8 %v2860
        %v2862 = vlaneseq
        %v2863 = vshrl.u32 %v2862, 7
        %v2864 = vsub.s32 %v2861, %v2863
        %v2865 = vrot.slane %v2857, %v2864
        %v2867 = vunpack.c.l.s4 1966171168
        %v2868 = vunpack.c.0.s8 %v2867
        %v2869 = vlaneseq
        %v2870 = vshrl.u32 %v2869, 7
        %v2871 = vsub.s32 %v2868, %v2870
        %v2872 = vrot.slane %v2858, %v2871
        %v2873 = vcombine.low %v2865, %v2872
        %v2875 = vunpack.c.l.s4 1966171168
        %v2876 = vunpack.c.0.s8 %v2875
        %v2877 = vlaneseq
        %v2878 = vshrl.u32 %v2877, 7
        %v2879 = vsub.s32 %v2876, %v2878
        %v2880 = vrot.slane %v2873, %v2879
        %v2882 = vlaneseq
        %vm2883 = vcmp.ge.s32.totalorder %v2882, 0
        %vm2884 = vcmp.lt.s32.totalorder %v2882, 512
        %vm2885 = vmand %vm2883, %vm2884
        %2886 = vst.msk [vmem:[%s355] sm:$0xf] %vm2885, %v2880
        %s2887 = sand.u32 %s249, 1
        %s2888 = scalar_lea.sflag [#allocation4], %s2887
        %s2889 = sand.u32 %s249, 1
        %s2890 = smul.addr %s2889, 4
        %s2891 = scalar_lea.vmem [#allocation3], %s2890
        // Predicated region
        $region61: #{forward.1} parent=59 // pred_check
          %p2892 = pneg %p259
        $region62: #{forward.1} parent=59 // pred_check_branch
          %2894 = sbr.rel (%p2892) target = $region64
        $region63: #{forward.1} parent=59 // pred_region
          %s2895 = smul.u32 4, %s26
          %s2897 = ssub.s32 64, 64
          %2898 = vsyncadd %s2888, %s2897
          %s2899 = smul.addr %s2895, 16
          %s2900 = scalar_lea.hbm %s10, %s2899
          %s2902 = sshll.u32 %s2891, 4
          %s2903 = int_to_ptr.vmem [resolvable:$true] %s2902
          %2905 = dma.vmem_to_hbm [thread:$0]  %s2903, 64, %s2900, %s2888
        $region64: #{forward.1} parent=59 // pred_fallthru
          _
      $region60: #{forward.1} parent=5 // pred_fallthru
        _
      %p2906 = scmp.le.s32.totalorder 2, %s21
      // Predicated region
      $region65: #{forward.1} parent=5 // pred_check
        %p2907 = pneg %p2906
      $region66: #{forward.1} parent=5 // pred_check_branch
        %2909 = sbr.rel (%p2907) target = $region68
      $region67: #{forward.1} parent=5 // pred_region
        %s2910 = ssub.s32 %s21, 2
        // Predicated region
        $region69: #{forward.1} parent=67 // pred_check
          %p2911 = pneg %p265
        $region70: #{forward.1} parent=67 // pred_check_branch
          %2913 = sbr.rel (%p2911) target = $region72
        $region71: #{forward.1} parent=67 // pred_region
          %s2914 = sand.u32 %s250, 1
          %s2915 = scalar_lea.sflag [#allocation4], %s2914
          %s2916 = sand.u32 %s250, 1
          %s2917 = smul.addr %s2916, 4
          %s2918 = scalar_lea.vmem [#allocation3], %s2917
          %2919 = dma.done %s2915, 64
        $region72: #{forward.1} parent=67 // pred_fallthru
          _
      $region68: #{forward.1} parent=5 // pred_fallthru
        _
    $region6: #{forward.1} parent=1 // loop_footer
      %s25 = sadd.s32 1, %s21
    $region7: #{forward.1} parent=1 // loop_footer_branch
      %20 = sbr.rel target = $region3
    $region8: #{forward.1} parent=1 // loop_exit
      _
    %2920 = vsyncpa [#allocation4], 1
    %s2921 = scalar_lea.sflag [#allocation4], 1
    %2922 = vsyncpa %s2921, 1

</llo_original>
